<compile_context>
chip_gen: v7x
topology: tpu7x:2x2x1
jax: 0.10.0
libtpu: 0.0.40
codegen_flags: <defaults>
</compile_context>

<pallas_src>
import numpy as np
import jax
import jax.numpy as jnp
from jax.experimental import pallas as pl
from jax.experimental.pallas import tpu as pltpu

F32 = jnp.float32
BF16 = jnp.bfloat16
BN_EPS = 1e-5


def _relu(x):
    return jnp.maximum(x, 0.0)


def _affine(y, aux_ref):
    # aux rows: 0 = conv bias, 1 = BN scale, 2 = BN shift  (per output channel, zero-padded)
    a = aux_ref[...]
    return (y + a[0:1, :]) * a[1:2, :] + a[2:3, :]


# --------------------------------------------------------------------------------------
# Fused kernel: branch 1 (spectral) + branch 2 (spatial) + per-sample average pooling.
# x_ref: (TN, H, W, Cin)   pool_ref: (TN, TN*H*W)   out_ref: (1, TN, 256)
# halo_ref: VMEM scratch (TN, H+2, W, 128) bf16 used by both 3x3 convs.
# --------------------------------------------------------------------------------------
def dcrn_kernel(x_ref, pool_ref,
                m15, a1, m2, a2, m3, a3, m4, a4,        # branch-1 folded matmuls (bf16) + affines
                a5, w8, b8, w6, a6, w7, a7,             # branch-2 params (bf16 weights)
                out_ref, halo_ref):
    TN, H, W, Cin = x_ref.shape
    P = H * W
    M = TN * P
    C1p = a1.shape[1]
    C2 = 128

    xf = x_ref[...].reshape(M, Cin).astype(BF16)        # (M, Cin), sample-major rows
    pool = pool_ref[...]                                # (TN, M) f32, grid-invariant input

    # Fused head: one K=Cin matmul computes [conv1-folded | conv5-folded (tripled copies)].
    head = jnp.dot(xf, m15[...], preferred_element_type=F32)          # (M, C1p + 128)
    y = _relu(_affine(head[:, :C1p], a1))               # conv1 + bn1 + relu          (M, C1p)
    s = _relu(_affine(head[:, C1p:], a5))               # conv5 + bn5 + relu          (M, 128)

    # ---------------- branch 1: conv2..conv4 folded dense matmuls (bf16 MXU) ----------------
    res = y
    y = jnp.dot(y.astype(BF16), m2[...], preferred_element_type=F32)
    y = _relu(_affine(y, a2))                                          # conv2 + bn2 + relu
    y = jnp.dot(y.astype(BF16), m3[...], preferred_element_type=F32)
    a = a3[...]
    y = _relu((y + a[0:1, :] + res) * a[1:2, :] + a[2:3, :])           # conv3 + residual + bn3 + relu
    y = jnp.dot(y.astype(BF16), m4[...], preferred_element_type=F32)
    y = _relu(_affine(y, a4))                                          # conv4 + bn4 + relu  (M, 128)
    out_ref[0, :, 0:128] = jnp.dot(pool, y, preferred_element_type=F32)   # lane-aligned store

    # ---------------- branch 2: conv8 residual, packed 3x3 convs ----------------
    residual = jnp.dot(s.astype(BF16), w8[...], preferred_element_type=F32) + b8[...]   # conv8 (1x1)

    lane = jax.lax.broadcasted_iota(jnp.int32, (1, 1, 1, C2), 3)
    take_l = lane < 24                                   # lanes [0:24)  <- w-1 tap
    take_c = lane < 48                                   # lanes [24:48) <- w   tap (else w+1 / zeros)

    def conv3x3(t, w_ref):
        # 3x3 replicate-pad conv as 3 matmuls of K=128:
        #   kw taps live at lane offsets 0/24/48 (t carries 3 identical 24-channel copies,
        #   written by the producing matmul), kh taps come from the (H+2)-row VMEM halo.
        t4 = t.reshape(TN, H, W, C2)
        tl = jnp.concatenate([t4[:, :, :1], t4[:, :, :W - 1]], axis=2)    # w-1, replicate edge
        tr = jnp.concatenate([t4[:, :, 1:], t4[:, :, W - 1:]], axis=2)    # w+1, replicate edge
        inter = jnp.where(take_l, tl, jnp.where(take_c, t4, tr)).astype(BF16)
        halo_ref[:, 1:H + 1] = inter                                      # interior rows
        halo_ref[:, 0:1] = inter[:, 0:1]                                  # top replicate row
        halo_ref[:, H + 1:H + 2] = inter[:, H - 1:H]                      # bottom replicate row
        acc = jnp.dot(halo_ref[:, 0:H].reshape(M, C2), w_ref[0],
                      preferred_element_type=F32)
        acc = acc + jnp.dot(halo_ref[:, 1:H + 1].reshape(M, C2), w_ref[1],
                            preferred_element_type=F32)
        acc = acc + jnp.dot(halo_ref[:, 2:H + 2].reshape(M, C2), w_ref[2],
                            preferred_element_type=F32)
        return acc

    z = _relu(_affine(conv3x3(s, w6), a6))               # conv6 + bn6 + relu (tripled copies kept)
    z = conv3x3(z, w7)
    a = a7[...]
    z = _relu((z + a[0:1, :] + residual) * a[1:2, :] + a[2:3, :])      # conv7 + residual + bn7 + relu
    out_ref[0, :, 128:256] = jnp.dot(pool, z, preferred_element_type=F32)  # lane-aligned store


# --------------------------------------------------------------------------------------
# Wrapper
# --------------------------------------------------------------------------------------
def _full_spec(arr):
    nd = arr.ndim
    return pl.BlockSpec(arr.shape, lambda n, _nd=nd: (0,) * _nd)


def _round_up(v, m):
    return (v + m - 1) // m * m


def _pick_tile_n(N, P, C1p):
    # Target ~2K rows per step (shrinking as the spectral width C1p grows), keep >= 2 grid
    # steps when possible (v7x: 2 TensorCores share the "parallel" grid axis), and prefer a
    # divisor of N so no padded garbage tiles are computed.
    rows = max(P, (2048 * 256) // max(C1p, 256))
    tn = max(1, min(rows // P, 64))
    tn = min(tn, max(1, (N + 1) // 2))
    tn = max(1, min(tn, N))
    for d in range(tn, 0, -1):
        if N % d == 0 and 2 * d >= tn:
            return d
    return tn


def dcrn_forward(x, params, *, tile_n=None):
    """x: (N, 1, C_in, H, W) float32 (PyTorch NCDHW). Returns (N, 128 + 24)."""
    N, _, Cin, H, W = x.shape
    P = H * W
    C1p = params[1].shape[1]                                         # width of a1
    # Single channels-last materialization.
    x_hwc = jnp.transpose(x[:, 0], (0, 2, 3, 1)).astype(F32)        # (N, H, W, Cin)

    if tile_n is None:
        tile_n = _pick_tile_n(N, P, C1p)
    TN = max(1, min(int(tile_n), N))
    Np = pl.cdiv(N, TN) * TN
    if Np != N:
        x_hwc = jnp.pad(x_hwc, ((0, Np - N), (0, 0), (0, 0), (0, 0)))
    steps = Np // TN
    M = TN * P

    # Precomputed pooling matrix: pooled[t, :] = mean over the P rows of sample t (one-time DMA).
    pool = jnp.asarray(np.kron(np.eye(TN, dtype=np.float32),
                               np.full((1, P), 1.0 / P, np.float32)))    # (TN, M)

    in_specs = [pl.BlockSpec((TN, H, W, Cin), lambda n: (n, 0, 0, 0)),
                _full_spec(pool)]
    in_specs += [_full_spec(p) for p in params]

    out = pl.pallas_call(
        dcrn_kernel,
        out_shape=jax.ShapeDtypeStruct((steps, TN, 256), F32),
        grid=(steps,),
        in_specs=in_specs,
        out_specs=pl.BlockSpec((1, TN, 256), lambda n: (n, 0, 0)),
        scratch_shapes=[pltpu.VMEM((TN, H + 2, W, 128), BF16)],          # 3x3-conv halo buffer
        compiler_params=pltpu.CompilerParams(
            dimension_semantics=("parallel",),
            vmem_limit_bytes=48 * 1024 * 1024),                          # fits v7x 64 MiB VMEM
    )(x_hwc, pool, *params)

    out = out.reshape(Np, 256)
    # torch.cat((x1, x2), 1) -> avgpool -> reshape  ==  [branch1 (128) | branch2 (24)]
    return out[:N, :128 + 24]                                            # (N, 152)


# --------------------------------------------------------------------------------------
# Deterministic parameter construction (kaiming-normal conv weights, zero biases,
# inference-mode BN) + folding of convs into bf16, lane-aligned matmul matrices.
# --------------------------------------------------------------------------------------
def init_params(key, input_channels):
    Cin = input_channels
    D1 = (Cin - 7) // 2 + 1                     # depth after conv1 == conv4 kernel depth
    C1 = D1 * 24
    C1p = _round_up(C1, 128)                    # 128-aligned spectral width
    C2 = 128                                    # branch-2 lane width (24 real channels)
    ks = jax.random.split(key, 8)

    def kaiming(k, shape, fan_in):
        return (np.asarray(jax.random.normal(k, shape, F32))
                * np.sqrt(2.0 / fan_in)).astype(np.float32)

    w1 = kaiming(ks[0], (24, 7), 1 * 7)             # conv1 (cout, k)
    w2 = kaiming(ks[1], (24, 24, 7), 24 * 7)        # conv2 (cout, cin, k)
    w3 = kaiming(ks[2], (24, 24, 7), 24 * 7)        # conv3
    w4 = kaiming(ks[3], (128, 24, D1), 24 * D1)     # conv4 (cout, cin, d)
    w5 = kaiming(ks[4], (24, Cin), 1 * Cin)         # conv5 (cout, d)
    w6 = kaiming(ks[5], (24, 24, 3, 3), 24 * 9)     # conv6 (cout, cin, kh, kw)
    w7 = kaiming(ks[6], (24, 24, 3, 3), 24 * 9)     # conv7
    w8 = kaiming(ks[7], (24, 24), 24 * 1)           # conv8 (cout, cin)

    bn_scale = np.float32(1.0 / np.sqrt(1.0 + BN_EPS))   # gamma / sqrt(var + eps)

    # conv1 (stride 2 on depth, no pad): out[d*24+c] = sum_k w1[c,k] * s[2d+k]
    M1 = np.zeros((Cin, C1p), np.float32)
    for d in range(D1):
        for k in range(7):
            M1[2 * d + k, d * 24:(d + 1) * 24] += w1[:, k]

    # conv5 folded, output tripled into lane blocks [0:24],[24:48],[48:72]
    # (the copies feed the kw taps of conv6 without any in-kernel lane shuffles).
    M5 = np.zeros((Cin, C2), np.float32)
    for j in range(3):
        M5[:, j * 24:(j + 1) * 24] = w5.T
    M15 = np.concatenate([M1, M5], axis=1)          # fused head matrix (Cin, C1p + 128)

    # conv2 / conv3 (stride 1, replicate depth pad 3), clamped depth indices
    M2 = np.zeros((C1p, C1p), np.float32)
    M3 = np.zeros((C1p, C1p), np.float32)
    for d_out in range(D1):
        for k in range(7):
            d_in = min(max(d_out + k - 3, 0), D1 - 1)
            M2[d_in * 24:(d_in + 1) * 24, d_out * 24:(d_out + 1) * 24] += w2[:, :, k].T
            M3[d_in * 24:(d_in + 1) * 24, d_out * 24:(d_out + 1) * 24] += w3[:, :, k].T

    # conv4 (full-depth) folded
    M4 = np.zeros((C1p, 128), np.float32)
    for d in range(D1):
        M4[d * 24:(d + 1) * 24, :] = w4[:, :, d].T

    # conv8 (1x1): reads the first copy of s
    W8p = np.zeros((C2, C2), np.float32)
    W8p[:24, :24] = w8.T

    # conv6 / conv7: input rows packed as [kw*24 + c_in], kh selects the (128,128) slice.
    # conv6 output is tripled (conv7 consumes the same packed layout); conv7 output is not.
    W6f = np.zeros((3, C2, C2), np.float32)
    W7f = np.zeros((3, C2, C2), np.float32)
    for kh in range(3):
        for kw in range(3):
            blk6 = w6[:, :, kh, kw].T               # (c_in, c_out)
            blk7 = w7[:, :, kh, kw].T
            for j in range(3):
                W6f[kh, kw * 24:kw * 24 + 24, j * 24:j * 24 + 24] = blk6
            W7f[kh, kw * 24:kw * 24 + 24, 0:24] = blk7

    def aux(width):
        a = np.zeros((3, width), np.float32)
        a[1, :] = bn_scale        # row0: conv bias (zero), row1: BN scale, row2: BN shift
        return a

    params = (jnp.asarray(M15, dtype=BF16), jnp.asarray(aux(C1p)),
              jnp.asarray(M2, dtype=BF16),  jnp.asarray(aux(C1p)),
              jnp.asarray(M3, dtype=BF16),  jnp.asarray(aux(C1p)),
              jnp.asarray(M4, dtype=BF16),  jnp.asarray(aux(128)),
              jnp.asarray(aux(C2)),                                   # a5
              jnp.asarray(W8p, dtype=BF16), jnp.zeros((1, C2), F32),  # conv8 weight / bias
              jnp.asarray(W6f, dtype=BF16), jnp.asarray(aux(C2)),
              jnp.asarray(W7f, dtype=BF16), jnp.asarray(aux(C2)))
    raw = dict(w1=w1, w2=w2, w3=w3, w4=w4, w5=w5, w6=w6, w7=w7, w8=w8)
    return params, raw


# --------------------------------------------------------------------------------------
# Pure numpy reference built directly from the RAW conv weights (no folding), float64.
# Replicate padding for conv2/3/6/7, inference-mode BN, zero biases.
# --------------------------------------------------------------------------------------
def dcrn_reference(x, raw):
    x = np.asarray(x, np.float64)
    N, _, Cin, H, W = x.shape
    w1, w2, w3, w4, w5, w6, w7, w8 = (np.asarray(raw[k], np.float64)
                                      for k in ("w1", "w2", "w3", "w4", "w5", "w6", "w7", "w8"))
    D1 = (Cin - 7) // 2 + 1
    s = 1.0 / np.sqrt(1.0 + BN_EPS)
    relu = lambda v: np.maximum(v, 0.0)
    x0 = x[:, 0]                                               # (N, Cin, H, W)

    # ---- branch 1 ----
    y = np.zeros((N, 24, D1, H, W))
    for d in range(D1):
        for k in range(7):
            y[:, :, d] += w1[:, k][None, :, None, None] * x0[:, 2 * d + k][:, None]
    y = relu(y * s)
    res = y

    def spec_conv(t, w):                                       # replicate depth pad 3
        out = np.zeros((N, 24, D1, H, W))
        for d in range(D1):
            for k in range(7):
                din = min(max(d + k - 3, 0), D1 - 1)
                out[:, :, d] += np.einsum('oc,nchw->nohw', w[:, :, k], t[:, :, din])
        return out

    y = relu(spec_conv(y, w2) * s)
    y = spec_conv(y, w3) + res
    y = relu(y * s)
    y = np.einsum('ocd,ncdhw->nohw', w4, y)                    # conv4 -> (N,128,H,W)
    y = relu(y * s)
    o1 = y.mean(axis=(2, 3))                                   # (N, 128)

    # ---- branch 2 ----
    z = np.einsum('od,ndhw->nohw', w5, x0)                     # conv5 -> (N,24,H,W)
    z = relu(z * s)
    resid = np.einsum('oc,nchw->nohw', w8, z)                  # conv8 (1x1)

    def conv3x3(t, w):                                         # replicate spatial pad
        tp = np.pad(t, ((0, 0), (0, 0), (1, 1), (1, 1)), mode='edge')
        out = np.zeros((N, 24, H, W))
        for kh in range(3):
            for kw in range(3):
                out += np.einsum('oc,nchw->nohw', w[:, :, kh, kw], tp[:, :, kh:kh + H, kw:kw + W])
        return out

    z = relu(conv3x3(z, w6) * s)
    z = conv3x3(z, w7) + resid
    z = relu(z * s)
    o2 = z.mean(axis=(2, 3))                                   # (N, 24)
    return np.concatenate([o1, o2], axis=1).astype(np.float32)


if __name__ == "__main__":
    N, CIN, SZ = 8, 16, 8                     # batch, spectral bands, patch_size
    key = jax.random.PRNGKey(0)
    kx, kp = jax.random.split(key)
    x = jax.random.normal(kx, (N, 1, CIN, SZ, SZ), F32)
    params, raw = init_params(kp, CIN)

    # Default tile_n heuristic picks TN=4 -> 2 grid steps (exercises batch tiling + megacore).
    out = jax.block_until_ready(dcrn_forward(x, params))

    assert out.shape == (N, 128 + 24), out.shape
    ref = dcrn_reference(np.asarray(x), raw)
    # Tolerance re-baselined for bf16 MXU inputs (f32 accumulation), per the perf review.
    np.testing.assert_allclose(np.asarray(out), ref, rtol=5e-2, atol=5e-2)
    print("KERNEL_OK")
</pallas_src>

<mosaic_0001>
module attributes {stable_mosaic.version = 11 : i64} {
  func.func @dcrn_kernel(%arg0: i32, %arg1: memref<4x8x8x16xf32, #tpu.memory_space<vmem>>, %arg2: memref<4x256xf32, #tpu.memory_space<vmem>>, %arg3: memref<16x256xbf16, #tpu.memory_space<vmem>>, %arg4: memref<3x128xf32, #tpu.memory_space<vmem>>, %arg5: memref<128x128xbf16, #tpu.memory_space<vmem>>, %arg6: memref<3x128xf32, #tpu.memory_space<vmem>>, %arg7: memref<128x128xbf16, #tpu.memory_space<vmem>>, %arg8: memref<3x128xf32, #tpu.memory_space<vmem>>, %arg9: memref<128x128xbf16, #tpu.memory_space<vmem>>, %arg10: memref<3x128xf32, #tpu.memory_space<vmem>>, %arg11: memref<3x128xf32, #tpu.memory_space<vmem>>, %arg12: memref<128x128xbf16, #tpu.memory_space<vmem>>, %arg13: memref<1x128xf32, #tpu.memory_space<vmem>>, %arg14: memref<3x128x128xbf16, #tpu.memory_space<vmem>>, %arg15: memref<3x128xf32, #tpu.memory_space<vmem>>, %arg16: memref<3x128x128xbf16, #tpu.memory_space<vmem>>, %arg17: memref<3x128xf32, #tpu.memory_space<vmem>>, %arg18: memref<1x4x256xf32, #tpu.memory_space<vmem>>, %arg19: memref<4x10x8x128xbf16, #tpu.memory_space<vmem>>) attributes {dimension_semantics = [#tpu.dimension_semantics<parallel>], iteration_bounds = array<i64: 2>, scalar_prefetch = 0 : i64, scratch_operands = 1 : i64, tpu.core_type = #tpu.core_type<tc>, window_params = [{transform_indices = @transform_0, window_bounds = array<i64: 4, 8, 8, 16>}, {pipeline_mode = #tpu.pipeline_mode<synchronous>, transform_indices = @transform_1, window_bounds = array<i64: 4, 256>}, {pipeline_mode = #tpu.pipeline_mode<synchronous>, transform_indices = @transform_2, window_bounds = array<i64: 16, 256>}, {pipeline_mode = #tpu.pipeline_mode<synchronous>, transform_indices = @transform_3, window_bounds = array<i64: 3, 128>}, {pipeline_mode = #tpu.pipeline_mode<synchronous>, transform_indices = @transform_4, window_bounds = array<i64: 128, 128>}, {pipeline_mode = #tpu.pipeline_mode<synchronous>, transform_indices = @transform_5, window_bounds = array<i64: 3, 128>}, {pipeline_mode = #tpu.pipeline_mode<synchronous>, transform_indices = @transform_6, window_bounds = array<i64: 128, 128>}, {pipeline_mode = #tpu.pipeline_mode<synchronous>, transform_indices = @transform_7, window_bounds = array<i64: 3, 128>}, {pipeline_mode = #tpu.pipeline_mode<synchronous>, transform_indices = @transform_8, window_bounds = array<i64: 128, 128>}, {pipeline_mode = #tpu.pipeline_mode<synchronous>, transform_indices = @transform_9, window_bounds = array<i64: 3, 128>}, {pipeline_mode = #tpu.pipeline_mode<synchronous>, transform_indices = @transform_10, window_bounds = array<i64: 3, 128>}, {pipeline_mode = #tpu.pipeline_mode<synchronous>, transform_indices = @transform_11, window_bounds = array<i64: 128, 128>}, {pipeline_mode = #tpu.pipeline_mode<synchronous>, transform_indices = @transform_12, window_bounds = array<i64: 1, 128>}, {pipeline_mode = #tpu.pipeline_mode<synchronous>, transform_indices = @transform_13, window_bounds = array<i64: 3, 128, 128>}, {pipeline_mode = #tpu.pipeline_mode<synchronous>, transform_indices = @transform_14, window_bounds = array<i64: 3, 128>}, {pipeline_mode = #tpu.pipeline_mode<synchronous>, transform_indices = @transform_15, window_bounds = array<i64: 3, 128, 128>}, {pipeline_mode = #tpu.pipeline_mode<synchronous>, transform_indices = @transform_16, window_bounds = array<i64: 3, 128>}, {transform_indices = @transform_17, window_bounds = array<i64: 1, 4, 256>}]} {
    %c0 = arith.constant 0 : index
    %c0_0 = arith.constant 0 : index
    %c0_1 = arith.constant 0 : index
    %c0_2 = arith.constant 0 : index
    %0 = vector.load %arg1[%c0, %c0_0, %c0_1, %c0_2] : memref<4x8x8x16xf32, #tpu.memory_space<vmem>>, vector<4x8x8x16xf32>
    %1 = vector.shape_cast %0 : vector<4x8x8x16xf32> to vector<256x16xf32>
    %2 = arith.truncf %1 : vector<256x16xf32> to vector<256x16xbf16>
    %c0_3 = arith.constant 0 : index
    %c0_4 = arith.constant 0 : index
    %3 = vector.load %arg2[%c0_3, %c0_4] : memref<4x256xf32, #tpu.memory_space<vmem>>, vector<4x256xf32>
    %c0_5 = arith.constant 0 : index
    %c0_6 = arith.constant 0 : index
    %4 = vector.load %arg3[%c0_5, %c0_6] : memref<16x256xbf16, #tpu.memory_space<vmem>>, vector<16x256xbf16>
    %cst = arith.constant dense<0.000000e+00> : vector<256x256xf32>
    %5 = tpu.matmul %2, %4, %cst {dimension_numbers = #tpu.dot_dimension_numbers<[1], [0], [0], [1], [0, 0, 1, 1], [], []>} : vector<256x16xbf16>, vector<16x256xbf16>, vector<256x256xf32> -> vector<256x256xf32>
    %6 = vector.extract_strided_slice %5 {offsets = [0, 0], sizes = [256, 128], strides = [1, 1]} : vector<256x256xf32> to vector<256x128xf32>
    %c0_7 = arith.constant 0 : index
    %c0_8 = arith.constant 0 : index
    %7 = vector.load %arg4[%c0_7, %c0_8] : memref<3x128xf32, #tpu.memory_space<vmem>>, vector<3x128xf32>
    %8 = vector.extract_strided_slice %7 {offsets = [0, 0], sizes = [1, 128], strides = [1, 1]} : vector<3x128xf32> to vector<1x128xf32>
    %9 = vector.broadcast %8 : vector<1x128xf32> to vector<256x128xf32>
    %10 = arith.addf %6, %9 : vector<256x128xf32>
    %11 = vector.extract_strided_slice %7 {offsets = [1, 0], sizes = [1, 128], strides = [1, 1]} : vector<3x128xf32> to vector<1x128xf32>
    %12 = vector.broadcast %11 : vector<1x128xf32> to vector<256x128xf32>
    %13 = arith.mulf %10, %12 : vector<256x128xf32>
    %14 = vector.extract_strided_slice %7 {offsets = [2, 0], sizes = [1, 128], strides = [1, 1]} : vector<3x128xf32> to vector<1x128xf32>
    %15 = vector.broadcast %14 : vector<1x128xf32> to vector<256x128xf32>
    %16 = arith.addf %13, %15 : vector<256x128xf32>
    %cst_9 = arith.constant 0.000000e+00 : f32
    %17 = vector.broadcast %cst_9 : f32 to vector<256x128xf32>
    %18 = arith.maximumf %16, %17 : vector<256x128xf32>
    %19 = vector.extract_strided_slice %5 {offsets = [0, 128], sizes = [256, 128], strides = [1, 1]} : vector<256x256xf32> to vector<256x128xf32>
    %c0_10 = arith.constant 0 : index
    %c0_11 = arith.constant 0 : index
    %20 = vector.load %arg11[%c0_10, %c0_11] : memref<3x128xf32, #tpu.memory_space<vmem>>, vector<3x128xf32>
    %21 = vector.extract_strided_slice %20 {offsets = [0, 0], sizes = [1, 128], strides = [1, 1]} : vector<3x128xf32> to vector<1x128xf32>
    %22 = vector.broadcast %21 : vector<1x128xf32> to vector<256x128xf32>
    %23 = arith.addf %19, %22 : vector<256x128xf32>
    %24 = vector.extract_strided_slice %20 {offsets = [1, 0], sizes = [1, 128], strides = [1, 1]} : vector<3x128xf32> to vector<1x128xf32>
    %25 = vector.broadcast %24 : vector<1x128xf32> to vector<256x128xf32>
    %26 = arith.mulf %23, %25 : vector<256x128xf32>
    %27 = vector.extract_strided_slice %20 {offsets = [2, 0], sizes = [1, 128], strides = [1, 1]} : vector<3x128xf32> to vector<1x128xf32>
    %28 = vector.broadcast %27 : vector<1x128xf32> to vector<256x128xf32>
    %29 = arith.addf %26, %28 : vector<256x128xf32>
    %cst_12 = arith.constant 0.000000e+00 : f32
    %30 = vector.broadcast %cst_12 : f32 to vector<256x128xf32>
    %31 = arith.maximumf %29, %30 : vector<256x128xf32>
    %32 = arith.truncf %18 : vector<256x128xf32> to vector<256x128xbf16>
    %c0_13 = arith.constant 0 : index
    %c0_14 = arith.constant 0 : index
    %33 = vector.load %arg5[%c0_13, %c0_14] : memref<128x128xbf16, #tpu.memory_space<vmem>>, vector<128x128xbf16>
    %cst_15 = arith.constant dense<0.000000e+00> : vector<256x128xf32>
    %34 = tpu.matmul %32, %33, %cst_15 {dimension_numbers = #tpu.dot_dimension_numbers<[1], [0], [0], [1], [0, 0, 1, 1], [], []>} : vector<256x128xbf16>, vector<128x128xbf16>, vector<256x128xf32> -> vector<256x128xf32>
    %c0_16 = arith.constant 0 : index
    %c0_17 = arith.constant 0 : index
    %35 = vector.load %arg6[%c0_16, %c0_17] : memref<3x128xf32, #tpu.memory_space<vmem>>, vector<3x128xf32>
    %36 = vector.extract_strided_slice %35 {offsets = [0, 0], sizes = [1, 128], strides = [1, 1]} : vector<3x128xf32> to vector<1x128xf32>
    %37 = vector.broadcast %36 : vector<1x128xf32> to vector<256x128xf32>
    %38 = arith.addf %34, %37 : vector<256x128xf32>
    %39 = vector.extract_strided_slice %35 {offsets = [1, 0], sizes = [1, 128], strides = [1, 1]} : vector<3x128xf32> to vector<1x128xf32>
    %40 = vector.broadcast %39 : vector<1x128xf32> to vector<256x128xf32>
    %41 = arith.mulf %38, %40 : vector<256x128xf32>
    %42 = vector.extract_strided_slice %35 {offsets = [2, 0], sizes = [1, 128], strides = [1, 1]} : vector<3x128xf32> to vector<1x128xf32>
    %43 = vector.broadcast %42 : vector<1x128xf32> to vector<256x128xf32>
    %44 = arith.addf %41, %43 : vector<256x128xf32>
    %cst_18 = arith.constant 0.000000e+00 : f32
    %45 = vector.broadcast %cst_18 : f32 to vector<256x128xf32>
    %46 = arith.maximumf %44, %45 : vector<256x128xf32>
    %47 = arith.truncf %46 : vector<256x128xf32> to vector<256x128xbf16>
    %c0_19 = arith.constant 0 : index
    %c0_20 = arith.constant 0 : index
    %48 = vector.load %arg7[%c0_19, %c0_20] : memref<128x128xbf16, #tpu.memory_space<vmem>>, vector<128x128xbf16>
    %cst_21 = arith.constant dense<0.000000e+00> : vector<256x128xf32>
    %49 = tpu.matmul %47, %48, %cst_21 {dimension_numbers = #tpu.dot_dimension_numbers<[1], [0], [0], [1], [0, 0, 1, 1], [], []>} : vector<256x128xbf16>, vector<128x128xbf16>, vector<256x128xf32> -> vector<256x128xf32>
    %c0_22 = arith.constant 0 : index
    %c0_23 = arith.constant 0 : index
    %50 = vector.load %arg8[%c0_22, %c0_23] : memref<3x128xf32, #tpu.memory_space<vmem>>, vector<3x128xf32>
    %51 = vector.extract_strided_slice %50 {offsets = [0, 0], sizes = [1, 128], strides = [1, 1]} : vector<3x128xf32> to vector<1x128xf32>
    %52 = vector.broadcast %51 : vector<1x128xf32> to vector<256x128xf32>
    %53 = arith.addf %49, %52 : vector<256x128xf32>
    %54 = arith.addf %53, %18 : vector<256x128xf32>
    %55 = vector.extract_strided_slice %50 {offsets = [1, 0], sizes = [1, 128], strides = [1, 1]} : vector<3x128xf32> to vector<1x128xf32>
    %56 = vector.broadcast %55 : vector<1x128xf32> to vector<256x128xf32>
    %57 = arith.mulf %54, %56 : vector<256x128xf32>
    %58 = vector.extract_strided_slice %50 {offsets = [2, 0], sizes = [1, 128], strides = [1, 1]} : vector<3x128xf32> to vector<1x128xf32>
    %59 = vector.broadcast %58 : vector<1x128xf32> to vector<256x128xf32>
    %60 = arith.addf %57, %59 : vector<256x128xf32>
    %cst_24 = arith.constant 0.000000e+00 : f32
    %61 = vector.broadcast %cst_24 : f32 to vector<256x128xf32>
    %62 = arith.maximumf %60, %61 : vector<256x128xf32>
    %63 = arith.truncf %62 : vector<256x128xf32> to vector<256x128xbf16>
    %c0_25 = arith.constant 0 : index
    %c0_26 = arith.constant 0 : index
    %64 = vector.load %arg9[%c0_25, %c0_26] : memref<128x128xbf16, #tpu.memory_space<vmem>>, vector<128x128xbf16>
    %cst_27 = arith.constant dense<0.000000e+00> : vector<256x128xf32>
    %65 = tpu.matmul %63, %64, %cst_27 {dimension_numbers = #tpu.dot_dimension_numbers<[1], [0], [0], [1], [0, 0, 1, 1], [], []>} : vector<256x128xbf16>, vector<128x128xbf16>, vector<256x128xf32> -> vector<256x128xf32>
    %c0_28 = arith.constant 0 : index
    %c0_29 = arith.constant 0 : index
    %66 = vector.load %arg10[%c0_28, %c0_29] : memref<3x128xf32, #tpu.memory_space<vmem>>, vector<3x128xf32>
    %67 = vector.extract_strided_slice %66 {offsets = [0, 0], sizes = [1, 128], strides = [1, 1]} : vector<3x128xf32> to vector<1x128xf32>
    %68 = vector.broadcast %67 : vector<1x128xf32> to vector<256x128xf32>
    %69 = arith.addf %65, %68 : vector<256x128xf32>
    %70 = vector.extract_strided_slice %66 {offsets = [1, 0], sizes = [1, 128], strides = [1, 1]} : vector<3x128xf32> to vector<1x128xf32>
    %71 = vector.broadcast %70 : vector<1x128xf32> to vector<256x128xf32>
    %72 = arith.mulf %69, %71 : vector<256x128xf32>
    %73 = vector.extract_strided_slice %66 {offsets = [2, 0], sizes = [1, 128], strides = [1, 1]} : vector<3x128xf32> to vector<1x128xf32>
    %74 = vector.broadcast %73 : vector<1x128xf32> to vector<256x128xf32>
    %75 = arith.addf %72, %74 : vector<256x128xf32>
    %cst_30 = arith.constant 0.000000e+00 : f32
    %76 = vector.broadcast %cst_30 : f32 to vector<256x128xf32>
    %77 = arith.maximumf %75, %76 : vector<256x128xf32>
    %cst_31 = arith.constant dense<0.000000e+00> : vector<4x128xf32>
    %78 = tpu.matmul %3, %77, %cst_31 {dimension_numbers = #tpu.dot_dimension_numbers<[1], [0], [0], [1], [0, 0, 1, 1], [], []>} : vector<4x256xf32>, vector<256x128xf32>, vector<4x128xf32> -> vector<4x128xf32>
    %c0_32 = arith.constant 0 : index
    %c0_33 = arith.constant 0 : index
    %c0_34 = arith.constant 0 : index
    %79 = vector.load %arg18[%c0_32, %c0_33, %c0_34] : memref<1x4x256xf32, #tpu.memory_space<vmem>>, vector<1x4x128xf32>
    %80 = vector.shape_cast %79 : vector<1x4x128xf32> to vector<4x128xf32>
    %81 = vector.shape_cast %78 : vector<4x128xf32> to vector<1x4x128xf32>
    tpu.vector_store %arg18[%c0_32, %c0_33, %c0_34], %81 {strides = array<i32>} : memref<1x4x256xf32, #tpu.memory_space<vmem>>, vector<1x4x128xf32>,
    %82 = arith.truncf %31 : vector<256x128xf32> to vector<256x128xbf16>
    %c0_35 = arith.constant 0 : index
    %c0_36 = arith.constant 0 : index
    %83 = vector.load %arg12[%c0_35, %c0_36] : memref<128x128xbf16, #tpu.memory_space<vmem>>, vector<128x128xbf16>
    %cst_37 = arith.constant dense<0.000000e+00> : vector<256x128xf32>
    %84 = tpu.matmul %82, %83, %cst_37 {dimension_numbers = #tpu.dot_dimension_numbers<[1], [0], [0], [1], [0, 0, 1, 1], [], []>} : vector<256x128xbf16>, vector<128x128xbf16>, vector<256x128xf32> -> vector<256x128xf32>
    %c0_38 = arith.constant 0 : index
    %c0_39 = arith.constant 0 : index
    %85 = vector.load %arg13[%c0_38, %c0_39] : memref<1x128xf32, #tpu.memory_space<vmem>>, vector<1x128xf32>
    %86 = vector.broadcast %85 : vector<1x128xf32> to vector<256x128xf32>
    %87 = arith.addf %84, %86 : vector<256x128xf32>
    %88 = tpu.iota {dimensions = array<i32: 3>} : vector<1x1x1x128xi32>
    %c24_i32 = arith.constant 24 : i32
    %89 = vector.broadcast %c24_i32 : i32 to vector<1x1x1x128xi32>
    %90 = arith.cmpi slt, %88, %89 : vector<1x1x1x128xi32>
    %c48_i32 = arith.constant 48 : i32
    %91 = vector.broadcast %c48_i32 : i32 to vector<1x1x1x128xi32>
    %92 = arith.cmpi slt, %88, %91 : vector<1x1x1x128xi32>
    %93 = vector.shape_cast %31 : vector<256x128xf32> to vector<4x8x8x128xf32>
    %94 = vector.extract_strided_slice %93 {offsets = [0, 0, 0, 0], sizes = [4, 8, 1, 128], strides = [1, 1, 1, 1]} : vector<4x8x8x128xf32> to vector<4x8x1x128xf32>
    %95 = vector.extract_strided_slice %93 {offsets = [0, 0, 0, 0], sizes = [4, 8, 7, 128], strides = [1, 1, 1, 1]} : vector<4x8x8x128xf32> to vector<4x8x7x128xf32>
    %96 = tpu.concatenate %94, %95 in 2 : vector<4x8x1x128xf32>, vector<4x8x7x128xf32> -> vector<4x8x8x128xf32>
    %97 = vector.extract_strided_slice %93 {offsets = [0, 0, 1, 0], sizes = [4, 8, 7, 128], strides = [1, 1, 1, 1]} : vector<4x8x8x128xf32> to vector<4x8x7x128xf32>
    %98 = vector.extract_strided_slice %93 {offsets = [0, 0, 7, 0], sizes = [4, 8, 1, 128], strides = [1, 1, 1, 1]} : vector<4x8x8x128xf32> to vector<4x8x1x128xf32>
    %99 = tpu.concatenate %97, %98 in 2 : vector<4x8x7x128xf32>, vector<4x8x1x128xf32> -> vector<4x8x8x128xf32>
    %100 = vector.shape_cast %92 : vector<1x1x1x128xi1> to vector<1x1x1x128xi1>
    %101 = vector.broadcast %100 : vector<1x1x1x128xi1> to vector<4x8x8x128xi1>
    %102 = arith.select %101, %93, %99 : vector<4x8x8x128xi1>, vector<4x8x8x128xf32>
    %103 = vector.shape_cast %90 : vector<1x1x1x128xi1> to vector<1x1x1x128xi1>
    %104 = vector.broadcast %103 : vector<1x1x1x128xi1> to vector<4x8x8x128xi1>
    %105 = arith.select %104, %96, %102 : vector<4x8x8x128xi1>, vector<4x8x8x128xf32>
    %106 = arith.truncf %105 : vector<4x8x8x128xf32> to vector<4x8x8x128xbf16>
    %c0_40 = arith.constant 0 : index
    %c1 = arith.constant 1 : index
    %c0_41 = arith.constant 0 : index
    %c0_42 = arith.constant 0 : index
    %107 = vector.load %arg19[%c0_40, %c1, %c0_41, %c0_42] : memref<4x10x8x128xbf16, #tpu.memory_space<vmem>>, vector<4x8x8x128xbf16>
    tpu.vector_store %arg19[%c0_40, %c1, %c0_41, %c0_42], %106 {strides = array<i32>} : memref<4x10x8x128xbf16, #tpu.memory_space<vmem>>, vector<4x8x8x128xbf16>,
    %108 = vector.extract_strided_slice %106 {offsets = [0, 0, 0, 0], sizes = [4, 1, 8, 128], strides = [1, 1, 1, 1]} : vector<4x8x8x128xbf16> to vector<4x1x8x128xbf16>
    %c0_43 = arith.constant 0 : index
    %c0_44 = arith.constant 0 : index
    %c0_45 = arith.constant 0 : index
    %c0_46 = arith.constant 0 : index
    %109 = vector.load %arg19[%c0_43, %c0_44, %c0_45, %c0_46] : memref<4x10x8x128xbf16, #tpu.memory_space<vmem>>, vector<4x1x8x128xbf16>
    tpu.vector_store %arg19[%c0_43, %c0_44, %c0_45, %c0_46], %108 {strides = array<i32>} : memref<4x10x8x128xbf16, #tpu.memory_space<vmem>>, vector<4x1x8x128xbf16>,
    %110 = vector.extract_strided_slice %106 {offsets = [0, 7, 0, 0], sizes = [4, 1, 8, 128], strides = [1, 1, 1, 1]} : vector<4x8x8x128xbf16> to vector<4x1x8x128xbf16>
    %c0_47 = arith.constant 0 : index
    %c9 = arith.constant 9 : index
    %c0_48 = arith.constant 0 : index
    %c0_49 = arith.constant 0 : index
    %111 = vector.load %arg19[%c0_47, %c9, %c0_48, %c0_49] : memref<4x10x8x128xbf16, #tpu.memory_space<vmem>>, vector<4x1x8x128xbf16>
    tpu.vector_store %arg19[%c0_47, %c9, %c0_48, %c0_49], %110 {strides = array<i32>} : memref<4x10x8x128xbf16, #tpu.memory_space<vmem>>, vector<4x1x8x128xbf16>,
    %c0_50 = arith.constant 0 : index
    %c0_51 = arith.constant 0 : index
    %c0_52 = arith.constant 0 : index
    %c0_53 = arith.constant 0 : index
    %112 = vector.load %arg19[%c0_50, %c0_51, %c0_52, %c0_53] : memref<4x10x8x128xbf16, #tpu.memory_space<vmem>>, vector<4x8x8x128xbf16>
    %113 = vector.shape_cast %112 : vector<4x8x8x128xbf16> to vector<256x128xbf16>
    %c0_54 = arith.constant 0 : index
    %c0_55 = arith.constant 0 : index
    %c0_56 = arith.constant 0 : index
    %114 = vector.load %arg14[%c0_54, %c0_55, %c0_56] : memref<3x128x128xbf16, #tpu.memory_space<vmem>>, vector<1x128x128xbf16>
    %115 = vector.shape_cast %114 : vector<1x128x128xbf16> to vector<128x128xbf16>
    %cst_57 = arith.constant dense<0.000000e+00> : vector<256x128xf32>
    %116 = tpu.matmul %113, %115, %cst_57 {dimension_numbers = #tpu.dot_dimension_numbers<[1], [0], [0], [1], [0, 0, 1, 1], [], []>} : vector<256x128xbf16>, vector<128x128xbf16>, vector<256x128xf32> -> vector<256x128xf32>
    %c0_58 = arith.constant 0 : index
    %c1_59 = arith.constant 1 : index
    %c0_60 = arith.constant 0 : index
    %c0_61 = arith.constant 0 : index
    %117 = vector.load %arg19[%c0_58, %c1_59, %c0_60, %c0_61] : memref<4x10x8x128xbf16, #tpu.memory_space<vmem>>, vector<4x8x8x128xbf16>
    %118 = vector.shape_cast %117 : vector<4x8x8x128xbf16> to vector<256x128xbf16>
    %c1_62 = arith.constant 1 : index
    %c0_63 = arith.constant 0 : index
    %c0_64 = arith.constant 0 : index
    %119 = vector.load %arg14[%c1_62, %c0_63, %c0_64] : memref<3x128x128xbf16, #tpu.memory_space<vmem>>, vector<1x128x128xbf16>
    %120 = vector.shape_cast %119 : vector<1x128x128xbf16> to vector<128x128xbf16>
    %cst_65 = arith.constant dense<0.000000e+00> : vector<256x128xf32>
    %121 = tpu.matmul %118, %120, %cst_65 {dimension_numbers = #tpu.dot_dimension_numbers<[1], [0], [0], [1], [0, 0, 1, 1], [], []>} : vector<256x128xbf16>, vector<128x128xbf16>, vector<256x128xf32> -> vector<256x128xf32>
    %122 = arith.addf %116, %121 : vector<256x128xf32>
    %c0_66 = arith.constant 0 : index
    %c2 = arith.constant 2 : index
    %c0_67 = arith.constant 0 : index
    %c0_68 = arith.constant 0 : index
    %123 = vector.load %arg19[%c0_66, %c2, %c0_67, %c0_68] : memref<4x10x8x128xbf16, #tpu.memory_space<vmem>>, vector<4x8x8x128xbf16>
    %124 = vector.shape_cast %123 : vector<4x8x8x128xbf16> to vector<256x128xbf16>
    %c2_69 = arith.constant 2 : index
    %c0_70 = arith.constant 0 : index
    %c0_71 = arith.constant 0 : index
    %125 = vector.load %arg14[%c2_69, %c0_70, %c0_71] : memref<3x128x128xbf16, #tpu.memory_space<vmem>>, vector<1x128x128xbf16>
    %126 = vector.shape_cast %125 : vector<1x128x128xbf16> to vector<128x128xbf16>
    %cst_72 = arith.constant dense<0.000000e+00> : vector<256x128xf32>
    %127 = tpu.matmul %124, %126, %cst_72 {dimension_numbers = #tpu.dot_dimension_numbers<[1], [0], [0], [1], [0, 0, 1, 1], [], []>} : vector<256x128xbf16>, vector<128x128xbf16>, vector<256x128xf32> -> vector<256x128xf32>
    %128 = arith.addf %122, %127 : vector<256x128xf32>
    %c0_73 = arith.constant 0 : index
    %c0_74 = arith.constant 0 : index
    %129 = vector.load %arg15[%c0_73, %c0_74] : memref<3x128xf32, #tpu.memory_space<vmem>>, vector<3x128xf32>
    %130 = vector.extract_strided_slice %129 {offsets = [0, 0], sizes = [1, 128], strides = [1, 1]} : vector<3x128xf32> to vector<1x128xf32>
    %131 = vector.broadcast %130 : vector<1x128xf32> to vector<256x128xf32>
    %132 = arith.addf %128, %131 : vector<256x128xf32>
    %133 = vector.extract_strided_slice %129 {offsets = [1, 0], sizes = [1, 128], strides = [1, 1]} : vector<3x128xf32> to vector<1x128xf32>
    %134 = vector.broadcast %133 : vector<1x128xf32> to vector<256x128xf32>
    %135 = arith.mulf %132, %134 : vector<256x128xf32>
    %136 = vector.extract_strided_slice %129 {offsets = [2, 0], sizes = [1, 128], strides = [1, 1]} : vector<3x128xf32> to vector<1x128xf32>
    %137 = vector.broadcast %136 : vector<1x128xf32> to vector<256x128xf32>
    %138 = arith.addf %135, %137 : vector<256x128xf32>
    %cst_75 = arith.constant 0.000000e+00 : f32
    %139 = vector.broadcast %cst_75 : f32 to vector<256x128xf32>
    %140 = arith.maximumf %138, %139 : vector<256x128xf32>
    %141 = vector.shape_cast %140 : vector<256x128xf32> to vector<4x8x8x128xf32>
    %142 = vector.extract_strided_slice %141 {offsets = [0, 0, 0, 0], sizes = [4, 8, 1, 128], strides = [1, 1, 1, 1]} : vector<4x8x8x128xf32> to vector<4x8x1x128xf32>
    %143 = vector.extract_strided_slice %141 {offsets = [0, 0, 0, 0], sizes = [4, 8, 7, 128], strides = [1, 1, 1, 1]} : vector<4x8x8x128xf32> to vector<4x8x7x128xf32>
    %144 = tpu.concatenate %142, %143 in 2 : vector<4x8x1x128xf32>, vector<4x8x7x128xf32> -> vector<4x8x8x128xf32>
    %145 = vector.extract_strided_slice %141 {offsets = [0, 0, 1, 0], sizes = [4, 8, 7, 128], strides = [1, 1, 1, 1]} : vector<4x8x8x128xf32> to vector<4x8x7x128xf32>
    %146 = vector.extract_strided_slice %141 {offsets = [0, 0, 7, 0], sizes = [4, 8, 1, 128], strides = [1, 1, 1, 1]} : vector<4x8x8x128xf32> to vector<4x8x1x128xf32>
    %147 = tpu.concatenate %145, %146 in 2 : vector<4x8x7x128xf32>, vector<4x8x1x128xf32> -> vector<4x8x8x128xf32>
    %148 = vector.shape_cast %92 : vector<1x1x1x128xi1> to vector<1x1x1x128xi1>
    %149 = vector.broadcast %148 : vector<1x1x1x128xi1> to vector<4x8x8x128xi1>
    %150 = arith.select %149, %141, %147 : vector<4x8x8x128xi1>, vector<4x8x8x128xf32>
    %151 = vector.shape_cast %90 : vector<1x1x1x128xi1> to vector<1x1x1x128xi1>
    %152 = vector.broadcast %151 : vector<1x1x1x128xi1> to vector<4x8x8x128xi1>
    %153 = arith.select %152, %144, %150 : vector<4x8x8x128xi1>, vector<4x8x8x128xf32>
    %154 = arith.truncf %153 : vector<4x8x8x128xf32> to vector<4x8x8x128xbf16>
    %c0_76 = arith.constant 0 : index
    %c1_77 = arith.constant 1 : index
    %c0_78 = arith.constant 0 : index
    %c0_79 = arith.constant 0 : index
    %155 = vector.load %arg19[%c0_76, %c1_77, %c0_78, %c0_79] : memref<4x10x8x128xbf16, #tpu.memory_space<vmem>>, vector<4x8x8x128xbf16>
    tpu.vector_store %arg19[%c0_76, %c1_77, %c0_78, %c0_79], %154 {strides = array<i32>} : memref<4x10x8x128xbf16, #tpu.memory_space<vmem>>, vector<4x8x8x128xbf16>,
    %156 = vector.extract_strided_slice %154 {offsets = [0, 0, 0, 0], sizes = [4, 1, 8, 128], strides = [1, 1, 1, 1]} : vector<4x8x8x128xbf16> to vector<4x1x8x128xbf16>
    %c0_80 = arith.constant 0 : index
    %c0_81 = arith.constant 0 : index
    %c0_82 = arith.constant 0 : index
    %c0_83 = arith.constant 0 : index
    %157 = vector.load %arg19[%c0_80, %c0_81, %c0_82, %c0_83] : memref<4x10x8x128xbf16, #tpu.memory_space<vmem>>, vector<4x1x8x128xbf16>
    tpu.vector_store %arg19[%c0_80, %c0_81, %c0_82, %c0_83], %156 {strides = array<i32>} : memref<4x10x8x128xbf16, #tpu.memory_space<vmem>>, vector<4x1x8x128xbf16>,
    %158 = vector.extract_strided_slice %154 {offsets = [0, 7, 0, 0], sizes = [4, 1, 8, 128], strides = [1, 1, 1, 1]} : vector<4x8x8x128xbf16> to vector<4x1x8x128xbf16>
    %c0_84 = arith.constant 0 : index
    %c9_85 = arith.constant 9 : index
    %c0_86 = arith.constant 0 : index
    %c0_87 = arith.constant 0 : index
    %159 = vector.load %arg19[%c0_84, %c9_85, %c0_86, %c0_87] : memref<4x10x8x128xbf16, #tpu.memory_space<vmem>>, vector<4x1x8x128xbf16>
    tpu.vector_store %arg19[%c0_84, %c9_85, %c0_86, %c0_87], %158 {strides = array<i32>} : memref<4x10x8x128xbf16, #tpu.memory_space<vmem>>, vector<4x1x8x128xbf16>,
    %c0_88 = arith.constant 0 : index
    %c0_89 = arith.constant 0 : index
    %c0_90 = arith.constant 0 : index
    %c0_91 = arith.constant 0 : index
    %160 = vector.load %arg19[%c0_88, %c0_89, %c0_90, %c0_91] : memref<4x10x8x128xbf16, #tpu.memory_space<vmem>>, vector<4x8x8x128xbf16>
    %161 = vector.shape_cast %160 : vector<4x8x8x128xbf16> to vector<256x128xbf16>
    %c0_92 = arith.constant 0 : index
    %c0_93 = arith.constant 0 : index
    %c0_94 = arith.constant 0 : index
    %162 = vector.load %arg16[%c0_92, %c0_93, %c0_94] : memref<3x128x128xbf16, #tpu.memory_space<vmem>>, vector<1x128x128xbf16>
    %163 = vector.shape_cast %162 : vector<1x128x128xbf16> to vector<128x128xbf16>
    %cst_95 = arith.constant dense<0.000000e+00> : vector<256x128xf32>
    %164 = tpu.matmul %161, %163, %cst_95 {dimension_numbers = #tpu.dot_dimension_numbers<[1], [0], [0], [1], [0, 0, 1, 1], [], []>} : vector<256x128xbf16>, vector<128x128xbf16>, vector<256x128xf32> -> vector<256x128xf32>
    %c0_96 = arith.constant 0 : index
    %c1_97 = arith.constant 1 : index
    %c0_98 = arith.constant 0 : index
    %c0_99 = arith.constant 0 : index
    %165 = vector.load %arg19[%c0_96, %c1_97, %c0_98, %c0_99] : memref<4x10x8x128xbf16, #tpu.memory_space<vmem>>, vector<4x8x8x128xbf16>
    %166 = vector.shape_cast %165 : vector<4x8x8x128xbf16> to vector<256x128xbf16>
    %c1_100 = arith.constant 1 : index
    %c0_101 = arith.constant 0 : index
    %c0_102 = arith.constant 0 : index
    %167 = vector.load %arg16[%c1_100, %c0_101, %c0_102] : memref<3x128x128xbf16, #tpu.memory_space<vmem>>, vector<1x128x128xbf16>
    %168 = vector.shape_cast %167 : vector<1x128x128xbf16> to vector<128x128xbf16>
    %cst_103 = arith.constant dense<0.000000e+00> : vector<256x128xf32>
    %169 = tpu.matmul %166, %168, %cst_103 {dimension_numbers = #tpu.dot_dimension_numbers<[1], [0], [0], [1], [0, 0, 1, 1], [], []>} : vector<256x128xbf16>, vector<128x128xbf16>, vector<256x128xf32> -> vector<256x128xf32>
    %170 = arith.addf %164, %169 : vector<256x128xf32>
    %c0_104 = arith.constant 0 : index
    %c2_105 = arith.constant 2 : index
    %c0_106 = arith.constant 0 : index
    %c0_107 = arith.constant 0 : index
    %171 = vector.load %arg19[%c0_104, %c2_105, %c0_106, %c0_107] : memref<4x10x8x128xbf16, #tpu.memory_space<vmem>>, vector<4x8x8x128xbf16>
    %172 = vector.shape_cast %171 : vector<4x8x8x128xbf16> to vector<256x128xbf16>
    %c2_108 = arith.constant 2 : index
    %c0_109 = arith.constant 0 : index
    %c0_110 = arith.constant 0 : index
    %173 = vector.load %arg16[%c2_108, %c0_109, %c0_110] : memref<3x128x128xbf16, #tpu.memory_space<vmem>>, vector<1x128x128xbf16>
    %174 = vector.shape_cast %173 : vector<1x128x128xbf16> to vector<128x128xbf16>
    %cst_111 = arith.constant dense<0.000000e+00> : vector<256x128xf32>
    %175 = tpu.matmul %172, %174, %cst_111 {dimension_numbers = #tpu.dot_dimension_numbers<[1], [0], [0], [1], [0, 0, 1, 1], [], []>} : vector<256x128xbf16>, vector<128x128xbf16>, vector<256x128xf32> -> vector<256x128xf32>
    %176 = arith.addf %170, %175 : vector<256x128xf32>
    %c0_112 = arith.constant 0 : index
    %c0_113 = arith.constant 0 : index
    %177 = vector.load %arg17[%c0_112, %c0_113] : memref<3x128xf32, #tpu.memory_space<vmem>>, vector<3x128xf32>
    %178 = vector.extract_strided_slice %177 {offsets = [0, 0], sizes = [1, 128], strides = [1, 1]} : vector<3x128xf32> to vector<1x128xf32>
    %179 = vector.broadcast %178 : vector<1x128xf32> to vector<256x128xf32>
    %180 = arith.addf %176, %179 : vector<256x128xf32>
    %181 = arith.addf %180, %87 : vector<256x128xf32>
    %182 = vector.extract_strided_slice %177 {offsets = [1, 0], sizes = [1, 128], strides = [1, 1]} : vector<3x128xf32> to vector<1x128xf32>
    %183 = vector.broadcast %182 : vector<1x128xf32> to vector<256x128xf32>
    %184 = arith.mulf %181, %183 : vector<256x128xf32>
    %185 = vector.extract_strided_slice %177 {offsets = [2, 0], sizes = [1, 128], strides = [1, 1]} : vector<3x128xf32> to vector<1x128xf32>
    %186 = vector.broadcast %185 : vector<1x128xf32> to vector<256x128xf32>
    %187 = arith.addf %184, %186 : vector<256x128xf32>
    %cst_114 = arith.constant 0.000000e+00 : f32
    %188 = vector.broadcast %cst_114 : f32 to vector<256x128xf32>
    %189 = arith.maximumf %187, %188 : vector<256x128xf32>
    %cst_115 = arith.constant dense<0.000000e+00> : vector<4x128xf32>
    %190 = tpu.matmul %3, %189, %cst_115 {dimension_numbers = #tpu.dot_dimension_numbers<[1], [0], [0], [1], [0, 0, 1, 1], [], []>} : vector<4x256xf32>, vector<256x128xf32>, vector<4x128xf32> -> vector<4x128xf32>
    %c0_116 = arith.constant 0 : index
    %c0_117 = arith.constant 0 : index
    %c128 = arith.constant 128 : index
    %191 = vector.load %arg18[%c0_116, %c0_117, %c128] : memref<1x4x256xf32, #tpu.memory_space<vmem>>, vector<1x4x128xf32>
    %192 = vector.shape_cast %191 : vector<1x4x128xf32> to vector<4x128xf32>
    %193 = vector.shape_cast %190 : vector<4x128xf32> to vector<1x4x128xf32>
    tpu.vector_store %arg18[%c0_116, %c0_117, %c128], %193 {strides = array<i32>} : memref<1x4x256xf32, #tpu.memory_space<vmem>>, vector<1x4x128xf32>,
    return
  }
  func.func @transform_0(%arg0: i32) -> (i32, i32, i32, i32) {
    %c0_i32 = arith.constant 0 : i32
    %c0_i32_0 = arith.constant 0 : i32
    %c0_i32_1 = arith.constant 0 : i32
    %c0_i32_2 = arith.constant 0 : i32
    return %arg0, %c0_i32, %c0_i32_0, %c0_i32_1 : i32, i32, i32, i32
  }
  func.func @transform_1(%arg0: i32) -> (i32, i32) {
    %c0_i32 = arith.constant 0 : i32
    %c0_i32_0 = arith.constant 0 : i32
    %c0_i32_1 = arith.constant 0 : i32
    return %c0_i32, %c0_i32_0 : i32, i32
  }
  func.func @transform_2(%arg0: i32) -> (i32, i32) {
    %c0_i32 = arith.constant 0 : i32
    %c0_i32_0 = arith.constant 0 : i32
    %c0_i32_1 = arith.constant 0 : i32
    return %c0_i32, %c0_i32_0 : i32, i32
  }
  func.func @transform_3(%arg0: i32) -> (i32, i32) {
    %c0_i32 = arith.constant 0 : i32
    %c0_i32_0 = arith.constant 0 : i32
    %c0_i32_1 = arith.constant 0 : i32
    return %c0_i32, %c0_i32_0 : i32, i32
  }
  func.func @transform_4(%arg0: i32) -> (i32, i32) {
    %c0_i32 = arith.constant 0 : i32
    %c0_i32_0 = arith.constant 0 : i32
    %c0_i32_1 = arith.constant 0 : i32
    return %c0_i32, %c0_i32_0 : i32, i32
  }
  func.func @transform_5(%arg0: i32) -> (i32, i32) {
    %c0_i32 = arith.constant 0 : i32
    %c0_i32_0 = arith.constant 0 : i32
    %c0_i32_1 = arith.constant 0 : i32
    return %c0_i32, %c0_i32_0 : i32, i32
  }
  func.func @transform_6(%arg0: i32) -> (i32, i32) {
    %c0_i32 = arith.constant 0 : i32
    %c0_i32_0 = arith.constant 0 : i32
    %c0_i32_1 = arith.constant 0 : i32
    return %c0_i32, %c0_i32_0 : i32, i32
  }
  func.func @transform_7(%arg0: i32) -> (i32, i32) {
    %c0_i32 = arith.constant 0 : i32
    %c0_i32_0 = arith.constant 0 : i32
    %c0_i32_1 = arith.constant 0 : i32
    return %c0_i32, %c0_i32_0 : i32, i32
  }
  func.func @transform_8(%arg0: i32) -> (i32, i32) {
    %c0_i32 = arith.constant 0 : i32
    %c0_i32_0 = arith.constant 0 : i32
    %c0_i32_1 = arith.constant 0 : i32
    return %c0_i32, %c0_i32_0 : i32, i32
  }
  func.func @transform_9(%arg0: i32) -> (i32, i32) {
    %c0_i32 = arith.constant 0 : i32
    %c0_i32_0 = arith.constant 0 : i32
    %c0_i32_1 = arith.constant 0 : i32
    return %c0_i32, %c0_i32_0 : i32, i32
  }
  func.func @transform_10(%arg0: i32) -> (i32, i32) {
    %c0_i32 = arith.constant 0 : i32
    %c0_i32_0 = arith.constant 0 : i32
    %c0_i32_1 = arith.constant 0 : i32
    return %c0_i32, %c0_i32_0 : i32, i32
  }
  func.func @transform_11(%arg0: i32) -> (i32, i32) {
    %c0_i32 = arith.constant 0 : i32
    %c0_i32_0 = arith.constant 0 : i32
    %c0_i32_1 = arith.constant 0 : i32
    return %c0_i32, %c0_i32_0 : i32, i32
  }
  func.func @transform_12(%arg0: i32) -> (i32, i32) {
    %c0_i32 = arith.constant 0 : i32
    %c0_i32_0 = arith.constant 0 : i32
    %c0_i32_1 = arith.constant 0 : i32
    return %c0_i32, %c0_i32_0 : i32, i32
  }
  func.func @transform_13(%arg0: i32) -> (i32, i32, i32) {
    %c0_i32 = arith.constant 0 : i32
    %c0_i32_0 = arith.constant 0 : i32
    %c0_i32_1 = arith.constant 0 : i32
    %c0_i32_2 = arith.constant 0 : i32
    return %c0_i32, %c0_i32_0, %c0_i32_1 : i32, i32, i32
  }
  func.func @transform_14(%arg0: i32) -> (i32, i32) {
    %c0_i32 = arith.constant 0 : i32
    %c0_i32_0 = arith.constant 0 : i32
    %c0_i32_1 = arith.constant 0 : i32
    return %c0_i32, %c0_i32_0 : i32, i32
  }
  func.func @transform_15(%arg0: i32) -> (i32, i32, i32) {
    %c0_i32 = arith.constant 0 : i32
    %c0_i32_0 = arith.constant 0 : i32
    %c0_i32_1 = arith.constant 0 : i32
    %c0_i32_2 = arith.constant 0 : i32
    return %c0_i32, %c0_i32_0, %c0_i32_1 : i32, i32, i32
  }
  func.func @transform_16(%arg0: i32) -> (i32, i32) {
    %c0_i32 = arith.constant 0 : i32
    %c0_i32_0 = arith.constant 0 : i32
    %c0_i32_1 = arith.constant 0 : i32
    return %c0_i32, %c0_i32_0 : i32, i32
  }
  func.func @transform_17(%arg0: i32) -> (i32, i32, i32) {
    %c0_i32 = arith.constant 0 : i32
    %c0_i32_0 = arith.constant 0 : i32
    %c0_i32_1 = arith.constant 0 : i32
    return %arg0, %c0_i32, %c0_i32_0 : i32, i32, i32
  }
}

</mosaic_0001>

<llo_original>
// kernel: tpu_custom_call.1
$region0: #{tpu_custom_call.1}
  #allocation0 [shape = 'u32[]', space=smem, size = 0x4, offset = 0x4, fixed_abs, tag = 'smem constant byte address 0x4 - core index']
  #allocation1 [shape = 'u32[144,128]{1,0:T(1,128)}', space=vmem, size = 0x12000, scoped, tag = 'internal scratch']
  #allocation2 [shape = 'bf16[4,10,8,128]{3,2,1,0:T(8,128)(2,1)}', space=vmem, size = 0x14000, scoped, tag = 'scratch operand']
  %s0 = inlined_call_operand.hbm [shape: f32[8,8,8,16], index: 0, kind: input, shape index: {}]
  %s1 = inlined_call_operand.hbm [shape: f32[4,256], index: 1, kind: input, shape index: {}]
  %s2 = inlined_call_operand.hbm [shape: bf16[16,256], index: 2, kind: input, shape index: {}]
  %s3 = inlined_call_operand.vmem [shape: f32[3,128], index: 3, kind: input, shape index: {}]
  %s4 = inlined_call_operand.hbm [shape: bf16[128,128], index: 4, kind: input, shape index: {}]
  %s5 = inlined_call_operand.vmem [shape: f32[3,128], index: 5, kind: input, shape index: {}]
  %s6 = inlined_call_operand.hbm [shape: bf16[128,128], index: 6, kind: input, shape index: {}]
  %s7 = inlined_call_operand.vmem [shape: f32[3,128], index: 7, kind: input, shape index: {}]
  %s8 = inlined_call_operand.hbm [shape: bf16[128,128], index: 8, kind: input, shape index: {}]
  %s9 = inlined_call_operand.vmem [shape: f32[3,128], index: 9, kind: input, shape index: {}]
  %s10 = inlined_call_operand.vmem [shape: f32[3,128], index: 10, kind: input, shape index: {}]
  %s11 = inlined_call_operand.hbm [shape: bf16[128,128], index: 11, kind: input, shape index: {}]
  %s12 = inlined_call_operand.vmem [shape: f32[1,128], index: 12, kind: input, shape index: {}]
  %s13 = inlined_call_operand.hbm [shape: bf16[3,128,128], index: 13, kind: input, shape index: {}]
  %s14 = inlined_call_operand.vmem [shape: f32[3,128], index: 14, kind: input, shape index: {}]
  %s15 = inlined_call_operand.hbm [shape: bf16[3,128,128], index: 15, kind: input, shape index: {}]
  %s16 = inlined_call_operand.vmem [shape: f32[3,128], index: 16, kind: input, shape index: {}]
  %s17 = inlined_call_operand.hbm [shape: f32[2,4,256], index: 17, kind: output, shape index: {}]
  %s18 = sld [smem:[#allocation0]]
  $region137: #{tpu_custom_call.1} parent=0
    _
  %s20 = ssub.s32 1, %s18
  %s21 = scalar_select 0, %s20, %s18
  $region1: #{tpu_custom_call.1} parent=0
    #allocation3 [shape = 'u8[262144]{0}', space=vmem, size = 0x40000, scoped, tag = 'input window, operand 0']
    #allocation4 [shape = 's32[2]{0}', space=sflag, size = 0x8, scoped, tag = 'scoped memory for tpu_custom_call.1']
    #allocation5 [shape = 's32[2]{0}', space=sflag, size = 0x8, scoped, tag = 'scoped memory for tpu_custom_call.1']
    #allocation6 [shape = 'u8[4096]{0}', space=vmem, size = 0x1000, scoped, tag = 'input window, operand 1, single buffered']
    #allocation7 [shape = 's32[1]{0}', space=sflag, size = 0x4, scoped, tag = 'scoped memory for tpu_custom_call.1']
    #allocation8 [shape = 'u8[8192]{0}', space=vmem, size = 0x2000, scoped, tag = 'input window, operand 2, single buffered']
    #allocation9 [shape = 'u8[32768]{0}', space=vmem, size = 0x8000, scoped, tag = 'input window, operand 4, single buffered']
    #allocation10 [shape = 's32[1]{0}', space=sflag, size = 0x4, scoped, tag = 'scoped memory for tpu_custom_call.1']
    #allocation11 [shape = 'u8[32768]{0}', space=vmem, size = 0x8000, scoped, tag = 'input window, operand 6, single buffered']
    #allocation12 [shape = 'u8[32768]{0}', space=vmem, size = 0x8000, scoped, tag = 'input window, operand 8, single buffered']
    #allocation13 [shape = 's32[1]{0}', space=sflag, size = 0x4, scoped, tag = 'scoped memory for tpu_custom_call.1']
    #allocation14 [shape = 'u8[32768]{0}', space=vmem, size = 0x8000, scoped, tag = 'input window, operand 11, single buffered']
    #allocation15 [shape = 'u8[98304]{0}', space=vmem, size = 0x18000, scoped, tag = 'input window, operand 13, single buffered']
    #allocation16 [shape = 's32[1]{0}', space=sflag, size = 0x4, scoped, tag = 'scoped memory for tpu_custom_call.1']
    #allocation17 [shape = 'u8[98304]{0}', space=vmem, size = 0x18000, scoped, tag = 'input window, operand 15, single buffered']
    #allocation18 [shape = 'u8[8192]{0}', space=vmem, size = 0x2000, scoped, tag = 'output window, operand 0']
    %22 = vsyncpa [#allocation4], 0
    %s23 = scalar_lea.sflag [#allocation4], 1
    %24 = vsyncpa %s23, 0
    %25 = vsyncpa [#allocation7], 0
    %26 = vsyncpa [#allocation10], 0
    %27 = vsyncpa [#allocation13], 0
    %28 = vsyncpa [#allocation16], 0
    %29 = vsyncpa [#allocation5], 0
    %s30 = scalar_lea.sflag [#allocation5], 1
    %31 = vsyncpa %s30, 0
    loop: start=0, step=1, limit=4
    $region2: #{tpu_custom_call.1} parent=1 // loop_pre_header
      _
    $region3: #{tpu_custom_call.1} parent=1 // loop_header
      %s33 = sphi 0, %s37
      %p34 = scmp.ge.s32.totalorder %s33, 4
      %s43 = sphi 0, %s45
      %s46 = sphi 0, %s43
      %s47 = sphi 0, %s46
      %s63 = sphi 0, %s47
      %s67 = sphi 0, %s67
      %s69 = sphi 0, %s67
      %s70 = sphi 0, %s69
      %s84 = sphi 0, %s70
      %s88 = sphi 0, %s88
      %s90 = sphi 0, %s88
      %s91 = sphi 0, %s90
      %s105 = sphi 0, %s91
      %s109 = sphi 0, %s109
      %s111 = sphi 0, %s109
      %s112 = sphi 0, %s111
      %s126 = sphi 0, %s112
      %s130 = sphi 0, %s130
      %s132 = sphi 0, %s130
      %s133 = sphi 0, %s132
      %s147 = sphi 0, %s133
      %s151 = sphi 0, %s151
      %s153 = sphi 0, %s151
      %s154 = sphi 0, %s153
      %s168 = sphi 0, %s154
      %s172 = sphi 0, %s172
      %s174 = sphi 0, %s172
      %s175 = sphi 0, %s174
      %s189 = sphi 0, %s175
      %s193 = sphi 0, %s193
      %s195 = sphi 0, %s193
      %s196 = sphi 0, %s195
      %s210 = sphi 0, %s196
      %s214 = sphi 0, %s214
      %s216 = sphi 0, %s214
      %s217 = sphi 0, %s216
      %s231 = sphi 0, %s217
      %s235 = sphi 0, %s235
      %s237 = sphi 0, %s235
      %s238 = sphi 0, %s237
      %s252 = sphi 0, %s238
      %s256 = sphi 0, %s256
      %s258 = sphi 0, %s256
      %s259 = sphi 0, %s258
      %s273 = sphi 0, %s259
      %s277 = sphi 0, %s277
      %s279 = sphi 0, %s277
      %s280 = sphi 0, %s279
      %s294 = sphi 0, %s280
      %s298 = sphi 0, %s298
      %s300 = sphi 0, %s298
      %s301 = sphi 0, %s300
      %s315 = sphi 0, %s301
      %s319 = sphi 0, %s319
      %s321 = sphi 0, %s319
      %s322 = sphi 0, %s321
      %s336 = sphi 0, %s322
      %s340 = sphi 0, %s340
      %s342 = sphi 0, %s340
      %s343 = sphi 0, %s342
      %s357 = sphi 0, %s343
      %s361 = sphi 0, %s361
      %s363 = sphi 0, %s361
      %s364 = sphi 0, %s363
      %s378 = sphi 0, %s364
      %s382 = sphi 0, %s382
      %s384 = sphi 0, %s382
      %s385 = sphi 0, %s384
      %s399 = sphi 0, %s385
      %s405 = sphi 0, %s407
      %s408 = sphi 0, %s405
      %s409 = sphi 0, %s408
      %s425 = sphi 0, %s409
    $region4: #{tpu_custom_call.1} parent=1 // loop_header_branch
      %36 = sbr.rel (%p34) target = $region8
    $region5: #{tpu_custom_call.1} parent=1 // loop_body
      %s38 = ssub.s32 %s33, 1
      %s39 = ssub.s32 %s33, 2
      %s40 = sadd.s32 %s33, 1
      %s41 = ssub.s32 %s33, %s40
      %p42 = scmp.eq.s32.totalorder %s41, 0
      %s44 = sadd.s32 %s43, 1
      %s45 = scalar_select %p42, %s43, %s44
      %p48 = pneg %p42
      %p49 = scmp.eq.s32.totalorder %s33, 1
      %p50 = por %p48, %p49
      %p51 = scmp.ne.s32.totalorder %s43, %s46
      %p52 = scmp.eq.s32.totalorder %s33, 0
      %p53 = por %p51, %p52
      %p54 = scmp.ne.s32.totalorder %s43, %s46
      %p55 = scmp.eq.s32.totalorder %s38, 1
      %p56 = por %p54, %p55
      %p57 = scmp.ne.s32.totalorder %s46, %s47
      %p58 = scmp.eq.s32.totalorder %s38, 0
      %p59 = por %p57, %p58
      %p60 = scmp.ne.s32.totalorder %s46, %s47
      %p61 = scmp.eq.s32.totalorder %s39, 1
      %p62 = por %p60, %p61
      %p64 = scmp.ne.s32.totalorder %s47, %s63
      %p65 = scmp.eq.s32.totalorder %s39, 0
      %p66 = por %p64, %p65
      %s68 = sadd.s32 %s67, 1
      %p71 = scmp.eq.s32.totalorder %s33, 1
      %p72 = scmp.ne.s32.totalorder %s67, %s69
      %p73 = scmp.eq.s32.totalorder %s33, 0
      %p74 = por %p72, %p73
      %p75 = scmp.ne.s32.totalorder %s67, %s69
      %p76 = scmp.eq.s32.totalorder %s38, 1
      %p77 = por %p75, %p76
      %p78 = scmp.ne.s32.totalorder %s69, %s70
      %p79 = scmp.eq.s32.totalorder %s38, 0
      %p80 = por %p78, %p79
      %p81 = scmp.ne.s32.totalorder %s69, %s70
      %p82 = scmp.eq.s32.totalorder %s39, 1
      %p83 = por %p81, %p82
      %p85 = scmp.ne.s32.totalorder %s70, %s84
      %p86 = scmp.eq.s32.totalorder %s39, 0
      %p87 = por %p85, %p86
      %s89 = sadd.s32 %s88, 1
      %p92 = scmp.eq.s32.totalorder %s33, 1
      %p93 = scmp.ne.s32.totalorder %s88, %s90
      %p94 = scmp.eq.s32.totalorder %s33, 0
      %p95 = por %p93, %p94
      %p96 = scmp.ne.s32.totalorder %s88, %s90
      %p97 = scmp.eq.s32.totalorder %s38, 1
      %p98 = por %p96, %p97
      %p99 = scmp.ne.s32.totalorder %s90, %s91
      %p100 = scmp.eq.s32.totalorder %s38, 0
      %p101 = por %p99, %p100
      %p102 = scmp.ne.s32.totalorder %s90, %s91
      %p103 = scmp.eq.s32.totalorder %s39, 1
      %p104 = por %p102, %p103
      %p106 = scmp.ne.s32.totalorder %s91, %s105
      %p107 = scmp.eq.s32.totalorder %s39, 0
      %p108 = por %p106, %p107
      %s110 = sadd.s32 %s109, 1
      %p113 = scmp.eq.s32.totalorder %s33, 1
      %p114 = scmp.ne.s32.totalorder %s109, %s111
      %p115 = scmp.eq.s32.totalorder %s33, 0
      %p116 = por %p114, %p115
      %p117 = scmp.ne.s32.totalorder %s109, %s111
      %p118 = scmp.eq.s32.totalorder %s38, 1
      %p119 = por %p117, %p118
      %p120 = scmp.ne.s32.totalorder %s111, %s112
      %p121 = scmp.eq.s32.totalorder %s38, 0
      %p122 = por %p120, %p121
      %p123 = scmp.ne.s32.totalorder %s111, %s112
      %p124 = scmp.eq.s32.totalorder %s39, 1
      %p125 = por %p123, %p124
      %p127 = scmp.ne.s32.totalorder %s112, %s126
      %p128 = scmp.eq.s32.totalorder %s39, 0
      %p129 = por %p127, %p128
      %s131 = sadd.s32 %s130, 1
      %p134 = scmp.eq.s32.totalorder %s33, 1
      %p135 = scmp.ne.s32.totalorder %s130, %s132
      %p136 = scmp.eq.s32.totalorder %s33, 0
      %p137 = por %p135, %p136
      %p138 = scmp.ne.s32.totalorder %s130, %s132
      %p139 = scmp.eq.s32.totalorder %s38, 1
      %p140 = por %p138, %p139
      %p141 = scmp.ne.s32.totalorder %s132, %s133
      %p142 = scmp.eq.s32.totalorder %s38, 0
      %p143 = por %p141, %p142
      %p144 = scmp.ne.s32.totalorder %s132, %s133
      %p145 = scmp.eq.s32.totalorder %s39, 1
      %p146 = por %p144, %p145
      %p148 = scmp.ne.s32.totalorder %s133, %s147
      %p149 = scmp.eq.s32.totalorder %s39, 0
      %p150 = por %p148, %p149
      %s152 = sadd.s32 %s151, 1
      %p155 = scmp.eq.s32.totalorder %s33, 1
      %p156 = scmp.ne.s32.totalorder %s151, %s153
      %p157 = scmp.eq.s32.totalorder %s33, 0
      %p158 = por %p156, %p157
      %p159 = scmp.ne.s32.totalorder %s151, %s153
      %p160 = scmp.eq.s32.totalorder %s38, 1
      %p161 = por %p159, %p160
      %p162 = scmp.ne.s32.totalorder %s153, %s154
      %p163 = scmp.eq.s32.totalorder %s38, 0
      %p164 = por %p162, %p163
      %p165 = scmp.ne.s32.totalorder %s153, %s154
      %p166 = scmp.eq.s32.totalorder %s39, 1
      %p167 = por %p165, %p166
      %p169 = scmp.ne.s32.totalorder %s154, %s168
      %p170 = scmp.eq.s32.totalorder %s39, 0
      %p171 = por %p169, %p170
      %s173 = sadd.s32 %s172, 1
      %p176 = scmp.eq.s32.totalorder %s33, 1
      %p177 = scmp.ne.s32.totalorder %s172, %s174
      %p178 = scmp.eq.s32.totalorder %s33, 0
      %p179 = por %p177, %p178
      %p180 = scmp.ne.s32.totalorder %s172, %s174
      %p181 = scmp.eq.s32.totalorder %s38, 1
      %p182 = por %p180, %p181
      %p183 = scmp.ne.s32.totalorder %s174, %s175
      %p184 = scmp.eq.s32.totalorder %s38, 0
      %p185 = por %p183, %p184
      %p186 = scmp.ne.s32.totalorder %s174, %s175
      %p187 = scmp.eq.s32.totalorder %s39, 1
      %p188 = por %p186, %p187
      %p190 = scmp.ne.s32.totalorder %s175, %s189
      %p191 = scmp.eq.s32.totalorder %s39, 0
      %p192 = por %p190, %p191
      %s194 = sadd.s32 %s193, 1
      %p197 = scmp.eq.s32.totalorder %s33, 1
      %p198 = scmp.ne.s32.totalorder %s193, %s195
      %p199 = scmp.eq.s32.totalorder %s33, 0
      %p200 = por %p198, %p199
      %p201 = scmp.ne.s32.totalorder %s193, %s195
      %p202 = scmp.eq.s32.totalorder %s38, 1
      %p203 = por %p201, %p202
      %p204 = scmp.ne.s32.totalorder %s195, %s196
      %p205 = scmp.eq.s32.totalorder %s38, 0
      %p206 = por %p204, %p205
      %p207 = scmp.ne.s32.totalorder %s195, %s196
      %p208 = scmp.eq.s32.totalorder %s39, 1
      %p209 = por %p207, %p208
      %p211 = scmp.ne.s32.totalorder %s196, %s210
      %p212 = scmp.eq.s32.totalorder %s39, 0
      %p213 = por %p211, %p212
      %s215 = sadd.s32 %s214, 1
      %p218 = scmp.eq.s32.totalorder %s33, 1
      %p219 = scmp.ne.s32.totalorder %s214, %s216
      %p220 = scmp.eq.s32.totalorder %s33, 0
      %p221 = por %p219, %p220
      %p222 = scmp.ne.s32.totalorder %s214, %s216
      %p223 = scmp.eq.s32.totalorder %s38, 1
      %p224 = por %p222, %p223
      %p225 = scmp.ne.s32.totalorder %s216, %s217
      %p226 = scmp.eq.s32.totalorder %s38, 0
      %p227 = por %p225, %p226
      %p228 = scmp.ne.s32.totalorder %s216, %s217
      %p229 = scmp.eq.s32.totalorder %s39, 1
      %p230 = por %p228, %p229
      %p232 = scmp.ne.s32.totalorder %s217, %s231
      %p233 = scmp.eq.s32.totalorder %s39, 0
      %p234 = por %p232, %p233
      %s236 = sadd.s32 %s235, 1
      %p239 = scmp.eq.s32.totalorder %s33, 1
      %p240 = scmp.ne.s32.totalorder %s235, %s237
      %p241 = scmp.eq.s32.totalorder %s33, 0
      %p242 = por %p240, %p241
      %p243 = scmp.ne.s32.totalorder %s235, %s237
      %p244 = scmp.eq.s32.totalorder %s38, 1
      %p245 = por %p243, %p244
      %p246 = scmp.ne.s32.totalorder %s237, %s238
      %p247 = scmp.eq.s32.totalorder %s38, 0
      %p248 = por %p246, %p247
      %p249 = scmp.ne.s32.totalorder %s237, %s238
      %p250 = scmp.eq.s32.totalorder %s39, 1
      %p251 = por %p249, %p250
      %p253 = scmp.ne.s32.totalorder %s238, %s252
      %p254 = scmp.eq.s32.totalorder %s39, 0
      %p255 = por %p253, %p254
      %s257 = sadd.s32 %s256, 1
      %p260 = scmp.eq.s32.totalorder %s33, 1
      %p261 = scmp.ne.s32.totalorder %s256, %s258
      %p262 = scmp.eq.s32.totalorder %s33, 0
      %p263 = por %p261, %p262
      %p264 = scmp.ne.s32.totalorder %s256, %s258
      %p265 = scmp.eq.s32.totalorder %s38, 1
      %p266 = por %p264, %p265
      %p267 = scmp.ne.s32.totalorder %s258, %s259
      %p268 = scmp.eq.s32.totalorder %s38, 0
      %p269 = por %p267, %p268
      %p270 = scmp.ne.s32.totalorder %s258, %s259
      %p271 = scmp.eq.s32.totalorder %s39, 1
      %p272 = por %p270, %p271
      %p274 = scmp.ne.s32.totalorder %s259, %s273
      %p275 = scmp.eq.s32.totalorder %s39, 0
      %p276 = por %p274, %p275
      %s278 = sadd.s32 %s277, 1
      %p281 = scmp.eq.s32.totalorder %s33, 1
      %p282 = scmp.ne.s32.totalorder %s277, %s279
      %p283 = scmp.eq.s32.totalorder %s33, 0
      %p284 = por %p282, %p283
      %p285 = scmp.ne.s32.totalorder %s277, %s279
      %p286 = scmp.eq.s32.totalorder %s38, 1
      %p287 = por %p285, %p286
      %p288 = scmp.ne.s32.totalorder %s279, %s280
      %p289 = scmp.eq.s32.totalorder %s38, 0
      %p290 = por %p288, %p289
      %p291 = scmp.ne.s32.totalorder %s279, %s280
      %p292 = scmp.eq.s32.totalorder %s39, 1
      %p293 = por %p291, %p292
      %p295 = scmp.ne.s32.totalorder %s280, %s294
      %p296 = scmp.eq.s32.totalorder %s39, 0
      %p297 = por %p295, %p296
      %s299 = sadd.s32 %s298, 1
      %p302 = scmp.eq.s32.totalorder %s33, 1
      %p303 = scmp.ne.s32.totalorder %s298, %s300
      %p304 = scmp.eq.s32.totalorder %s33, 0
      %p305 = por %p303, %p304
      %p306 = scmp.ne.s32.totalorder %s298, %s300
      %p307 = scmp.eq.s32.totalorder %s38, 1
      %p308 = por %p306, %p307
      %p309 = scmp.ne.s32.totalorder %s300, %s301
      %p310 = scmp.eq.s32.totalorder %s38, 0
      %p311 = por %p309, %p310
      %p312 = scmp.ne.s32.totalorder %s300, %s301
      %p313 = scmp.eq.s32.totalorder %s39, 1
      %p314 = por %p312, %p313
      %p316 = scmp.ne.s32.totalorder %s301, %s315
      %p317 = scmp.eq.s32.totalorder %s39, 0
      %p318 = por %p316, %p317
      %s320 = sadd.s32 %s319, 1
      %p323 = scmp.eq.s32.totalorder %s33, 1
      %p324 = scmp.ne.s32.totalorder %s319, %s321
      %p325 = scmp.eq.s32.totalorder %s33, 0
      %p326 = por %p324, %p325
      %p327 = scmp.ne.s32.totalorder %s319, %s321
      %p328 = scmp.eq.s32.totalorder %s38, 1
      %p329 = por %p327, %p328
      %p330 = scmp.ne.s32.totalorder %s321, %s322
      %p331 = scmp.eq.s32.totalorder %s38, 0
      %p332 = por %p330, %p331
      %p333 = scmp.ne.s32.totalorder %s321, %s322
      %p334 = scmp.eq.s32.totalorder %s39, 1
      %p335 = por %p333, %p334
      %p337 = scmp.ne.s32.totalorder %s322, %s336
      %p338 = scmp.eq.s32.totalorder %s39, 0
      %p339 = por %p337, %p338
      %s341 = sadd.s32 %s340, 1
      %p344 = scmp.eq.s32.totalorder %s33, 1
      %p345 = scmp.ne.s32.totalorder %s340, %s342
      %p346 = scmp.eq.s32.totalorder %s33, 0
      %p347 = por %p345, %p346
      %p348 = scmp.ne.s32.totalorder %s340, %s342
      %p349 = scmp.eq.s32.totalorder %s38, 1
      %p350 = por %p348, %p349
      %p351 = scmp.ne.s32.totalorder %s342, %s343
      %p352 = scmp.eq.s32.totalorder %s38, 0
      %p353 = por %p351, %p352
      %p354 = scmp.ne.s32.totalorder %s342, %s343
      %p355 = scmp.eq.s32.totalorder %s39, 1
      %p356 = por %p354, %p355
      %p358 = scmp.ne.s32.totalorder %s343, %s357
      %p359 = scmp.eq.s32.totalorder %s39, 0
      %p360 = por %p358, %p359
      %s362 = sadd.s32 %s361, 1
      %p365 = scmp.eq.s32.totalorder %s33, 1
      %p366 = scmp.ne.s32.totalorder %s361, %s363
      %p367 = scmp.eq.s32.totalorder %s33, 0
      %p368 = por %p366, %p367
      %p369 = scmp.ne.s32.totalorder %s361, %s363
      %p370 = scmp.eq.s32.totalorder %s38, 1
      %p371 = por %p369, %p370
      %p372 = scmp.ne.s32.totalorder %s363, %s364
      %p373 = scmp.eq.s32.totalorder %s38, 0
      %p374 = por %p372, %p373
      %p375 = scmp.ne.s32.totalorder %s363, %s364
      %p376 = scmp.eq.s32.totalorder %s39, 1
      %p377 = por %p375, %p376
      %p379 = scmp.ne.s32.totalorder %s364, %s378
      %p380 = scmp.eq.s32.totalorder %s39, 0
      %p381 = por %p379, %p380
      %s383 = sadd.s32 %s382, 1
      %p386 = scmp.eq.s32.totalorder %s33, 1
      %p387 = scmp.ne.s32.totalorder %s382, %s384
      %p388 = scmp.eq.s32.totalorder %s33, 0
      %p389 = por %p387, %p388
      %p390 = scmp.ne.s32.totalorder %s382, %s384
      %p391 = scmp.eq.s32.totalorder %s38, 1
      %p392 = por %p390, %p391
      %p393 = scmp.ne.s32.totalorder %s384, %s385
      %p394 = scmp.eq.s32.totalorder %s38, 0
      %p395 = por %p393, %p394
      %p396 = scmp.ne.s32.totalorder %s384, %s385
      %p397 = scmp.eq.s32.totalorder %s39, 1
      %p398 = por %p396, %p397
      %p400 = scmp.ne.s32.totalorder %s385, %s399
      %p401 = scmp.eq.s32.totalorder %s39, 0
      %p402 = por %p400, %p401
      %s403 = ssub.s32 %s33, %s40
      %p404 = scmp.eq.s32.totalorder %s403, 0
      %s406 = sadd.s32 %s405, 1
      %s407 = scalar_select %p404, %s405, %s406
      %p410 = pneg %p404
      %p411 = scmp.eq.s32.totalorder %s33, 1
      %p412 = por %p410, %p411
      %p413 = scmp.ne.s32.totalorder %s405, %s408
      %p414 = scmp.eq.s32.totalorder %s33, 0
      %p415 = por %p413, %p414
      %p416 = scmp.ne.s32.totalorder %s405, %s408
      %p417 = scmp.eq.s32.totalorder %s38, 1
      %p418 = por %p416, %p417
      %p419 = scmp.ne.s32.totalorder %s408, %s409
      %p420 = scmp.eq.s32.totalorder %s38, 0
      %p421 = por %p419, %p420
      %p422 = scmp.ne.s32.totalorder %s408, %s409
      %p423 = scmp.eq.s32.totalorder %s39, 1
      %p424 = por %p422, %p423
      %p426 = scmp.ne.s32.totalorder %s409, %s425
      %p427 = scmp.eq.s32.totalorder %s39, 0
      %p428 = por %p426, %p427
      %p429 = scmp.le.s32.totalorder 1, %s33
      %p430 = scmp.lt.s32.totalorder %s33, 3
      %p431 = pnand %p429, %p430
      %p432 = pneg %p431
      // Predicated region
      $region9: #{tpu_custom_call.1} parent=5 // pred_check
        _
      $region10: #{tpu_custom_call.1} parent=5 // pred_check_branch
        %434 = sbr.rel (%p431) target = $region12
      $region11: #{tpu_custom_call.1} parent=5 // pred_region
        %s435 = ssub.s32 %s33, 1
        // Predicated region
        $region13: #{tpu_custom_call.1} parent=11 // pred_check
          %p436 = pneg %p80
        $region14: #{tpu_custom_call.1} parent=11 // pred_check_branch
          %438 = sbr.rel (%p436) target = $region16
        $region15: #{tpu_custom_call.1} parent=11 // pred_region
          %s440 = ssub.s32 128, 128
          %441 = vsyncadd [#allocation7], %s440
          %s443 = sshll.u32 [#allocation6], 4
          %s444 = int_to_ptr.vmem [resolvable:$true] %s443
          %446 = dma.hbm_to_vmem [thread:$0]  %s1, 128, %s444, [#allocation7]
        $region16: #{tpu_custom_call.1} parent=11 // pred_fallthru
          _
        // Predicated region
        $region17: #{tpu_custom_call.1} parent=11 // pred_check
          %p447 = pneg %p101
        $region18: #{tpu_custom_call.1} parent=11 // pred_check_branch
          %449 = sbr.rel (%p447) target = $region20
        $region19: #{tpu_custom_call.1} parent=11 // pred_region
          %s451 = ssub.s32 256, 256
          %452 = vsyncadd [#allocation7], %s451
          %s453 = sshll.u32 [#allocation8], 4
          %s454 = int_to_ptr.vmem [resolvable:$true] %s453
          %459 = dma.hbm_to_vmem [thread:$0]  %s2, 256, %s454, [#allocation7], 128, 128, 8
        $region20: #{tpu_custom_call.1} parent=11 // pred_fallthru
          _
        // Predicated region
        $region21: #{tpu_custom_call.1} parent=11 // pred_check
          %p460 = pneg %p122
        $region22: #{tpu_custom_call.1} parent=11 // pred_check_branch
          %462 = sbr.rel (%p460) target = $region24
        $region23: #{tpu_custom_call.1} parent=11 // pred_region
          _
        $region24: #{tpu_custom_call.1} parent=11 // pred_fallthru
          _
        // Predicated region
        $region25: #{tpu_custom_call.1} parent=11 // pred_check
          %p463 = pneg %p143
        $region26: #{tpu_custom_call.1} parent=11 // pred_check_branch
          %465 = sbr.rel (%p463) target = $region28
        $region27: #{tpu_custom_call.1} parent=11 // pred_region
          %s467 = ssub.s32 1024, 1024
          %468 = vsyncadd [#allocation10], %s467
          %s469 = sshll.u32 [#allocation9], 4
          %s470 = int_to_ptr.vmem [resolvable:$true] %s469
          %475 = dma.hbm_to_vmem [thread:$0]  %s4, 1024, %s470, [#allocation10], 64, 64, 4
        $region28: #{tpu_custom_call.1} parent=11 // pred_fallthru
          _
        // Predicated region
        $region29: #{tpu_custom_call.1} parent=11 // pred_check
          %p476 = pneg %p164
        $region30: #{tpu_custom_call.1} parent=11 // pred_check_branch
          %478 = sbr.rel (%p476) target = $region32
        $region31: #{tpu_custom_call.1} parent=11 // pred_region
          _
        $region32: #{tpu_custom_call.1} parent=11 // pred_fallthru
          _
        // Predicated region
        $region33: #{tpu_custom_call.1} parent=11 // pred_check
          %p479 = pneg %p185
        $region34: #{tpu_custom_call.1} parent=11 // pred_check_branch
          %481 = sbr.rel (%p479) target = $region36
        $region35: #{tpu_custom_call.1} parent=11 // pred_region
          %s483 = ssub.s32 1024, 1024
          %484 = vsyncadd [#allocation10], %s483
          %s485 = sshll.u32 [#allocation11], 4
          %s486 = int_to_ptr.vmem [resolvable:$true] %s485
          %491 = dma.hbm_to_vmem [thread:$0]  %s6, 1024, %s486, [#allocation10], 64, 64, 4
        $region36: #{tpu_custom_call.1} parent=11 // pred_fallthru
          _
        // Predicated region
        $region37: #{tpu_custom_call.1} parent=11 // pred_check
          %p492 = pneg %p206
        $region38: #{tpu_custom_call.1} parent=11 // pred_check_branch
          %494 = sbr.rel (%p492) target = $region40
        $region39: #{tpu_custom_call.1} parent=11 // pred_region
          _
        $region40: #{tpu_custom_call.1} parent=11 // pred_fallthru
          _
        // Predicated region
        $region41: #{tpu_custom_call.1} parent=11 // pred_check
          %p495 = pneg %p227
        $region42: #{tpu_custom_call.1} parent=11 // pred_check_branch
          %497 = sbr.rel (%p495) target = $region44
        $region43: #{tpu_custom_call.1} parent=11 // pred_region
          %s499 = ssub.s32 1024, 1024
          %500 = vsyncadd [#allocation13], %s499
          %s501 = sshll.u32 [#allocation12], 4
          %s502 = int_to_ptr.vmem [resolvable:$true] %s501
          %507 = dma.hbm_to_vmem [thread:$0]  %s8, 1024, %s502, [#allocation13], 64, 64, 4
        $region44: #{tpu_custom_call.1} parent=11 // pred_fallthru
          _
        // Predicated region
        $region45: #{tpu_custom_call.1} parent=11 // pred_check
          %p508 = pneg %p248
        $region46: #{tpu_custom_call.1} parent=11 // pred_check_branch
          %510 = sbr.rel (%p508) target = $region48
        $region47: #{tpu_custom_call.1} parent=11 // pred_region
          _
        $region48: #{tpu_custom_call.1} parent=11 // pred_fallthru
          _
        // Predicated region
        $region49: #{tpu_custom_call.1} parent=11 // pred_check
          %p511 = pneg %p269
        $region50: #{tpu_custom_call.1} parent=11 // pred_check_branch
          %513 = sbr.rel (%p511) target = $region52
        $region51: #{tpu_custom_call.1} parent=11 // pred_region
          _
        $region52: #{tpu_custom_call.1} parent=11 // pred_fallthru
          _
        // Predicated region
        $region53: #{tpu_custom_call.1} parent=11 // pred_check
          %p514 = pneg %p290
        $region54: #{tpu_custom_call.1} parent=11 // pred_check_branch
          %516 = sbr.rel (%p514) target = $region56
        $region55: #{tpu_custom_call.1} parent=11 // pred_region
          %s518 = ssub.s32 1024, 1024
          %519 = vsyncadd [#allocation13], %s518
          %s520 = sshll.u32 [#allocation14], 4
          %s521 = int_to_ptr.vmem [resolvable:$true] %s520
          %526 = dma.hbm_to_vmem [thread:$0]  %s11, 1024, %s521, [#allocation13], 64, 64, 4
        $region56: #{tpu_custom_call.1} parent=11 // pred_fallthru
          _
        // Predicated region
        $region57: #{tpu_custom_call.1} parent=11 // pred_check
          %p527 = pneg %p311
        $region58: #{tpu_custom_call.1} parent=11 // pred_check_branch
          %529 = sbr.rel (%p527) target = $region60
        $region59: #{tpu_custom_call.1} parent=11 // pred_region
          _
        $region60: #{tpu_custom_call.1} parent=11 // pred_fallthru
          _
        // Predicated region
        $region61: #{tpu_custom_call.1} parent=11 // pred_check
          %p530 = pneg %p332
        $region62: #{tpu_custom_call.1} parent=11 // pred_check_branch
          %532 = sbr.rel (%p530) target = $region64
        $region63: #{tpu_custom_call.1} parent=11 // pred_region
          %s534 = ssub.s32 3072, 3072
          %535 = vsyncadd [#allocation16], %s534
          %s536 = sshll.u32 [#allocation15], 4
          %s537 = int_to_ptr.vmem [resolvable:$true] %s536
          %542 = dma.hbm_to_vmem [thread:$0]  %s13, 3072, %s537, [#allocation16], 64, 64, 4
        $region64: #{tpu_custom_call.1} parent=11 // pred_fallthru
          _
        // Predicated region
        $region65: #{tpu_custom_call.1} parent=11 // pred_check
          %p543 = pneg %p353
        $region66: #{tpu_custom_call.1} parent=11 // pred_check_branch
          %545 = sbr.rel (%p543) target = $region68
        $region67: #{tpu_custom_call.1} parent=11 // pred_region
          _
        $region68: #{tpu_custom_call.1} parent=11 // pred_fallthru
          _
        // Predicated region
        $region69: #{tpu_custom_call.1} parent=11 // pred_check
          %p546 = pneg %p374
        $region70: #{tpu_custom_call.1} parent=11 // pred_check_branch
          %548 = sbr.rel (%p546) target = $region72
        $region71: #{tpu_custom_call.1} parent=11 // pred_region
          %s550 = ssub.s32 3072, 3072
          %551 = vsyncadd [#allocation16], %s550
          %s552 = sshll.u32 [#allocation17], 4
          %s553 = int_to_ptr.vmem [resolvable:$true] %s552
          %558 = dma.hbm_to_vmem [thread:$0]  %s15, 3072, %s553, [#allocation16], 64, 64, 4
        $region72: #{tpu_custom_call.1} parent=11 // pred_fallthru
          _
        // Predicated region
        $region73: #{tpu_custom_call.1} parent=11 // pred_check
          %p559 = pneg %p395
        $region74: #{tpu_custom_call.1} parent=11 // pred_check_branch
          %561 = sbr.rel (%p559) target = $region76
        $region75: #{tpu_custom_call.1} parent=11 // pred_region
          _
        $region76: #{tpu_custom_call.1} parent=11 // pred_fallthru
          _
      $region12: #{tpu_custom_call.1} parent=5 // pred_fallthru
        _
      %p562 = scmp.lt.s32.totalorder %s33, 2
      // Predicated region
      $region77: #{tpu_custom_call.1} parent=5 // pred_check
        %p563 = pneg %p562
      $region78: #{tpu_custom_call.1} parent=5 // pred_check_branch
        %565 = sbr.rel (%p563) target = $region80
      $region79: #{tpu_custom_call.1} parent=5 // pred_region
        // Predicated region
        $region81: #{tpu_custom_call.1} parent=79 // pred_check
          %p566 = pneg %p53
        $region82: #{tpu_custom_call.1} parent=79 // pred_check_branch
          %568 = sbr.rel (%p566) target = $region84
        $region83: #{tpu_custom_call.1} parent=79 // pred_region
          %s569 = sand.u32 %s43, 1
          %s570 = scalar_lea.sflag [#allocation4], %s569
          %s571 = sand.u32 %s43, 1
          %s572 = smul.addr %s571, 256
          %s573 = scalar_lea.vmem [#allocation3], %s572
          %s574 = smul.u32 4, %s33
          %s576 = ssub.s32 4096, 4096
          %577 = vsyncadd %s570, %s576
          %s578 = smul.addr %s574, 8
          %s579 = smul.addr %s578, 128
          %s580 = scalar_lea.hbm %s0, %s579
          %s581 = sshll.u32 %s573, 4
          %s582 = int_to_ptr.vmem [resolvable:$true] %s581
          %587 = dma.hbm_to_vmem [thread:$0]  %s580, 4096, %s582, %s570, 128, 128, 8
        $region84: #{tpu_custom_call.1} parent=79 // pred_fallthru
          _
      $region80: #{tpu_custom_call.1} parent=5 // pred_fallthru
        _
      %p588 = scmp.le.s32.totalorder 1, %s33
      %p589 = scmp.lt.s32.totalorder %s33, 3
      %p590 = pnand %p588, %p589
      %p591 = pneg %p590
      // Predicated region
      $region85: #{tpu_custom_call.1} parent=5 // pred_check
        _
      $region86: #{tpu_custom_call.1} parent=5 // pred_check_branch
        %593 = sbr.rel (%p590) target = $region88
      $region87: #{tpu_custom_call.1} parent=5 // pred_region
        %s594 = ssub.s32 %s33, 1
        %s595 = sand.u32 %s46, 1
        %s596 = scalar_lea.sflag [#allocation4], %s595
        %s597 = sand.u32 %s46, 1
        %s598 = smul.addr %s597, 256
        %s599 = scalar_lea.vmem [#allocation3], %s598
        // Predicated region
        $region89: #{tpu_custom_call.1} parent=87 // pred_check
          %p600 = pneg %p59
        $region90: #{tpu_custom_call.1} parent=87 // pred_check_branch
          %602 = sbr.rel (%p600) target = $region92
        $region91: #{tpu_custom_call.1} parent=87 // pred_region
          %603 = dma.done %s596, 4096
        $region92: #{tpu_custom_call.1} parent=87 // pred_fallthru
          _
        // Predicated region
        $region93: #{tpu_custom_call.1} parent=87 // pred_check
          %p604 = pneg %p80
        $region94: #{tpu_custom_call.1} parent=87 // pred_check_branch
          %606 = sbr.rel (%p604) target = $region96
        $region95: #{tpu_custom_call.1} parent=87 // pred_region
          %607 = dma.done [#allocation7], 128
        $region96: #{tpu_custom_call.1} parent=87 // pred_fallthru
          _
        // Predicated region
        $region97: #{tpu_custom_call.1} parent=87 // pred_check
          %p608 = pneg %p101
        $region98: #{tpu_custom_call.1} parent=87 // pred_check_branch
          %610 = sbr.rel (%p608) target = $region100
        $region99: #{tpu_custom_call.1} parent=87 // pred_region
          %611 = dma.done [#allocation7], 256
        $region100: #{tpu_custom_call.1} parent=87 // pred_fallthru
          _
        // Predicated region
        $region101: #{tpu_custom_call.1} parent=87 // pred_check
          %p612 = pneg %p143
        $region102: #{tpu_custom_call.1} parent=87 // pred_check_branch
          %614 = sbr.rel (%p612) target = $region104
        $region103: #{tpu_custom_call.1} parent=87 // pred_region
          %615 = dma.done [#allocation10], 1024
        $region104: #{tpu_custom_call.1} parent=87 // pred_fallthru
          _
        // Predicated region
        $region105: #{tpu_custom_call.1} parent=87 // pred_check
          %p616 = pneg %p185
        $region106: #{tpu_custom_call.1} parent=87 // pred_check_branch
          %618 = sbr.rel (%p616) target = $region108
        $region107: #{tpu_custom_call.1} parent=87 // pred_region
          %619 = dma.done [#allocation10], 1024
        $region108: #{tpu_custom_call.1} parent=87 // pred_fallthru
          _
        // Predicated region
        $region109: #{tpu_custom_call.1} parent=87 // pred_check
          %p620 = pneg %p227
        $region110: #{tpu_custom_call.1} parent=87 // pred_check_branch
          %622 = sbr.rel (%p620) target = $region112
        $region111: #{tpu_custom_call.1} parent=87 // pred_region
          %623 = dma.done [#allocation13], 1024
        $region112: #{tpu_custom_call.1} parent=87 // pred_fallthru
          _
        // Predicated region
        $region113: #{tpu_custom_call.1} parent=87 // pred_check
          %p624 = pneg %p290
        $region114: #{tpu_custom_call.1} parent=87 // pred_check_branch
          %626 = sbr.rel (%p624) target = $region116
        $region115: #{tpu_custom_call.1} parent=87 // pred_region
          %627 = dma.done [#allocation13], 1024
        $region116: #{tpu_custom_call.1} parent=87 // pred_fallthru
          _
        // Predicated region
        $region117: #{tpu_custom_call.1} parent=87 // pred_check
          %p628 = pneg %p332
        $region118: #{tpu_custom_call.1} parent=87 // pred_check_branch
          %630 = sbr.rel (%p628) target = $region120
        $region119: #{tpu_custom_call.1} parent=87 // pred_region
          %631 = dma.done [#allocation16], 3072
        $region120: #{tpu_custom_call.1} parent=87 // pred_fallthru
          _
        // Predicated region
        $region121: #{tpu_custom_call.1} parent=87 // pred_check
          %p632 = pneg %p374
        $region122: #{tpu_custom_call.1} parent=87 // pred_check_branch
          %634 = sbr.rel (%p632) target = $region124
        $region123: #{tpu_custom_call.1} parent=87 // pred_region
          %635 = dma.done [#allocation16], 3072
        $region124: #{tpu_custom_call.1} parent=87 // pred_fallthru
          _
        %s636 = sand.u32 %s46, 1
        %s637 = scalar_lea.sflag [#allocation4], %s636
        %s638 = sand.u32 %s46, 1
        %s639 = smul.addr %s638, 256
        %s640 = scalar_lea.vmem [#allocation3], %s639
        %p641 = pneg %p59
        %p642 = pneg %p56
        %p643 = pneg %p80
        %p644 = pneg %p77
        %p645 = pneg %p101
        %p646 = pneg %p98
        %p647 = pneg %p122
        %p648 = pneg %p119
        %p649 = pneg %p143
        %p650 = pneg %p140
        %p651 = pneg %p164
        %p652 = pneg %p161
        %p653 = pneg %p185
        %p654 = pneg %p182
        %p655 = pneg %p206
        %p656 = pneg %p203
        %p657 = pneg %p227
        %p658 = pneg %p224
        %p659 = pneg %p248
        %p660 = pneg %p245
        %p661 = pneg %p269
        %p662 = pneg %p266
        %p663 = pneg %p290
        %p664 = pneg %p287
        %p665 = pneg %p311
        %p666 = pneg %p308
        %p667 = pneg %p332
        %p668 = pneg %p329
        %p669 = pneg %p353
        %p670 = pneg %p350
        %p671 = pneg %p374
        %p672 = pneg %p371
        %p673 = pneg %p395
        %p674 = pneg %p392
        %p675 = pneg %p421
        %p676 = pneg %p418
        %s677 = sand.u32 %s408, 1
        %s678 = scalar_lea.sflag [#allocation5], %s677
        %s679 = sand.u32 %s408, 1
        %s680 = smul.addr %s679, 8
        %s681 = scalar_lea.vmem [#allocation18], %s680
        %s682 = smul.u32 4, %s38
        %v684 = vld [vmem:[%s599] sm:$0xff]
        %v685 = vld [vmem:[%s599 + $0x8] sm:$0xff]
        %v686 = vld [vmem:[%s599 + $0x10] sm:$0xff]
        %v687 = vld [vmem:[%s599 + $0x18] sm:$0xff]
        %v688 = vld [vmem:[%s599 + $0x20] sm:$0xff]
        %v689 = vld [vmem:[%s599 + $0x28] sm:$0xff]
        %v690 = vld [vmem:[%s599 + $0x30] sm:$0xff]
        %v691 = vld [vmem:[%s599 + $0x38] sm:$0xff]
        %v692 = vld [vmem:[%s599 + $0x40] sm:$0xff]
        %v693 = vld [vmem:[%s599 + $0x48] sm:$0xff]
        %v694 = vld [vmem:[%s599 + $0x50] sm:$0xff]
        %v695 = vld [vmem:[%s599 + $0x58] sm:$0xff]
        %v696 = vld [vmem:[%s599 + $0x60] sm:$0xff]
        %v697 = vld [vmem:[%s599 + $0x68] sm:$0xff]
        %v698 = vld [vmem:[%s599 + $0x70] sm:$0xff]
        %v699 = vld [vmem:[%s599 + $0x78] sm:$0xff]
        %v700 = vld [vmem:[%s599 + $0x80] sm:$0xff]
        %v701 = vld [vmem:[%s599 + $0x88] sm:$0xff]
        %v702 = vld [vmem:[%s599 + $0x90] sm:$0xff]
        %v703 = vld [vmem:[%s599 + $0x98] sm:$0xff]
        %v704 = vld [vmem:[%s599 + $0xa0] sm:$0xff]
        %v705 = vld [vmem:[%s599 + $0xa8] sm:$0xff]
        %v706 = vld [vmem:[%s599 + $0xb0] sm:$0xff]
        %v707 = vld [vmem:[%s599 + $0xb8] sm:$0xff]
        %v708 = vld [vmem:[%s599 + $0xc0] sm:$0xff]
        %v709 = vld [vmem:[%s599 + $0xc8] sm:$0xff]
        %v710 = vld [vmem:[%s599 + $0xd0] sm:$0xff]
        %v711 = vld [vmem:[%s599 + $0xd8] sm:$0xff]
        %v712 = vld [vmem:[%s599 + $0xe0] sm:$0xff]
        %v713 = vld [vmem:[%s599 + $0xe8] sm:$0xff]
        %v714 = vld [vmem:[%s599 + $0xf0] sm:$0xff]
        %v715 = vld [vmem:[%s599 + $0xf8] sm:$0xff]
        %v716 = vpack.c.bf16 %v685, %v684
        %v717 = vpack.c.bf16 %v687, %v686
        %v718 = vpack.c.bf16 %v689, %v688
        %v719 = vpack.c.bf16 %v691, %v690
        %v720 = vpack.c.bf16 %v693, %v692
        %v721 = vpack.c.bf16 %v695, %v694
        %v722 = vpack.c.bf16 %v697, %v696
        %v723 = vpack.c.bf16 %v699, %v698
        %v724 = vpack.c.bf16 %v701, %v700
        %v725 = vpack.c.bf16 %v703, %v702
        %v726 = vpack.c.bf16 %v705, %v704
        %v727 = vpack.c.bf16 %v707, %v706
        %v728 = vpack.c.bf16 %v709, %v708
        %v729 = vpack.c.bf16 %v711, %v710
        %v730 = vpack.c.bf16 %v713, %v712
        %v731 = vpack.c.bf16 %v715, %v714
        %v732 = vld [vmem:[#allocation6] sm:$0xff]
        %v733 = vld [vmem:[#allocation8] sm:$0xff]
        %v734 = vld [vmem:[#allocation8 + $0x8] sm:$0xff]
        %v737 = vunpack.c.l.b16 %v733
        %v738 = vunpack.c.h.b16 %v733
        %v739 = vunpack.c.l.b16 %v734
        %v740 = vunpack.c.h.b16 %v734
        %v741 = vpack.c.b16 %v739, %v737
        %v742 = vpack.c.b16 %v740, %v738
        %vm745 = vcmask 130048
        %v747 = vsel %vm745, %v716, 0
        %v750 = vsel %vm745, %v717, 0
        %v753 = vsel %vm745, %v718, 0
        %v756 = vsel %vm745, %v719, 0
        %v759 = vsel %vm745, %v720, 0
        %v762 = vsel %vm745, %v721, 0
        %v765 = vsel %vm745, %v722, 0
        %v768 = vsel %vm745, %v723, 0
        %v771 = vsel %vm745, %v724, 0
        %v774 = vsel %vm745, %v725, 0
        %v777 = vsel %vm745, %v726, 0
        %v780 = vsel %vm745, %v727, 0
        %v783 = vsel %vm745, %v728, 0
        %v786 = vsel %vm745, %v729, 0
        %v789 = vsel %vm745, %v730, 0
        %v792 = vsel %vm745, %v731, 0
        %794 = vmatprep.subr.bf16.mxu0 %v742
        %795 = vmatpush1.bf16.msra.mxu0 %v741
        %796 = vmatprep.subr.bf16.mxu0 0
        %797 = vmatpush1.bf16.msra.mxu0 0
        %798 = vmatprep.subr.bf16.mxu0 0
        %799 = vmatpush1.bf16.msra.mxu0 0
        %800 = vmatprep.subr.bf16.mxu0 0
        %801 = vmatpush1.bf16.msra.mxu0 0
        %802 = vmatprep.subr.bf16.mxu0 0
        %803 = vmatpush1.bf16.msra.mxu0 0
        %804 = vmatprep.subr.bf16.mxu0 0
        %805 = vmatpush1.bf16.msra.mxu0 0
        %806 = vmatprep.subr.bf16.mxu0 0
        %807 = vmatpush1.bf16.msra.mxu0 0
        %808 = vmatprep.subr.bf16.mxu0 0
        %809 = vmatpush1.bf16.msra.mxu0 0
        %810 = vmatprep.subr.bf16.mxu0 0
        %811 = vmatpush1.bf16.msra.mxu0 0
        %812 = vmatprep.subr.bf16.mxu0 0
        %813 = vmatpush1.bf16.msra.mxu0 0
        %814 = vmatprep.subr.bf16.mxu0 0
        %815 = vmatpush1.bf16.msra.mxu0 0
        %816 = vmatprep.subr.bf16.mxu0 0
        %817 = vmatpush1.bf16.msra.mxu0 0
        %818 = vmatprep.subr.bf16.mxu0 0
        %819 = vmatpush1.bf16.msra.mxu0 0
        %820 = vmatprep.subr.bf16.mxu0 0
        %821 = vmatpush1.bf16.msra.mxu0 0
        %822 = vmatprep.subr.bf16.mxu0 0
        %823 = vmatpush1.bf16.msra.mxu0 0
        %824 = vmatprep.subr.bf16.mxu0 0
        %825 = vmatpush1.bf16.msra.mxu0 0
        %826 = vmatprep.mubr.bf16.mxu0 0
        %827 = vmatmul.mubr.bf16.gmra.mrb[0].mxu0 %v747
        %v828 = vpop.f32.mrb[0].mxu0
        %v829 = vadd.f32 0.0, %v828
        %v830 = vpop.f32.mrb[0].mxu0
        %v831 = vadd.f32 0.0, %v830
        %v832 = vpop.f32.mrb[0].mxu0
        %v833 = vadd.f32 0.0, %v832
        %v834 = vpop.f32.mrb[0].mxu0
        %v835 = vadd.f32 0.0, %v834
        %836 = vmatprep.mubr.bf16.mxu0 0
        %837 = vmatmul.mubr.bf16.gmra.mrb[0].mxu0 %v750
        %v838 = vpop.f32.mrb[0].mxu0
        %v839 = vadd.f32 0.0, %v838
        %v840 = vpop.f32.mrb[0].mxu0
        %v841 = vadd.f32 0.0, %v840
        %v842 = vpop.f32.mrb[0].mxu0
        %v843 = vadd.f32 0.0, %v842
        %v844 = vpop.f32.mrb[0].mxu0
        %v845 = vadd.f32 0.0, %v844
        %846 = vmatprep.mubr.bf16.mxu0 0
        %847 = vmatmul.mubr.bf16.gmra.mrb[0].mxu0 %v753
        %v848 = vpop.f32.mrb[0].mxu0
        %v849 = vadd.f32 0.0, %v848
        %v850 = vpop.f32.mrb[0].mxu0
        %v851 = vadd.f32 0.0, %v850
        %v852 = vpop.f32.mrb[0].mxu0
        %v853 = vadd.f32 0.0, %v852
        %v854 = vpop.f32.mrb[0].mxu0
        %v855 = vadd.f32 0.0, %v854
        %856 = vmatprep.mubr.bf16.mxu0 0
        %857 = vmatmul.mubr.bf16.gmra.mrb[0].mxu0 %v756
        %v858 = vpop.f32.mrb[0].mxu0
        %v859 = vadd.f32 0.0, %v858
        %v860 = vpop.f32.mrb[0].mxu0
        %v861 = vadd.f32 0.0, %v860
        %v862 = vpop.f32.mrb[0].mxu0
        %v863 = vadd.f32 0.0, %v862
        %v864 = vpop.f32.mrb[0].mxu0
        %v865 = vadd.f32 0.0, %v864
        %866 = vmatprep.mubr.bf16.mxu0 0
        %867 = vmatmul.mubr.bf16.gmra.mrb[0].mxu0 %v759
        %v868 = vpop.f32.mrb[0].mxu0
        %v869 = vadd.f32 0.0, %v868
        %v870 = vpop.f32.mrb[0].mxu0
        %v871 = vadd.f32 0.0, %v870
        %v872 = vpop.f32.mrb[0].mxu0
        %v873 = vadd.f32 0.0, %v872
        %v874 = vpop.f32.mrb[0].mxu0
        %v875 = vadd.f32 0.0, %v874
        %876 = vmatprep.mubr.bf16.mxu0 0
        %877 = vmatmul.mubr.bf16.gmra.mrb[0].mxu0 %v762
        %v878 = vpop.f32.mrb[0].mxu0
        %v879 = vadd.f32 0.0, %v878
        %v880 = vpop.f32.mrb[0].mxu0
        %v881 = vadd.f32 0.0, %v880
        %v882 = vpop.f32.mrb[0].mxu0
        %v883 = vadd.f32 0.0, %v882
        %v884 = vpop.f32.mrb[0].mxu0
        %v885 = vadd.f32 0.0, %v884
        %886 = vmatprep.mubr.bf16.mxu0 0
        %887 = vmatmul.mubr.bf16.gmra.mrb[0].mxu0 %v765
        %v888 = vpop.f32.mrb[0].mxu0
        %v889 = vadd.f32 0.0, %v888
        %v890 = vpop.f32.mrb[0].mxu0
        %v891 = vadd.f32 0.0, %v890
        %v892 = vpop.f32.mrb[0].mxu0
        %v893 = vadd.f32 0.0, %v892
        %v894 = vpop.f32.mrb[0].mxu0
        %v895 = vadd.f32 0.0, %v894
        %896 = vmatprep.mubr.bf16.mxu0 0
        %897 = vmatmul.mubr.bf16.gmra.mrb[0].mxu0 %v768
        %v898 = vpop.f32.mrb[0].mxu0
        %v899 = vadd.f32 0.0, %v898
        %v900 = vpop.f32.mrb[0].mxu0
        %v901 = vadd.f32 0.0, %v900
        %v902 = vpop.f32.mrb[0].mxu0
        %v903 = vadd.f32 0.0, %v902
        %v904 = vpop.f32.mrb[0].mxu0
        %v905 = vadd.f32 0.0, %v904
        %906 = vmatprep.mubr.bf16.mxu0 0
        %907 = vmatmul.mubr.bf16.gmra.mrb[0].mxu0 %v771
        %v908 = vpop.f32.mrb[0].mxu0
        %v909 = vadd.f32 0.0, %v908
        %v910 = vpop.f32.mrb[0].mxu0
        %v911 = vadd.f32 0.0, %v910
        %v912 = vpop.f32.mrb[0].mxu0
        %v913 = vadd.f32 0.0, %v912
        %v914 = vpop.f32.mrb[0].mxu0
        %v915 = vadd.f32 0.0, %v914
        %916 = vmatprep.mubr.bf16.mxu0 0
        %917 = vmatmul.mubr.bf16.gmra.mrb[0].mxu0 %v774
        %v918 = vpop.f32.mrb[0].mxu0
        %v919 = vadd.f32 0.0, %v918
        %v920 = vpop.f32.mrb[0].mxu0
        %v921 = vadd.f32 0.0, %v920
        %v922 = vpop.f32.mrb[0].mxu0
        %v923 = vadd.f32 0.0, %v922
        %v924 = vpop.f32.mrb[0].mxu0
        %v925 = vadd.f32 0.0, %v924
        %926 = vmatprep.mubr.bf16.mxu0 0
        %927 = vmatmul.mubr.bf16.gmra.mrb[0].mxu0 %v777
        %v928 = vpop.f32.mrb[0].mxu0
        %v929 = vadd.f32 0.0, %v928
        %v930 = vpop.f32.mrb[0].mxu0
        %v931 = vadd.f32 0.0, %v930
        %v932 = vpop.f32.mrb[0].mxu0
        %v933 = vadd.f32 0.0, %v932
        %v934 = vpop.f32.mrb[0].mxu0
        %v935 = vadd.f32 0.0, %v934
        %936 = vmatprep.mubr.bf16.mxu0 0
        %937 = vmatmul.mubr.bf16.gmra.mrb[0].mxu0 %v780
        %v938 = vpop.f32.mrb[0].mxu0
        %v939 = vadd.f32 0.0, %v938
        %v940 = vpop.f32.mrb[0].mxu0
        %v941 = vadd.f32 0.0, %v940
        %v942 = vpop.f32.mrb[0].mxu0
        %v943 = vadd.f32 0.0, %v942
        %v944 = vpop.f32.mrb[0].mxu0
        %v945 = vadd.f32 0.0, %v944
        %946 = vmatprep.mubr.bf16.mxu0 0
        %947 = vmatmul.mubr.bf16.gmra.mrb[0].mxu0 %v783
        %v948 = vpop.f32.mrb[0].mxu0
        %v949 = vadd.f32 0.0, %v948
        %v950 = vpop.f32.mrb[0].mxu0
        %v951 = vadd.f32 0.0, %v950
        %v952 = vpop.f32.mrb[0].mxu0
        %v953 = vadd.f32 0.0, %v952
        %v954 = vpop.f32.mrb[0].mxu0
        %v955 = vadd.f32 0.0, %v954
        %956 = vmatprep.mubr.bf16.mxu0 0
        %957 = vmatmul.mubr.bf16.gmra.mrb[0].mxu0 %v786
        %v958 = vpop.f32.mrb[0].mxu0
        %v959 = vadd.f32 0.0, %v958
        %v960 = vpop.f32.mrb[0].mxu0
        %v961 = vadd.f32 0.0, %v960
        %v962 = vpop.f32.mrb[0].mxu0
        %v963 = vadd.f32 0.0, %v962
        %v964 = vpop.f32.mrb[0].mxu0
        %v965 = vadd.f32 0.0, %v964
        %966 = vmatprep.mubr.bf16.mxu0 0
        %967 = vmatmul.mubr.bf16.gmra.mrb[0].mxu0 %v789
        %v968 = vpop.f32.mrb[0].mxu0
        %v969 = vadd.f32 0.0, %v968
        %v970 = vpop.f32.mrb[0].mxu0
        %v971 = vadd.f32 0.0, %v970
        %v972 = vpop.f32.mrb[0].mxu0
        %v973 = vadd.f32 0.0, %v972
        %v974 = vpop.f32.mrb[0].mxu0
        %v975 = vadd.f32 0.0, %v974
        %976 = vmatprep.mubr.bf16.mxu0 0
        %977 = vmatmul.mubr.bf16.gmra.mrb[0].mxu0 %v792
        %v978 = vpop.f32.mrb[0].mxu0
        %v979 = vadd.f32 0.0, %v978
        %v980 = vpop.f32.mrb[0].mxu0
        %v981 = vadd.f32 0.0, %v980
        %v982 = vpop.f32.mrb[0].mxu0
        %v983 = vadd.f32 0.0, %v982
        %v984 = vpop.f32.mrb[0].mxu0
        %v985 = vadd.f32 0.0, %v984
        %986 = vdwg.mxu0
        %v987 = vld [vmem:[%s3] sm:$0x7]
        %v988 = vlaneseq
        %v989 = vshrl.u32 %v988, 7
        %v990 = vsub.s32 0, %v989
        %v991 = vrot.slane %v987, %v990
        %v992 = vadd.f32 %v829, %v991
        %v993 = vadd.f32 %v833, %v991
        %v994 = vadd.f32 %v839, %v991
        %v995 = vadd.f32 %v843, %v991
        %v996 = vadd.f32 %v849, %v991
        %v997 = vadd.f32 %v853, %v991
        %v998 = vadd.f32 %v859, %v991
        %v999 = vadd.f32 %v863, %v991
        %v1000 = vadd.f32 %v869, %v991
        %v1001 = vadd.f32 %v873, %v991
        %v1002 = vadd.f32 %v879, %v991
        %v1003 = vadd.f32 %v883, %v991
        %v1004 = vadd.f32 %v889, %v991
        %v1005 = vadd.f32 %v893, %v991
        %v1006 = vadd.f32 %v899, %v991
        %v1007 = vadd.f32 %v903, %v991
        %v1008 = vadd.f32 %v909, %v991
        %v1009 = vadd.f32 %v913, %v991
        %v1010 = vadd.f32 %v919, %v991
        %v1011 = vadd.f32 %v923, %v991
        %v1012 = vadd.f32 %v929, %v991
        %v1013 = vadd.f32 %v933, %v991
        %v1014 = vadd.f32 %v939, %v991
        %v1015 = vadd.f32 %v943, %v991
        %v1016 = vadd.f32 %v949, %v991
        %v1017 = vadd.f32 %v953, %v991
        %v1018 = vadd.f32 %v959, %v991
        %v1019 = vadd.f32 %v963, %v991
        %v1020 = vadd.f32 %v969, %v991
        %v1021 = vadd.f32 %v973, %v991
        %v1022 = vadd.f32 %v979, %v991
        %v1023 = vadd.f32 %v983, %v991
        %v1024 = vlaneseq
        %v1025 = vshrl.u32 %v1024, 7
        %v1026 = vsub.s32 1, %v1025
        %v1027 = vrot.slane %v987, %v1026
        %v1028 = vmul.f32 %v992, %v1027
        %v1029 = vmul.f32 %v993, %v1027
        %v1030 = vmul.f32 %v994, %v1027
        %v1031 = vmul.f32 %v995, %v1027
        %v1032 = vmul.f32 %v996, %v1027
        %v1033 = vmul.f32 %v997, %v1027
        %v1034 = vmul.f32 %v998, %v1027
        %v1035 = vmul.f32 %v999, %v1027
        %v1036 = vmul.f32 %v1000, %v1027
        %v1037 = vmul.f32 %v1001, %v1027
        %v1038 = vmul.f32 %v1002, %v1027
        %v1039 = vmul.f32 %v1003, %v1027
        %v1040 = vmul.f32 %v1004, %v1027
        %v1041 = vmul.f32 %v1005, %v1027
        %v1042 = vmul.f32 %v1006, %v1027
        %v1043 = vmul.f32 %v1007, %v1027
        %v1044 = vmul.f32 %v1008, %v1027
        %v1045 = vmul.f32 %v1009, %v1027
        %v1046 = vmul.f32 %v1010, %v1027
        %v1047 = vmul.f32 %v1011, %v1027
        %v1048 = vmul.f32 %v1012, %v1027
        %v1049 = vmul.f32 %v1013, %v1027
        %v1050 = vmul.f32 %v1014, %v1027
        %v1051 = vmul.f32 %v1015, %v1027
        %v1052 = vmul.f32 %v1016, %v1027
        %v1053 = vmul.f32 %v1017, %v1027
        %v1054 = vmul.f32 %v1018, %v1027
        %v1055 = vmul.f32 %v1019, %v1027
        %v1056 = vmul.f32 %v1020, %v1027
        %v1057 = vmul.f32 %v1021, %v1027
        %v1058 = vmul.f32 %v1022, %v1027
        %v1059 = vmul.f32 %v1023, %v1027
        %v1060 = vlaneseq
        %v1061 = vshrl.u32 %v1060, 7
        %v1062 = vsub.s32 2, %v1061
        %v1063 = vrot.slane %v987, %v1062
        %v1064 = vadd.f32 %v1028, %v1063
        %v1065 = vadd.f32 %v1029, %v1063
        %v1066 = vadd.f32 %v1030, %v1063
        %v1067 = vadd.f32 %v1031, %v1063
        %v1068 = vadd.f32 %v1032, %v1063
        %v1069 = vadd.f32 %v1033, %v1063
        %v1070 = vadd.f32 %v1034, %v1063
        %v1071 = vadd.f32 %v1035, %v1063
        %v1072 = vadd.f32 %v1036, %v1063
        %v1073 = vadd.f32 %v1037, %v1063
        %v1074 = vadd.f32 %v1038, %v1063
        %v1075 = vadd.f32 %v1039, %v1063
        %v1076 = vadd.f32 %v1040, %v1063
        %v1077 = vadd.f32 %v1041, %v1063
        %v1078 = vadd.f32 %v1042, %v1063
        %v1079 = vadd.f32 %v1043, %v1063
        %v1080 = vadd.f32 %v1044, %v1063
        %v1081 = vadd.f32 %v1045, %v1063
        %v1082 = vadd.f32 %v1046, %v1063
        %v1083 = vadd.f32 %v1047, %v1063
        %v1084 = vadd.f32 %v1048, %v1063
        %v1085 = vadd.f32 %v1049, %v1063
        %v1086 = vadd.f32 %v1050, %v1063
        %v1087 = vadd.f32 %v1051, %v1063
        %v1088 = vadd.f32 %v1052, %v1063
        %v1089 = vadd.f32 %v1053, %v1063
        %v1090 = vadd.f32 %v1054, %v1063
        %v1091 = vadd.f32 %v1055, %v1063
        %v1092 = vadd.f32 %v1056, %v1063
        %v1093 = vadd.f32 %v1057, %v1063
        %v1094 = vadd.f32 %v1058, %v1063
        %v1095 = vadd.f32 %v1059, %v1063
        %v1096 = vmax.f32 %v1064, 0.0
        %v1097 = vmax.f32 %v1065, 0.0
        %v1098 = vmax.f32 %v1066, 0.0
        %v1099 = vmax.f32 %v1067, 0.0
        %v1100 = vmax.f32 %v1068, 0.0
        %v1101 = vmax.f32 %v1069, 0.0
        %v1102 = vmax.f32 %v1070, 0.0
        %v1103 = vmax.f32 %v1071, 0.0
        %v1104 = vmax.f32 %v1072, 0.0
        %v1105 = vmax.f32 %v1073, 0.0
        %v1106 = vmax.f32 %v1074, 0.0
        %v1107 = vmax.f32 %v1075, 0.0
        %v1108 = vmax.f32 %v1076, 0.0
        %v1109 = vmax.f32 %v1077, 0.0
        %v1110 = vmax.f32 %v1078, 0.0
        %v1111 = vmax.f32 %v1079, 0.0
        %v1112 = vmax.f32 %v1080, 0.0
        %v1113 = vmax.f32 %v1081, 0.0
        %v1114 = vmax.f32 %v1082, 0.0
        %v1115 = vmax.f32 %v1083, 0.0
        %v1116 = vmax.f32 %v1084, 0.0
        %v1117 = vmax.f32 %v1085, 0.0
        %v1118 = vmax.f32 %v1086, 0.0
        %v1119 = vmax.f32 %v1087, 0.0
        %v1120 = vmax.f32 %v1088, 0.0
        %v1121 = vmax.f32 %v1089, 0.0
        %v1122 = vmax.f32 %v1090, 0.0
        %v1123 = vmax.f32 %v1091, 0.0
        %v1124 = vmax.f32 %v1092, 0.0
        %v1125 = vmax.f32 %v1093, 0.0
        %v1126 = vmax.f32 %v1094, 0.0
        %v1127 = vmax.f32 %v1095, 0.0
        %v1128 = vld [vmem:[%s10] sm:$0x7]
        %v1129 = vlaneseq
        %v1130 = vshrl.u32 %v1129, 7
        %v1131 = vsub.s32 0, %v1130
        %v1132 = vrot.slane %v1128, %v1131
        %v1133 = vadd.f32 %v831, %v1132
        %v1134 = vadd.f32 %v835, %v1132
        %v1135 = vadd.f32 %v841, %v1132
        %v1136 = vadd.f32 %v845, %v1132
        %v1137 = vadd.f32 %v851, %v1132
        %v1138 = vadd.f32 %v855, %v1132
        %v1139 = vadd.f32 %v861, %v1132
        %v1140 = vadd.f32 %v865, %v1132
        %v1141 = vadd.f32 %v871, %v1132
        %v1142 = vadd.f32 %v875, %v1132
        %v1143 = vadd.f32 %v881, %v1132
        %v1144 = vadd.f32 %v885, %v1132
        %v1145 = vadd.f32 %v891, %v1132
        %v1146 = vadd.f32 %v895, %v1132
        %v1147 = vadd.f32 %v901, %v1132
        %v1148 = vadd.f32 %v905, %v1132
        %v1149 = vadd.f32 %v911, %v1132
        %v1150 = vadd.f32 %v915, %v1132
        %v1151 = vadd.f32 %v921, %v1132
        %v1152 = vadd.f32 %v925, %v1132
        %v1153 = vadd.f32 %v931, %v1132
        %v1154 = vadd.f32 %v935, %v1132
        %v1155 = vadd.f32 %v941, %v1132
        %v1156 = vadd.f32 %v945, %v1132
        %v1157 = vadd.f32 %v951, %v1132
        %v1158 = vadd.f32 %v955, %v1132
        %v1159 = vadd.f32 %v961, %v1132
        %v1160 = vadd.f32 %v965, %v1132
        %v1161 = vadd.f32 %v971, %v1132
        %v1162 = vadd.f32 %v975, %v1132
        %v1163 = vadd.f32 %v981, %v1132
        %v1164 = vadd.f32 %v985, %v1132
        %v1165 = vlaneseq
        %v1166 = vshrl.u32 %v1165, 7
        %v1167 = vsub.s32 1, %v1166
        %v1168 = vrot.slane %v1128, %v1167
        %v1169 = vmul.f32 %v1133, %v1168
        %v1170 = vmul.f32 %v1134, %v1168
        %v1171 = vmul.f32 %v1135, %v1168
        %v1172 = vmul.f32 %v1136, %v1168
        %v1173 = vmul.f32 %v1137, %v1168
        %v1174 = vmul.f32 %v1138, %v1168
        %v1175 = vmul.f32 %v1139, %v1168
        %v1176 = vmul.f32 %v1140, %v1168
        %v1177 = vmul.f32 %v1141, %v1168
        %v1178 = vmul.f32 %v1142, %v1168
        %v1179 = vmul.f32 %v1143, %v1168
        %v1180 = vmul.f32 %v1144, %v1168
        %v1181 = vmul.f32 %v1145, %v1168
        %v1182 = vmul.f32 %v1146, %v1168
        %v1183 = vmul.f32 %v1147, %v1168
        %v1184 = vmul.f32 %v1148, %v1168
        %v1185 = vmul.f32 %v1149, %v1168
        %v1186 = vmul.f32 %v1150, %v1168
        %v1187 = vmul.f32 %v1151, %v1168
        %v1188 = vmul.f32 %v1152, %v1168
        %v1189 = vmul.f32 %v1153, %v1168
        %v1190 = vmul.f32 %v1154, %v1168
        %v1191 = vmul.f32 %v1155, %v1168
        %v1192 = vmul.f32 %v1156, %v1168
        %v1193 = vmul.f32 %v1157, %v1168
        %v1194 = vmul.f32 %v1158, %v1168
        %v1195 = vmul.f32 %v1159, %v1168
        %v1196 = vmul.f32 %v1160, %v1168
        %v1197 = vmul.f32 %v1161, %v1168
        %v1198 = vmul.f32 %v1162, %v1168
        %v1199 = vmul.f32 %v1163, %v1168
        %v1200 = vmul.f32 %v1164, %v1168
        %v1201 = vlaneseq
        %v1202 = vshrl.u32 %v1201, 7
        %v1203 = vsub.s32 2, %v1202
        %v1204 = vrot.slane %v1128, %v1203
        %v1205 = vadd.f32 %v1169, %v1204
        %v1206 = vadd.f32 %v1170, %v1204
        %v1207 = vadd.f32 %v1171, %v1204
        %v1208 = vadd.f32 %v1172, %v1204
        %v1209 = vadd.f32 %v1173, %v1204
        %v1210 = vadd.f32 %v1174, %v1204
        %v1211 = vadd.f32 %v1175, %v1204
        %v1212 = vadd.f32 %v1176, %v1204
        %v1213 = vadd.f32 %v1177, %v1204
        %v1214 = vadd.f32 %v1178, %v1204
        %v1215 = vadd.f32 %v1179, %v1204
        %v1216 = vadd.f32 %v1180, %v1204
        %v1217 = vadd.f32 %v1181, %v1204
        %v1218 = vadd.f32 %v1182, %v1204
        %v1219 = vadd.f32 %v1183, %v1204
        %v1220 = vadd.f32 %v1184, %v1204
        %v1221 = vadd.f32 %v1185, %v1204
        %v1222 = vadd.f32 %v1186, %v1204
        %v1223 = vadd.f32 %v1187, %v1204
        %v1224 = vadd.f32 %v1188, %v1204
        %v1225 = vadd.f32 %v1189, %v1204
        %v1226 = vadd.f32 %v1190, %v1204
        %v1227 = vadd.f32 %v1191, %v1204
        %v1228 = vadd.f32 %v1192, %v1204
        %v1229 = vadd.f32 %v1193, %v1204
        %v1230 = vadd.f32 %v1194, %v1204
        %v1231 = vadd.f32 %v1195, %v1204
        %v1232 = vadd.f32 %v1196, %v1204
        %v1233 = vadd.f32 %v1197, %v1204
        %v1234 = vadd.f32 %v1198, %v1204
        %v1235 = vadd.f32 %v1199, %v1204
        %v1236 = vadd.f32 %v1200, %v1204
        %v1237 = vmax.f32 %v1205, 0.0
        %v1238 = vmax.f32 %v1206, 0.0
        %v1239 = vmax.f32 %v1207, 0.0
        %v1240 = vmax.f32 %v1208, 0.0
        %v1241 = vmax.f32 %v1209, 0.0
        %v1242 = vmax.f32 %v1210, 0.0
        %v1243 = vmax.f32 %v1211, 0.0
        %v1244 = vmax.f32 %v1212, 0.0
        %v1245 = vmax.f32 %v1213, 0.0
        %v1246 = vmax.f32 %v1214, 0.0
        %v1247 = vmax.f32 %v1215, 0.0
        %v1248 = vmax.f32 %v1216, 0.0
        %v1249 = vmax.f32 %v1217, 0.0
        %v1250 = vmax.f32 %v1218, 0.0
        %v1251 = vmax.f32 %v1219, 0.0
        %v1252 = vmax.f32 %v1220, 0.0
        %v1253 = vmax.f32 %v1221, 0.0
        %v1254 = vmax.f32 %v1222, 0.0
        %v1255 = vmax.f32 %v1223, 0.0
        %v1256 = vmax.f32 %v1224, 0.0
        %v1257 = vmax.f32 %v1225, 0.0
        %v1258 = vmax.f32 %v1226, 0.0
        %v1259 = vmax.f32 %v1227, 0.0
        %v1260 = vmax.f32 %v1228, 0.0
        %v1261 = vmax.f32 %v1229, 0.0
        %v1262 = vmax.f32 %v1230, 0.0
        %v1263 = vmax.f32 %v1231, 0.0
        %v1264 = vmax.f32 %v1232, 0.0
        %v1265 = vmax.f32 %v1233, 0.0
        %v1266 = vmax.f32 %v1234, 0.0
        %v1267 = vmax.f32 %v1235, 0.0
        %v1268 = vmax.f32 %v1236, 0.0
        %v1269 = vpack.c.bf16 %v1097, %v1096
        %v1270 = vpack.c.bf16 %v1099, %v1098
        %v1271 = vpack.c.bf16 %v1101, %v1100
        %v1272 = vpack.c.bf16 %v1103, %v1102
        %v1273 = vpack.c.bf16 %v1105, %v1104
        %v1274 = vpack.c.bf16 %v1107, %v1106
        %v1275 = vpack.c.bf16 %v1109, %v1108
        %v1276 = vpack.c.bf16 %v1111, %v1110
        %v1277 = vpack.c.bf16 %v1113, %v1112
        %v1278 = vpack.c.bf16 %v1115, %v1114
        %v1279 = vpack.c.bf16 %v1117, %v1116
        %v1280 = vpack.c.bf16 %v1119, %v1118
        %v1281 = vpack.c.bf16 %v1121, %v1120
        %v1282 = vpack.c.bf16 %v1123, %v1122
        %v1283 = vpack.c.bf16 %v1125, %v1124
        %v1284 = vpack.c.bf16 %v1127, %v1126
        %v1285 = vld [vmem:[#allocation9] sm:$0xf]
        %v1286 = vld [vmem:[#allocation9 + $0x4] sm:$0xf]
        %v1287 = vld [vmem:[#allocation9 + $0x8] sm:$0xf]
        %v1288 = vld [vmem:[#allocation9 + $0xc] sm:$0xf]
        %v1289 = vld [vmem:[#allocation9 + $0x10] sm:$0xf]
        %v1290 = vld [vmem:[#allocation9 + $0x14] sm:$0xf]
        %v1291 = vld [vmem:[#allocation9 + $0x18] sm:$0xf]
        %v1292 = vld [vmem:[#allocation9 + $0x1c] sm:$0xf]
        %v1293 = vld [vmem:[#allocation9 + $0x20] sm:$0xf]
        %v1294 = vld [vmem:[#allocation9 + $0x24] sm:$0xf]
        %v1295 = vld [vmem:[#allocation9 + $0x28] sm:$0xf]
        %v1296 = vld [vmem:[#allocation9 + $0x2c] sm:$0xf]
        %v1297 = vld [vmem:[#allocation9 + $0x30] sm:$0xf]
        %v1298 = vld [vmem:[#allocation9 + $0x34] sm:$0xf]
        %v1299 = vld [vmem:[#allocation9 + $0x38] sm:$0xf]
        %v1300 = vld [vmem:[#allocation9 + $0x3c] sm:$0xf]
        %v1301 = vld [vmem:[%s5] sm:$0x7]
        %v1302 = vlaneseq
        %v1303 = vshrl.u32 %v1302, 7
        %v1304 = vsub.s32 0, %v1303
        %v1305 = vrot.slane %v1301, %v1304
        %v1322 = vunpack.c.l.b16 %v1285
        %v1323 = vunpack.c.l.b16 %v1286
        %v1324 = vunpack.c.l.b16 %v1287
        %v1325 = vunpack.c.l.b16 %v1288
        %v1326 = vunpack.c.l.b16 %v1289
        %v1327 = vunpack.c.l.b16 %v1290
        %v1328 = vunpack.c.l.b16 %v1291
        %v1329 = vunpack.c.l.b16 %v1292
        %v1330 = vunpack.c.l.b16 %v1293
        %v1331 = vunpack.c.l.b16 %v1294
        %v1332 = vunpack.c.l.b16 %v1295
        %v1333 = vunpack.c.l.b16 %v1296
        %v1334 = vunpack.c.l.b16 %v1297
        %v1335 = vunpack.c.l.b16 %v1298
        %v1336 = vunpack.c.l.b16 %v1299
        %v1337 = vunpack.c.l.b16 %v1300
        %v1338 = vpack.c.b16 %v1323, %v1322
        %v1339 = vpack.c.b16 %v1325, %v1324
        %v1340 = vpack.c.b16 %v1327, %v1326
        %v1341 = vpack.c.b16 %v1329, %v1328
        %v1342 = vpack.c.b16 %v1331, %v1330
        %v1343 = vpack.c.b16 %v1333, %v1332
        %v1344 = vpack.c.b16 %v1335, %v1334
        %v1345 = vpack.c.b16 %v1337, %v1336
        %1354 = vmatprep.subr.bf16.mxu0 0
        %1355 = vmatpush1.bf16.msra.mxu0 %v1338
        %1356 = vmatprep.subr.bf16.mxu0 0
        %1357 = vmatpush1.bf16.msra.mxu0 %v1339
        %1358 = vmatprep.subr.bf16.mxu0 0
        %1359 = vmatpush1.bf16.msra.mxu0 %v1340
        %1360 = vmatprep.subr.bf16.mxu0 0
        %1361 = vmatpush1.bf16.msra.mxu0 %v1341
        %1362 = vmatprep.subr.bf16.mxu0 0
        %1363 = vmatpush1.bf16.msra.mxu0 %v1342
        %1364 = vmatprep.subr.bf16.mxu0 0
        %1365 = vmatpush1.bf16.msra.mxu0 %v1343
        %1366 = vmatprep.subr.bf16.mxu0 0
        %1367 = vmatpush1.bf16.msra.mxu0 %v1344
        %1368 = vmatprep.subr.bf16.mxu0 0
        %1369 = vmatpush1.bf16.msra.mxu0 %v1345
        %1370 = vmatprep.subr.bf16.mxu0 0
        %1371 = vmatpush1.bf16.msra.mxu0 0
        %1372 = vmatprep.subr.bf16.mxu0 0
        %1373 = vmatpush1.bf16.msra.mxu0 0
        %1374 = vmatprep.subr.bf16.mxu0 0
        %1375 = vmatpush1.bf16.msra.mxu0 0
        %1376 = vmatprep.subr.bf16.mxu0 0
        %1377 = vmatpush1.bf16.msra.mxu0 0
        %1378 = vmatprep.subr.bf16.mxu0 0
        %1379 = vmatpush1.bf16.msra.mxu0 0
        %1380 = vmatprep.subr.bf16.mxu0 0
        %1381 = vmatpush1.bf16.msra.mxu0 0
        %1382 = vmatprep.subr.bf16.mxu0 0
        %1383 = vmatpush1.bf16.msra.mxu0 0
        %1384 = vmatprep.subr.bf16.mxu0 0
        %1385 = vmatpush1.bf16.msra.mxu0 0
        %1386 = vmatprep.mubr.bf16.mxu0 0
        %1387 = vmatmul.mubr.bf16.gmra.mrb[0].mxu0 %v1269
        %v1388 = vpop.f32.mrb[0].mxu0
        %v1389 = vadd.f32 %v1305, %v1388
        %v1390 = vpop.f32.mrb[0].mxu0
        %v1391 = vpop.f32.mrb[0].mxu0
        %v1392 = vadd.f32 %v1305, %v1391
        %v1393 = vpop.f32.mrb[0].mxu0
        %1394 = vmatprep.mubr.bf16.mxu0 0
        %1395 = vmatmul.mubr.bf16.gmra.mrb[0].mxu0 %v1270
        %v1396 = vpop.f32.mrb[0].mxu0
        %v1397 = vadd.f32 %v1305, %v1396
        %v1398 = vpop.f32.mrb[0].mxu0
        %v1399 = vpop.f32.mrb[0].mxu0
        %v1400 = vadd.f32 %v1305, %v1399
        %v1401 = vpop.f32.mrb[0].mxu0
        %1402 = vmatprep.mubr.bf16.mxu0 0
        %1403 = vmatmul.mubr.bf16.gmra.mrb[0].mxu0 %v1271
        %v1404 = vpop.f32.mrb[0].mxu0
        %v1405 = vadd.f32 %v1305, %v1404
        %v1406 = vpop.f32.mrb[0].mxu0
        %v1407 = vpop.f32.mrb[0].mxu0
        %v1408 = vadd.f32 %v1305, %v1407
        %v1409 = vpop.f32.mrb[0].mxu0
        %1410 = vmatprep.mubr.bf16.mxu0 0
        %1411 = vmatmul.mubr.bf16.gmra.mrb[0].mxu0 %v1272
        %v1412 = vpop.f32.mrb[0].mxu0
        %v1413 = vadd.f32 %v1305, %v1412
        %v1414 = vpop.f32.mrb[0].mxu0
        %v1415 = vpop.f32.mrb[0].mxu0
        %v1416 = vadd.f32 %v1305, %v1415
        %v1417 = vpop.f32.mrb[0].mxu0
        %1418 = vmatprep.mubr.bf16.mxu0 0
        %1419 = vmatmul.mubr.bf16.gmra.mrb[0].mxu0 %v1273
        %v1420 = vpop.f32.mrb[0].mxu0
        %v1421 = vadd.f32 %v1305, %v1420
        %v1422 = vpop.f32.mrb[0].mxu0
        %v1423 = vpop.f32.mrb[0].mxu0
        %v1424 = vadd.f32 %v1305, %v1423
        %v1425 = vpop.f32.mrb[0].mxu0
        %1426 = vmatprep.mubr.bf16.mxu0 0
        %1427 = vmatmul.mubr.bf16.gmra.mrb[0].mxu0 %v1274
        %v1428 = vpop.f32.mrb[0].mxu0
        %v1429 = vadd.f32 %v1305, %v1428
        %v1430 = vpop.f32.mrb[0].mxu0
        %v1431 = vpop.f32.mrb[0].mxu0
        %v1432 = vadd.f32 %v1305, %v1431
        %v1433 = vpop.f32.mrb[0].mxu0
        %1434 = vmatprep.mubr.bf16.mxu0 0
        %1435 = vmatmul.mubr.bf16.gmra.mrb[0].mxu0 %v1275
        %v1436 = vpop.f32.mrb[0].mxu0
        %v1437 = vadd.f32 %v1305, %v1436
        %v1438 = vpop.f32.mrb[0].mxu0
        %v1439 = vpop.f32.mrb[0].mxu0
        %v1440 = vadd.f32 %v1305, %v1439
        %v1441 = vpop.f32.mrb[0].mxu0
        %1442 = vmatprep.mubr.bf16.mxu0 0
        %1443 = vmatmul.mubr.bf16.gmra.mrb[0].mxu0 %v1276
        %v1444 = vpop.f32.mrb[0].mxu0
        %v1445 = vadd.f32 %v1305, %v1444
        %v1446 = vpop.f32.mrb[0].mxu0
        %v1447 = vpop.f32.mrb[0].mxu0
        %v1448 = vadd.f32 %v1305, %v1447
        %v1449 = vpop.f32.mrb[0].mxu0
        %1450 = vmatprep.mubr.bf16.mxu0 0
        %1451 = vmatmul.mubr.bf16.gmra.mrb[0].mxu0 %v1277
        %v1452 = vpop.f32.mrb[0].mxu0
        %v1453 = vadd.f32 %v1305, %v1452
        %v1454 = vpop.f32.mrb[0].mxu0
        %v1455 = vpop.f32.mrb[0].mxu0
        %v1456 = vadd.f32 %v1305, %v1455
        %v1457 = vpop.f32.mrb[0].mxu0
        %1458 = vmatprep.mubr.bf16.mxu0 0
        %1459 = vmatmul.mubr.bf16.gmra.mrb[0].mxu0 %v1278
        %v1460 = vpop.f32.mrb[0].mxu0
        %v1461 = vadd.f32 %v1305, %v1460
        %v1462 = vpop.f32.mrb[0].mxu0
        %v1463 = vpop.f32.mrb[0].mxu0
        %v1464 = vadd.f32 %v1305, %v1463
        %v1465 = vpop.f32.mrb[0].mxu0
        %1466 = vmatprep.mubr.bf16.mxu0 0
        %1467 = vmatmul.mubr.bf16.gmra.mrb[0].mxu0 %v1279
        %v1468 = vpop.f32.mrb[0].mxu0
        %v1469 = vadd.f32 %v1305, %v1468
        %v1470 = vpop.f32.mrb[0].mxu0
        %v1471 = vpop.f32.mrb[0].mxu0
        %v1472 = vadd.f32 %v1305, %v1471
        %v1473 = vpop.f32.mrb[0].mxu0
        %1474 = vmatprep.mubr.bf16.mxu0 0
        %1475 = vmatmul.mubr.bf16.gmra.mrb[0].mxu0 %v1280
        %v1476 = vpop.f32.mrb[0].mxu0
        %v1477 = vadd.f32 %v1305, %v1476
        %v1478 = vpop.f32.mrb[0].mxu0
        %v1479 = vpop.f32.mrb[0].mxu0
        %v1480 = vadd.f32 %v1305, %v1479
        %v1481 = vpop.f32.mrb[0].mxu0
        %1482 = vmatprep.mubr.bf16.mxu0 0
        %1483 = vmatmul.mubr.bf16.gmra.mrb[0].mxu0 %v1281
        %v1484 = vpop.f32.mrb[0].mxu0
        %v1485 = vadd.f32 %v1305, %v1484
        %v1486 = vpop.f32.mrb[0].mxu0
        %v1487 = vpop.f32.mrb[0].mxu0
        %v1488 = vadd.f32 %v1305, %v1487
        %v1489 = vpop.f32.mrb[0].mxu0
        %1490 = vmatprep.mubr.bf16.mxu0 0
        %1491 = vmatmul.mubr.bf16.gmra.mrb[0].mxu0 %v1282
        %v1492 = vpop.f32.mrb[0].mxu0
        %v1493 = vadd.f32 %v1305, %v1492
        %v1494 = vpop.f32.mrb[0].mxu0
        %v1495 = vpop.f32.mrb[0].mxu0
        %v1496 = vadd.f32 %v1305, %v1495
        %v1497 = vpop.f32.mrb[0].mxu0
        %1498 = vmatprep.mubr.bf16.mxu0 0
        %1499 = vmatmul.mubr.bf16.gmra.mrb[0].mxu0 %v1283
        %v1500 = vpop.f32.mrb[0].mxu0
        %v1501 = vadd.f32 %v1305, %v1500
        %v1502 = vpop.f32.mrb[0].mxu0
        %v1503 = vpop.f32.mrb[0].mxu0
        %v1504 = vadd.f32 %v1305, %v1503
        %v1505 = vpop.f32.mrb[0].mxu0
        %1506 = vmatprep.mubr.bf16.mxu0 0
        %1507 = vmatmul.mubr.bf16.gmra.mrb[0].mxu0 %v1284
        %v1508 = vpop.f32.mrb[0].mxu0
        %v1509 = vadd.f32 %v1305, %v1508
        %v1510 = vpop.f32.mrb[0].mxu0
        %v1511 = vpop.f32.mrb[0].mxu0
        %v1512 = vadd.f32 %v1305, %v1511
        %v1513 = vpop.f32.mrb[0].mxu0
        %1514 = vdwg.mxu0
        %v1515 = vlaneseq
        %v1516 = vshrl.u32 %v1515, 7
        %v1517 = vsub.s32 1, %v1516
        %v1518 = vrot.slane %v1301, %v1517
        %v1519 = vmul.f32 %v1389, %v1518
        %v1520 = vmul.f32 %v1392, %v1518
        %v1521 = vmul.f32 %v1397, %v1518
        %v1522 = vmul.f32 %v1400, %v1518
        %v1523 = vmul.f32 %v1405, %v1518
        %v1524 = vmul.f32 %v1408, %v1518
        %v1525 = vmul.f32 %v1413, %v1518
        %v1526 = vmul.f32 %v1416, %v1518
        %v1527 = vmul.f32 %v1421, %v1518
        %v1528 = vmul.f32 %v1424, %v1518
        %v1529 = vmul.f32 %v1429, %v1518
        %v1530 = vmul.f32 %v1432, %v1518
        %v1531 = vmul.f32 %v1437, %v1518
        %v1532 = vmul.f32 %v1440, %v1518
        %v1533 = vmul.f32 %v1445, %v1518
        %v1534 = vmul.f32 %v1448, %v1518
        %v1535 = vmul.f32 %v1453, %v1518
        %v1536 = vmul.f32 %v1456, %v1518
        %v1537 = vmul.f32 %v1461, %v1518
        %v1538 = vmul.f32 %v1464, %v1518
        %v1539 = vmul.f32 %v1469, %v1518
        %v1540 = vmul.f32 %v1472, %v1518
        %v1541 = vmul.f32 %v1477, %v1518
        %v1542 = vmul.f32 %v1480, %v1518
        %v1543 = vmul.f32 %v1485, %v1518
        %v1544 = vmul.f32 %v1488, %v1518
        %v1545 = vmul.f32 %v1493, %v1518
        %v1546 = vmul.f32 %v1496, %v1518
        %v1547 = vmul.f32 %v1501, %v1518
        %v1548 = vmul.f32 %v1504, %v1518
        %v1549 = vmul.f32 %v1509, %v1518
        %v1550 = vmul.f32 %v1512, %v1518
        %v1551 = vlaneseq
        %v1552 = vshrl.u32 %v1551, 7
        %v1553 = vsub.s32 2, %v1552
        %v1554 = vrot.slane %v1301, %v1553
        %v1555 = vadd.f32 %v1519, %v1554
        %v1556 = vadd.f32 %v1520, %v1554
        %v1557 = vadd.f32 %v1521, %v1554
        %v1558 = vadd.f32 %v1522, %v1554
        %v1559 = vadd.f32 %v1523, %v1554
        %v1560 = vadd.f32 %v1524, %v1554
        %v1561 = vadd.f32 %v1525, %v1554
        %v1562 = vadd.f32 %v1526, %v1554
        %v1563 = vadd.f32 %v1527, %v1554
        %v1564 = vadd.f32 %v1528, %v1554
        %v1565 = vadd.f32 %v1529, %v1554
        %v1566 = vadd.f32 %v1530, %v1554
        %v1567 = vadd.f32 %v1531, %v1554
        %v1568 = vadd.f32 %v1532, %v1554
        %v1569 = vadd.f32 %v1533, %v1554
        %v1570 = vadd.f32 %v1534, %v1554
        %v1571 = vadd.f32 %v1535, %v1554
        %v1572 = vadd.f32 %v1536, %v1554
        %v1573 = vadd.f32 %v1537, %v1554
        %v1574 = vadd.f32 %v1538, %v1554
        %v1575 = vadd.f32 %v1539, %v1554
        %v1576 = vadd.f32 %v1540, %v1554
        %v1577 = vadd.f32 %v1541, %v1554
        %v1578 = vadd.f32 %v1542, %v1554
        %v1579 = vadd.f32 %v1543, %v1554
        %v1580 = vadd.f32 %v1544, %v1554
        %v1581 = vadd.f32 %v1545, %v1554
        %v1582 = vadd.f32 %v1546, %v1554
        %v1583 = vadd.f32 %v1547, %v1554
        %v1584 = vadd.f32 %v1548, %v1554
        %v1585 = vadd.f32 %v1549, %v1554
        %v1586 = vadd.f32 %v1550, %v1554
        %v1587 = vmax.f32 %v1555, 0.0
        %v1588 = vmax.f32 %v1556, 0.0
        %v1589 = vmax.f32 %v1557, 0.0
        %v1590 = vmax.f32 %v1558, 0.0
        %v1591 = vmax.f32 %v1559, 0.0
        %v1592 = vmax.f32 %v1560, 0.0
        %v1593 = vmax.f32 %v1561, 0.0
        %v1594 = vmax.f32 %v1562, 0.0
        %v1595 = vmax.f32 %v1563, 0.0
        %v1596 = vmax.f32 %v1564, 0.0
        %v1597 = vmax.f32 %v1565, 0.0
        %v1598 = vmax.f32 %v1566, 0.0
        %v1599 = vmax.f32 %v1567, 0.0
        %v1600 = vmax.f32 %v1568, 0.0
        %v1601 = vmax.f32 %v1569, 0.0
        %v1602 = vmax.f32 %v1570, 0.0
        %v1603 = vmax.f32 %v1571, 0.0
        %v1604 = vmax.f32 %v1572, 0.0
        %v1605 = vmax.f32 %v1573, 0.0
        %v1606 = vmax.f32 %v1574, 0.0
        %v1607 = vmax.f32 %v1575, 0.0
        %v1608 = vmax.f32 %v1576, 0.0
        %v1609 = vmax.f32 %v1577, 0.0
        %v1610 = vmax.f32 %v1578, 0.0
        %v1611 = vmax.f32 %v1579, 0.0
        %v1612 = vmax.f32 %v1580, 0.0
        %v1613 = vmax.f32 %v1581, 0.0
        %v1614 = vmax.f32 %v1582, 0.0
        %v1615 = vmax.f32 %v1583, 0.0
        %v1616 = vmax.f32 %v1584, 0.0
        %v1617 = vmax.f32 %v1585, 0.0
        %v1618 = vmax.f32 %v1586, 0.0
        %v1619 = vpack.c.bf16 %v1588, %v1587
        %v1620 = vpack.c.bf16 %v1590, %v1589
        %v1621 = vpack.c.bf16 %v1592, %v1591
        %v1622 = vpack.c.bf16 %v1594, %v1593
        %v1623 = vpack.c.bf16 %v1596, %v1595
        %v1624 = vpack.c.bf16 %v1598, %v1597
        %v1625 = vpack.c.bf16 %v1600, %v1599
        %v1626 = vpack.c.bf16 %v1602, %v1601
        %v1627 = vpack.c.bf16 %v1604, %v1603
        %v1628 = vpack.c.bf16 %v1606, %v1605
        %v1629 = vpack.c.bf16 %v1608, %v1607
        %v1630 = vpack.c.bf16 %v1610, %v1609
        %v1631 = vpack.c.bf16 %v1612, %v1611
        %v1632 = vpack.c.bf16 %v1614, %v1613
        %v1633 = vpack.c.bf16 %v1616, %v1615
        %v1634 = vpack.c.bf16 %v1618, %v1617
        %v1635 = vld [vmem:[#allocation11] sm:$0xf]
        %v1636 = vld [vmem:[#allocation11 + $0x4] sm:$0xf]
        %v1637 = vld [vmem:[#allocation11 + $0x8] sm:$0xf]
        %v1638 = vld [vmem:[#allocation11 + $0xc] sm:$0xf]
        %v1639 = vld [vmem:[#allocation11 + $0x10] sm:$0xf]
        %v1640 = vld [vmem:[#allocation11 + $0x14] sm:$0xf]
        %v1641 = vld [vmem:[#allocation11 + $0x18] sm:$0xf]
        %v1642 = vld [vmem:[#allocation11 + $0x1c] sm:$0xf]
        %v1643 = vld [vmem:[#allocation11 + $0x20] sm:$0xf]
        %v1644 = vld [vmem:[#allocation11 + $0x24] sm:$0xf]
        %v1645 = vld [vmem:[#allocation11 + $0x28] sm:$0xf]
        %v1646 = vld [vmem:[#allocation11 + $0x2c] sm:$0xf]
        %v1647 = vld [vmem:[#allocation11 + $0x30] sm:$0xf]
        %v1648 = vld [vmem:[#allocation11 + $0x34] sm:$0xf]
        %v1649 = vld [vmem:[#allocation11 + $0x38] sm:$0xf]
        %v1650 = vld [vmem:[#allocation11 + $0x3c] sm:$0xf]
        %v1651 = vld [vmem:[%s7] sm:$0x7]
        %v1652 = vlaneseq
        %v1653 = vshrl.u32 %v1652, 7
        %v1654 = vsub.s32 0, %v1653
        %v1655 = vrot.slane %v1651, %v1654
        %v1672 = vunpack.c.l.b16 %v1635
        %v1673 = vunpack.c.l.b16 %v1636
        %v1674 = vunpack.c.l.b16 %v1637
        %v1675 = vunpack.c.l.b16 %v1638
        %v1676 = vunpack.c.l.b16 %v1639
        %v1677 = vunpack.c.l.b16 %v1640
        %v1678 = vunpack.c.l.b16 %v1641
        %v1679 = vunpack.c.l.b16 %v1642
        %v1680 = vunpack.c.l.b16 %v1643
        %v1681 = vunpack.c.l.b16 %v1644
        %v1682 = vunpack.c.l.b16 %v1645
        %v1683 = vunpack.c.l.b16 %v1646
        %v1684 = vunpack.c.l.b16 %v1647
        %v1685 = vunpack.c.l.b16 %v1648
        %v1686 = vunpack.c.l.b16 %v1649
        %v1687 = vunpack.c.l.b16 %v1650
        %v1688 = vpack.c.b16 %v1673, %v1672
        %v1689 = vpack.c.b16 %v1675, %v1674
        %v1690 = vpack.c.b16 %v1677, %v1676
        %v1691 = vpack.c.b16 %v1679, %v1678
        %v1692 = vpack.c.b16 %v1681, %v1680
        %v1693 = vpack.c.b16 %v1683, %v1682
        %v1694 = vpack.c.b16 %v1685, %v1684
        %v1695 = vpack.c.b16 %v1687, %v1686
        %1704 = vmatprep.subr.bf16.mxu0 0
        %1705 = vmatpush1.bf16.msra.mxu0 %v1688
        %1706 = vmatprep.subr.bf16.mxu0 0
        %1707 = vmatpush1.bf16.msra.mxu0 %v1689
        %1708 = vmatprep.subr.bf16.mxu0 0
        %1709 = vmatpush1.bf16.msra.mxu0 %v1690
        %1710 = vmatprep.subr.bf16.mxu0 0
        %1711 = vmatpush1.bf16.msra.mxu0 %v1691
        %1712 = vmatprep.subr.bf16.mxu0 0
        %1713 = vmatpush1.bf16.msra.mxu0 %v1692
        %1714 = vmatprep.subr.bf16.mxu0 0
        %1715 = vmatpush1.bf16.msra.mxu0 %v1693
        %1716 = vmatprep.subr.bf16.mxu0 0
        %1717 = vmatpush1.bf16.msra.mxu0 %v1694
        %1718 = vmatprep.subr.bf16.mxu0 0
        %1719 = vmatpush1.bf16.msra.mxu0 %v1695
        %1720 = vmatprep.subr.bf16.mxu0 0
        %1721 = vmatpush1.bf16.msra.mxu0 0
        %1722 = vmatprep.subr.bf16.mxu0 0
        %1723 = vmatpush1.bf16.msra.mxu0 0
        %1724 = vmatprep.subr.bf16.mxu0 0
        %1725 = vmatpush1.bf16.msra.mxu0 0
        %1726 = vmatprep.subr.bf16.mxu0 0
        %1727 = vmatpush1.bf16.msra.mxu0 0
        %1728 = vmatprep.subr.bf16.mxu0 0
        %1729 = vmatpush1.bf16.msra.mxu0 0
        %1730 = vmatprep.subr.bf16.mxu0 0
        %1731 = vmatpush1.bf16.msra.mxu0 0
        %1732 = vmatprep.subr.bf16.mxu0 0
        %1733 = vmatpush1.bf16.msra.mxu0 0
        %1734 = vmatprep.subr.bf16.mxu0 0
        %1735 = vmatpush1.bf16.msra.mxu0 0
        %1736 = vmatprep.mubr.bf16.mxu0 0
        %1737 = vmatmul.mubr.bf16.gmra.mrb[0].mxu0 %v1619
        %v1738 = vpop.f32.mrb[0].mxu0
        %v1739 = vadd.f32 %v1655, %v1738
        %v1740 = vpop.f32.mrb[0].mxu0
        %v1741 = vpop.f32.mrb[0].mxu0
        %v1742 = vadd.f32 %v1655, %v1741
        %v1743 = vpop.f32.mrb[0].mxu0
        %1744 = vmatprep.mubr.bf16.mxu0 0
        %1745 = vmatmul.mubr.bf16.gmra.mrb[0].mxu0 %v1620
        %v1746 = vpop.f32.mrb[0].mxu0
        %v1747 = vadd.f32 %v1655, %v1746
        %v1748 = vpop.f32.mrb[0].mxu0
        %v1749 = vpop.f32.mrb[0].mxu0
        %v1750 = vadd.f32 %v1655, %v1749
        %v1751 = vpop.f32.mrb[0].mxu0
        %1752 = vmatprep.mubr.bf16.mxu0 0
        %1753 = vmatmul.mubr.bf16.gmra.mrb[0].mxu0 %v1621
        %v1754 = vpop.f32.mrb[0].mxu0
        %v1755 = vadd.f32 %v1655, %v1754
        %v1756 = vpop.f32.mrb[0].mxu0
        %v1757 = vpop.f32.mrb[0].mxu0
        %v1758 = vadd.f32 %v1655, %v1757
        %v1759 = vpop.f32.mrb[0].mxu0
        %1760 = vmatprep.mubr.bf16.mxu0 0
        %1761 = vmatmul.mubr.bf16.gmra.mrb[0].mxu0 %v1622
        %v1762 = vpop.f32.mrb[0].mxu0
        %v1763 = vadd.f32 %v1655, %v1762
        %v1764 = vpop.f32.mrb[0].mxu0
        %v1765 = vpop.f32.mrb[0].mxu0
        %v1766 = vadd.f32 %v1655, %v1765
        %v1767 = vpop.f32.mrb[0].mxu0
        %1768 = vmatprep.mubr.bf16.mxu0 0
        %1769 = vmatmul.mubr.bf16.gmra.mrb[0].mxu0 %v1623
        %v1770 = vpop.f32.mrb[0].mxu0
        %v1771 = vadd.f32 %v1655, %v1770
        %v1772 = vpop.f32.mrb[0].mxu0
        %v1773 = vpop.f32.mrb[0].mxu0
        %v1774 = vadd.f32 %v1655, %v1773
        %v1775 = vpop.f32.mrb[0].mxu0
        %1776 = vmatprep.mubr.bf16.mxu0 0
        %1777 = vmatmul.mubr.bf16.gmra.mrb[0].mxu0 %v1624
        %v1778 = vpop.f32.mrb[0].mxu0
        %v1779 = vadd.f32 %v1655, %v1778
        %v1780 = vpop.f32.mrb[0].mxu0
        %v1781 = vpop.f32.mrb[0].mxu0
        %v1782 = vadd.f32 %v1655, %v1781
        %v1783 = vpop.f32.mrb[0].mxu0
        %1784 = vmatprep.mubr.bf16.mxu0 0
        %1785 = vmatmul.mubr.bf16.gmra.mrb[0].mxu0 %v1625
        %v1786 = vpop.f32.mrb[0].mxu0
        %v1787 = vadd.f32 %v1655, %v1786
        %v1788 = vpop.f32.mrb[0].mxu0
        %v1789 = vpop.f32.mrb[0].mxu0
        %v1790 = vadd.f32 %v1655, %v1789
        %v1791 = vpop.f32.mrb[0].mxu0
        %1792 = vmatprep.mubr.bf16.mxu0 0
        %1793 = vmatmul.mubr.bf16.gmra.mrb[0].mxu0 %v1626
        %v1794 = vpop.f32.mrb[0].mxu0
        %v1795 = vadd.f32 %v1655, %v1794
        %v1796 = vpop.f32.mrb[0].mxu0
        %v1797 = vpop.f32.mrb[0].mxu0
        %v1798 = vadd.f32 %v1655, %v1797
        %v1799 = vpop.f32.mrb[0].mxu0
        %1800 = vmatprep.mubr.bf16.mxu0 0
        %1801 = vmatmul.mubr.bf16.gmra.mrb[0].mxu0 %v1627
        %v1802 = vpop.f32.mrb[0].mxu0
        %v1803 = vadd.f32 %v1655, %v1802
        %v1804 = vpop.f32.mrb[0].mxu0
        %v1805 = vpop.f32.mrb[0].mxu0
        %v1806 = vadd.f32 %v1655, %v1805
        %v1807 = vpop.f32.mrb[0].mxu0
        %1808 = vmatprep.mubr.bf16.mxu0 0
        %1809 = vmatmul.mubr.bf16.gmra.mrb[0].mxu0 %v1628
        %v1810 = vpop.f32.mrb[0].mxu0
        %v1811 = vadd.f32 %v1655, %v1810
        %v1812 = vpop.f32.mrb[0].mxu0
        %v1813 = vpop.f32.mrb[0].mxu0
        %v1814 = vadd.f32 %v1655, %v1813
        %v1815 = vpop.f32.mrb[0].mxu0
        %1816 = vmatprep.mubr.bf16.mxu0 0
        %1817 = vmatmul.mubr.bf16.gmra.mrb[0].mxu0 %v1629
        %v1818 = vpop.f32.mrb[0].mxu0
        %v1819 = vadd.f32 %v1655, %v1818
        %v1820 = vpop.f32.mrb[0].mxu0
        %v1821 = vpop.f32.mrb[0].mxu0
        %v1822 = vadd.f32 %v1655, %v1821
        %v1823 = vpop.f32.mrb[0].mxu0
        %1824 = vmatprep.mubr.bf16.mxu0 0
        %1825 = vmatmul.mubr.bf16.gmra.mrb[0].mxu0 %v1630
        %v1826 = vpop.f32.mrb[0].mxu0
        %v1827 = vadd.f32 %v1655, %v1826
        %v1828 = vpop.f32.mrb[0].mxu0
        %v1829 = vpop.f32.mrb[0].mxu0
        %v1830 = vadd.f32 %v1655, %v1829
        %v1831 = vpop.f32.mrb[0].mxu0
        %1832 = vmatprep.mubr.bf16.mxu0 0
        %1833 = vmatmul.mubr.bf16.gmra.mrb[0].mxu0 %v1631
        %v1834 = vpop.f32.mrb[0].mxu0
        %v1835 = vadd.f32 %v1655, %v1834
        %v1836 = vpop.f32.mrb[0].mxu0
        %v1837 = vpop.f32.mrb[0].mxu0
        %v1838 = vadd.f32 %v1655, %v1837
        %v1839 = vpop.f32.mrb[0].mxu0
        %1840 = vmatprep.mubr.bf16.mxu0 0
        %1841 = vmatmul.mubr.bf16.gmra.mrb[0].mxu0 %v1632
        %v1842 = vpop.f32.mrb[0].mxu0
        %v1843 = vadd.f32 %v1655, %v1842
        %v1844 = vpop.f32.mrb[0].mxu0
        %v1845 = vpop.f32.mrb[0].mxu0
        %v1846 = vadd.f32 %v1655, %v1845
        %v1847 = vpop.f32.mrb[0].mxu0
        %1848 = vmatprep.mubr.bf16.mxu0 0
        %1849 = vmatmul.mubr.bf16.gmra.mrb[0].mxu0 %v1633
        %v1850 = vpop.f32.mrb[0].mxu0
        %v1851 = vadd.f32 %v1655, %v1850
        %v1852 = vpop.f32.mrb[0].mxu0
        %v1853 = vpop.f32.mrb[0].mxu0
        %v1854 = vadd.f32 %v1655, %v1853
        %v1855 = vpop.f32.mrb[0].mxu0
        %1856 = vmatprep.mubr.bf16.mxu0 0
        %1857 = vmatmul.mubr.bf16.gmra.mrb[0].mxu0 %v1634
        %v1858 = vpop.f32.mrb[0].mxu0
        %v1859 = vadd.f32 %v1655, %v1858
        %v1860 = vpop.f32.mrb[0].mxu0
        %v1861 = vpop.f32.mrb[0].mxu0
        %v1862 = vadd.f32 %v1655, %v1861
        %v1863 = vpop.f32.mrb[0].mxu0
        %1864 = vdwg.mxu0
        %v1865 = vadd.f32 %v1739, %v1096
        %v1866 = vadd.f32 %v1742, %v1097
        %v1867 = vadd.f32 %v1747, %v1098
        %v1868 = vadd.f32 %v1750, %v1099
        %v1869 = vadd.f32 %v1755, %v1100
        %v1870 = vadd.f32 %v1758, %v1101
        %v1871 = vadd.f32 %v1763, %v1102
        %v1872 = vadd.f32 %v1766, %v1103
        %v1873 = vadd.f32 %v1771, %v1104
        %v1874 = vadd.f32 %v1774, %v1105
        %v1875 = vadd.f32 %v1779, %v1106
        %v1876 = vadd.f32 %v1782, %v1107
        %v1877 = vadd.f32 %v1787, %v1108
        %v1878 = vadd.f32 %v1790, %v1109
        %v1879 = vadd.f32 %v1795, %v1110
        %v1880 = vadd.f32 %v1798, %v1111
        %v1881 = vadd.f32 %v1803, %v1112
        %v1882 = vadd.f32 %v1806, %v1113
        %v1883 = vadd.f32 %v1811, %v1114
        %v1884 = vadd.f32 %v1814, %v1115
        %v1885 = vadd.f32 %v1819, %v1116
        %v1886 = vadd.f32 %v1822, %v1117
        %v1887 = vadd.f32 %v1827, %v1118
        %v1888 = vadd.f32 %v1830, %v1119
        %v1889 = vadd.f32 %v1835, %v1120
        %v1890 = vadd.f32 %v1838, %v1121
        %v1891 = vadd.f32 %v1843, %v1122
        %v1892 = vadd.f32 %v1846, %v1123
        %v1893 = vadd.f32 %v1851, %v1124
        %v1894 = vadd.f32 %v1854, %v1125
        %v1895 = vadd.f32 %v1859, %v1126
        %v1896 = vadd.f32 %v1862, %v1127
        %v1897 = vlaneseq
        %v1898 = vshrl.u32 %v1897, 7
        %v1899 = vsub.s32 1, %v1898
        %v1900 = vrot.slane %v1651, %v1899
        %v1901 = vmul.f32 %v1865, %v1900
        %v1902 = vmul.f32 %v1866, %v1900
        %v1903 = vmul.f32 %v1867, %v1900
        %v1904 = vmul.f32 %v1868, %v1900
        %v1905 = vmul.f32 %v1869, %v1900
        %v1906 = vmul.f32 %v1870, %v1900
        %v1907 = vmul.f32 %v1871, %v1900
        %v1908 = vmul.f32 %v1872, %v1900
        %v1909 = vmul.f32 %v1873, %v1900
        %v1910 = vmul.f32 %v1874, %v1900
        %v1911 = vmul.f32 %v1875, %v1900
        %v1912 = vmul.f32 %v1876, %v1900
        %v1913 = vmul.f32 %v1877, %v1900
        %v1914 = vmul.f32 %v1878, %v1900
        %v1915 = vmul.f32 %v1879, %v1900
        %v1916 = vmul.f32 %v1880, %v1900
        %v1917 = vmul.f32 %v1881, %v1900
        %v1918 = vmul.f32 %v1882, %v1900
        %v1919 = vmul.f32 %v1883, %v1900
        %v1920 = vmul.f32 %v1884, %v1900
        %v1921 = vmul.f32 %v1885, %v1900
        %v1922 = vmul.f32 %v1886, %v1900
        %v1923 = vmul.f32 %v1887, %v1900
        %v1924 = vmul.f32 %v1888, %v1900
        %v1925 = vmul.f32 %v1889, %v1900
        %v1926 = vmul.f32 %v1890, %v1900
        %v1927 = vmul.f32 %v1891, %v1900
        %v1928 = vmul.f32 %v1892, %v1900
        %v1929 = vmul.f32 %v1893, %v1900
        %v1930 = vmul.f32 %v1894, %v1900
        %v1931 = vmul.f32 %v1895, %v1900
        %v1932 = vmul.f32 %v1896, %v1900
        %v1933 = vlaneseq
        %v1934 = vshrl.u32 %v1933, 7
        %v1935 = vsub.s32 2, %v1934
        %v1936 = vrot.slane %v1651, %v1935
        %v1937 = vadd.f32 %v1901, %v1936
        %v1938 = vadd.f32 %v1902, %v1936
        %v1939 = vadd.f32 %v1903, %v1936
        %v1940 = vadd.f32 %v1904, %v1936
        %v1941 = vadd.f32 %v1905, %v1936
        %v1942 = vadd.f32 %v1906, %v1936
        %v1943 = vadd.f32 %v1907, %v1936
        %v1944 = vadd.f32 %v1908, %v1936
        %v1945 = vadd.f32 %v1909, %v1936
        %v1946 = vadd.f32 %v1910, %v1936
        %v1947 = vadd.f32 %v1911, %v1936
        %v1948 = vadd.f32 %v1912, %v1936
        %v1949 = vadd.f32 %v1913, %v1936
        %v1950 = vadd.f32 %v1914, %v1936
        %v1951 = vadd.f32 %v1915, %v1936
        %v1952 = vadd.f32 %v1916, %v1936
        %v1953 = vadd.f32 %v1917, %v1936
        %v1954 = vadd.f32 %v1918, %v1936
        %v1955 = vadd.f32 %v1919, %v1936
        %v1956 = vadd.f32 %v1920, %v1936
        %v1957 = vadd.f32 %v1921, %v1936
        %v1958 = vadd.f32 %v1922, %v1936
        %v1959 = vadd.f32 %v1923, %v1936
        %v1960 = vadd.f32 %v1924, %v1936
        %v1961 = vadd.f32 %v1925, %v1936
        %v1962 = vadd.f32 %v1926, %v1936
        %v1963 = vadd.f32 %v1927, %v1936
        %v1964 = vadd.f32 %v1928, %v1936
        %v1965 = vadd.f32 %v1929, %v1936
        %v1966 = vadd.f32 %v1930, %v1936
        %v1967 = vadd.f32 %v1931, %v1936
        %v1968 = vadd.f32 %v1932, %v1936
        %v1969 = vmax.f32 %v1937, 0.0
        %v1970 = vmax.f32 %v1938, 0.0
        %v1971 = vmax.f32 %v1939, 0.0
        %v1972 = vmax.f32 %v1940, 0.0
        %v1973 = vmax.f32 %v1941, 0.0
        %v1974 = vmax.f32 %v1942, 0.0
        %v1975 = vmax.f32 %v1943, 0.0
        %v1976 = vmax.f32 %v1944, 0.0
        %v1977 = vmax.f32 %v1945, 0.0
        %v1978 = vmax.f32 %v1946, 0.0
        %v1979 = vmax.f32 %v1947, 0.0
        %v1980 = vmax.f32 %v1948, 0.0
        %v1981 = vmax.f32 %v1949, 0.0
        %v1982 = vmax.f32 %v1950, 0.0
        %v1983 = vmax.f32 %v1951, 0.0
        %v1984 = vmax.f32 %v1952, 0.0
        %v1985 = vmax.f32 %v1953, 0.0
        %v1986 = vmax.f32 %v1954, 0.0
        %v1987 = vmax.f32 %v1955, 0.0
        %v1988 = vmax.f32 %v1956, 0.0
        %v1989 = vmax.f32 %v1957, 0.0
        %v1990 = vmax.f32 %v1958, 0.0
        %v1991 = vmax.f32 %v1959, 0.0
        %v1992 = vmax.f32 %v1960, 0.0
        %v1993 = vmax.f32 %v1961, 0.0
        %v1994 = vmax.f32 %v1962, 0.0
        %v1995 = vmax.f32 %v1963, 0.0
        %v1996 = vmax.f32 %v1964, 0.0
        %v1997 = vmax.f32 %v1965, 0.0
        %v1998 = vmax.f32 %v1966, 0.0
        %v1999 = vmax.f32 %v1967, 0.0
        %v2000 = vmax.f32 %v1968, 0.0
        %v2001 = vpack.c.bf16 %v1970, %v1969
        %v2002 = vpack.c.bf16 %v1972, %v1971
        %v2003 = vpack.c.bf16 %v1974, %v1973
        %v2004 = vpack.c.bf16 %v1976, %v1975
        %v2005 = vpack.c.bf16 %v1978, %v1977
        %v2006 = vpack.c.bf16 %v1980, %v1979
        %v2007 = vpack.c.bf16 %v1982, %v1981
        %v2008 = vpack.c.bf16 %v1984, %v1983
        %v2009 = vpack.c.bf16 %v1986, %v1985
        %v2010 = vpack.c.bf16 %v1988, %v1987
        %v2011 = vpack.c.bf16 %v1990, %v1989
        %v2012 = vpack.c.bf16 %v1992, %v1991
        %v2013 = vpack.c.bf16 %v1994, %v1993
        %v2014 = vpack.c.bf16 %v1996, %v1995
        %v2015 = vpack.c.bf16 %v1998, %v1997
        %v2016 = vpack.c.bf16 %v2000, %v1999
        %v2017 = vld [vmem:[#allocation12] sm:$0xf]
        %v2018 = vld [vmem:[#allocation12 + $0x4] sm:$0xf]
        %v2019 = vld [vmem:[#allocation12 + $0x8] sm:$0xf]
        %v2020 = vld [vmem:[#allocation12 + $0xc] sm:$0xf]
        %v2021 = vld [vmem:[#allocation12 + $0x10] sm:$0xf]
        %v2022 = vld [vmem:[#allocation12 + $0x14] sm:$0xf]
        %v2023 = vld [vmem:[#allocation12 + $0x18] sm:$0xf]
        %v2024 = vld [vmem:[#allocation12 + $0x1c] sm:$0xf]
        %v2025 = vld [vmem:[#allocation12 + $0x20] sm:$0xf]
        %v2026 = vld [vmem:[#allocation12 + $0x24] sm:$0xf]
        %v2027 = vld [vmem:[#allocation12 + $0x28] sm:$0xf]
        %v2028 = vld [vmem:[#allocation12 + $0x2c] sm:$0xf]
        %v2029 = vld [vmem:[#allocation12 + $0x30] sm:$0xf]
        %v2030 = vld [vmem:[#allocation12 + $0x34] sm:$0xf]
        %v2031 = vld [vmem:[#allocation12 + $0x38] sm:$0xf]
        %v2032 = vld [vmem:[#allocation12 + $0x3c] sm:$0xf]
        %v2033 = vld [vmem:[%s9] sm:$0x7]
        %v2034 = vlaneseq
        %v2035 = vshrl.u32 %v2034, 7
        %v2036 = vsub.s32 0, %v2035
        %v2037 = vrot.slane %v2033, %v2036
        %v2054 = vunpack.c.l.b16 %v2017
        %v2055 = vunpack.c.l.b16 %v2018
        %v2056 = vunpack.c.l.b16 %v2019
        %v2057 = vunpack.c.l.b16 %v2020
        %v2058 = vunpack.c.l.b16 %v2021
        %v2059 = vunpack.c.l.b16 %v2022
        %v2060 = vunpack.c.l.b16 %v2023
        %v2061 = vunpack.c.l.b16 %v2024
        %v2062 = vunpack.c.l.b16 %v2025
        %v2063 = vunpack.c.l.b16 %v2026
        %v2064 = vunpack.c.l.b16 %v2027
        %v2065 = vunpack.c.l.b16 %v2028
        %v2066 = vunpack.c.l.b16 %v2029
        %v2067 = vunpack.c.l.b16 %v2030
        %v2068 = vunpack.c.l.b16 %v2031
        %v2069 = vunpack.c.l.b16 %v2032
        %v2070 = vpack.c.b16 %v2055, %v2054
        %v2071 = vpack.c.b16 %v2057, %v2056
        %v2072 = vpack.c.b16 %v2059, %v2058
        %v2073 = vpack.c.b16 %v2061, %v2060
        %v2074 = vpack.c.b16 %v2063, %v2062
        %v2075 = vpack.c.b16 %v2065, %v2064
        %v2076 = vpack.c.b16 %v2067, %v2066
        %v2077 = vpack.c.b16 %v2069, %v2068
        %2086 = vmatprep.subr.bf16.mxu0 0
        %2087 = vmatpush1.bf16.msra.mxu0 %v2070
        %2088 = vmatprep.subr.bf16.mxu0 0
        %2089 = vmatpush1.bf16.msra.mxu0 %v2071
        %2090 = vmatprep.subr.bf16.mxu0 0
        %2091 = vmatpush1.bf16.msra.mxu0 %v2072
        %2092 = vmatprep.subr.bf16.mxu0 0
        %2093 = vmatpush1.bf16.msra.mxu0 %v2073
        %2094 = vmatprep.subr.bf16.mxu0 0
        %2095 = vmatpush1.bf16.msra.mxu0 %v2074
        %2096 = vmatprep.subr.bf16.mxu0 0
        %2097 = vmatpush1.bf16.msra.mxu0 %v2075
        %2098 = vmatprep.subr.bf16.mxu0 0
        %2099 = vmatpush1.bf16.msra.mxu0 %v2076
        %2100 = vmatprep.subr.bf16.mxu0 0
        %2101 = vmatpush1.bf16.msra.mxu0 %v2077
        %2102 = vmatprep.subr.bf16.mxu0 0
        %2103 = vmatpush1.bf16.msra.mxu0 0
        %2104 = vmatprep.subr.bf16.mxu0 0
        %2105 = vmatpush1.bf16.msra.mxu0 0
        %2106 = vmatprep.subr.bf16.mxu0 0
        %2107 = vmatpush1.bf16.msra.mxu0 0
        %2108 = vmatprep.subr.bf16.mxu0 0
        %2109 = vmatpush1.bf16.msra.mxu0 0
        %2110 = vmatprep.subr.bf16.mxu0 0
        %2111 = vmatpush1.bf16.msra.mxu0 0
        %2112 = vmatprep.subr.bf16.mxu0 0
        %2113 = vmatpush1.bf16.msra.mxu0 0
        %2114 = vmatprep.subr.bf16.mxu0 0
        %2115 = vmatpush1.bf16.msra.mxu0 0
        %2116 = vmatprep.subr.bf16.mxu0 0
        %2117 = vmatpush1.bf16.msra.mxu0 0
        %2118 = vmatprep.mubr.bf16.mxu0 0
        %2119 = vmatmul.mubr.bf16.gmra.mrb[0].mxu0 %v2001
        %v2120 = vpop.f32.mrb[0].mxu0
        %v2121 = vadd.f32 %v2037, %v2120
        %v2122 = vpop.f32.mrb[0].mxu0
        %v2123 = vpop.f32.mrb[0].mxu0
        %v2124 = vadd.f32 %v2037, %v2123
        %v2125 = vpop.f32.mrb[0].mxu0
        %2126 = vmatprep.mubr.bf16.mxu0 0
        %2127 = vmatmul.mubr.bf16.gmra.mrb[0].mxu0 %v2002
        %v2128 = vpop.f32.mrb[0].mxu0
        %v2129 = vadd.f32 %v2037, %v2128
        %v2130 = vpop.f32.mrb[0].mxu0
        %v2131 = vpop.f32.mrb[0].mxu0
        %v2132 = vadd.f32 %v2037, %v2131
        %v2133 = vpop.f32.mrb[0].mxu0
        %2134 = vmatprep.mubr.bf16.mxu0 0
        %2135 = vmatmul.mubr.bf16.gmra.mrb[0].mxu0 %v2003
        %v2136 = vpop.f32.mrb[0].mxu0
        %v2137 = vadd.f32 %v2037, %v2136
        %v2138 = vpop.f32.mrb[0].mxu0
        %v2139 = vpop.f32.mrb[0].mxu0
        %v2140 = vadd.f32 %v2037, %v2139
        %v2141 = vpop.f32.mrb[0].mxu0
        %2142 = vmatprep.mubr.bf16.mxu0 0
        %2143 = vmatmul.mubr.bf16.gmra.mrb[0].mxu0 %v2004
        %v2144 = vpop.f32.mrb[0].mxu0
        %v2145 = vadd.f32 %v2037, %v2144
        %v2146 = vpop.f32.mrb[0].mxu0
        %v2147 = vpop.f32.mrb[0].mxu0
        %v2148 = vadd.f32 %v2037, %v2147
        %v2149 = vpop.f32.mrb[0].mxu0
        %2150 = vmatprep.mubr.bf16.mxu0 0
        %2151 = vmatmul.mubr.bf16.gmra.mrb[0].mxu0 %v2005
        %v2152 = vpop.f32.mrb[0].mxu0
        %v2153 = vadd.f32 %v2037, %v2152
        %v2154 = vpop.f32.mrb[0].mxu0
        %v2155 = vpop.f32.mrb[0].mxu0
        %v2156 = vadd.f32 %v2037, %v2155
        %v2157 = vpop.f32.mrb[0].mxu0
        %2158 = vmatprep.mubr.bf16.mxu0 0
        %2159 = vmatmul.mubr.bf16.gmra.mrb[0].mxu0 %v2006
        %v2160 = vpop.f32.mrb[0].mxu0
        %v2161 = vadd.f32 %v2037, %v2160
        %v2162 = vpop.f32.mrb[0].mxu0
        %v2163 = vpop.f32.mrb[0].mxu0
        %v2164 = vadd.f32 %v2037, %v2163
        %v2165 = vpop.f32.mrb[0].mxu0
        %2166 = vmatprep.mubr.bf16.mxu0 0
        %2167 = vmatmul.mubr.bf16.gmra.mrb[0].mxu0 %v2007
        %v2168 = vpop.f32.mrb[0].mxu0
        %v2169 = vadd.f32 %v2037, %v2168
        %v2170 = vpop.f32.mrb[0].mxu0
        %v2171 = vpop.f32.mrb[0].mxu0
        %v2172 = vadd.f32 %v2037, %v2171
        %v2173 = vpop.f32.mrb[0].mxu0
        %2174 = vmatprep.mubr.bf16.mxu0 0
        %2175 = vmatmul.mubr.bf16.gmra.mrb[0].mxu0 %v2008
        %v2176 = vpop.f32.mrb[0].mxu0
        %v2177 = vadd.f32 %v2037, %v2176
        %v2178 = vpop.f32.mrb[0].mxu0
        %v2179 = vpop.f32.mrb[0].mxu0
        %v2180 = vadd.f32 %v2037, %v2179
        %v2181 = vpop.f32.mrb[0].mxu0
        %2182 = vmatprep.mubr.bf16.mxu0 0
        %2183 = vmatmul.mubr.bf16.gmra.mrb[0].mxu0 %v2009
        %v2184 = vpop.f32.mrb[0].mxu0
        %v2185 = vadd.f32 %v2037, %v2184
        %v2186 = vpop.f32.mrb[0].mxu0
        %v2187 = vpop.f32.mrb[0].mxu0
        %v2188 = vadd.f32 %v2037, %v2187
        %v2189 = vpop.f32.mrb[0].mxu0
        %2190 = vmatprep.mubr.bf16.mxu0 0
        %2191 = vmatmul.mubr.bf16.gmra.mrb[0].mxu0 %v2010
        %v2192 = vpop.f32.mrb[0].mxu0
        %v2193 = vadd.f32 %v2037, %v2192
        %v2194 = vpop.f32.mrb[0].mxu0
        %v2195 = vpop.f32.mrb[0].mxu0
        %v2196 = vadd.f32 %v2037, %v2195
        %v2197 = vpop.f32.mrb[0].mxu0
        %2198 = vmatprep.mubr.bf16.mxu0 0
        %2199 = vmatmul.mubr.bf16.gmra.mrb[0].mxu0 %v2011
        %v2200 = vpop.f32.mrb[0].mxu0
        %v2201 = vadd.f32 %v2037, %v2200
        %v2202 = vpop.f32.mrb[0].mxu0
        %v2203 = vpop.f32.mrb[0].mxu0
        %v2204 = vadd.f32 %v2037, %v2203
        %v2205 = vpop.f32.mrb[0].mxu0
        %2206 = vmatprep.mubr.bf16.mxu0 0
        %2207 = vmatmul.mubr.bf16.gmra.mrb[0].mxu0 %v2012
        %v2208 = vpop.f32.mrb[0].mxu0
        %v2209 = vadd.f32 %v2037, %v2208
        %v2210 = vpop.f32.mrb[0].mxu0
        %v2211 = vpop.f32.mrb[0].mxu0
        %v2212 = vadd.f32 %v2037, %v2211
        %v2213 = vpop.f32.mrb[0].mxu0
        %2214 = vmatprep.mubr.bf16.mxu0 0
        %2215 = vmatmul.mubr.bf16.gmra.mrb[0].mxu0 %v2013
        %v2216 = vpop.f32.mrb[0].mxu0
        %v2217 = vadd.f32 %v2037, %v2216
        %v2218 = vpop.f32.mrb[0].mxu0
        %v2219 = vpop.f32.mrb[0].mxu0
        %v2220 = vadd.f32 %v2037, %v2219
        %v2221 = vpop.f32.mrb[0].mxu0
        %2222 = vmatprep.mubr.bf16.mxu0 0
        %2223 = vmatmul.mubr.bf16.gmra.mrb[0].mxu0 %v2014
        %v2224 = vpop.f32.mrb[0].mxu0
        %v2225 = vadd.f32 %v2037, %v2224
        %v2226 = vpop.f32.mrb[0].mxu0
        %v2227 = vpop.f32.mrb[0].mxu0
        %v2228 = vadd.f32 %v2037, %v2227
        %v2229 = vpop.f32.mrb[0].mxu0
        %2230 = vmatprep.mubr.bf16.mxu0 0
        %2231 = vmatmul.mubr.bf16.gmra.mrb[0].mxu0 %v2015
        %v2232 = vpop.f32.mrb[0].mxu0
        %v2233 = vadd.f32 %v2037, %v2232
        %v2234 = vpop.f32.mrb[0].mxu0
        %v2235 = vpop.f32.mrb[0].mxu0
        %v2236 = vadd.f32 %v2037, %v2235
        %v2237 = vpop.f32.mrb[0].mxu0
        %2238 = vmatprep.mubr.bf16.mxu0 0
        %2239 = vmatmul.mubr.bf16.gmra.mrb[0].mxu0 %v2016
        %v2240 = vpop.f32.mrb[0].mxu0
        %v2241 = vadd.f32 %v2037, %v2240
        %v2242 = vpop.f32.mrb[0].mxu0
        %v2243 = vpop.f32.mrb[0].mxu0
        %v2244 = vadd.f32 %v2037, %v2243
        %v2245 = vpop.f32.mrb[0].mxu0
        %2246 = vdwg.mxu0
        %v2247 = vlaneseq
        %v2248 = vshrl.u32 %v2247, 7
        %v2249 = vsub.s32 1, %v2248
        %v2250 = vrot.slane %v2033, %v2249
        %v2251 = vmul.f32 %v2121, %v2250
        %v2252 = vmul.f32 %v2124, %v2250
        %v2253 = vmul.f32 %v2129, %v2250
        %v2254 = vmul.f32 %v2132, %v2250
        %v2255 = vmul.f32 %v2137, %v2250
        %v2256 = vmul.f32 %v2140, %v2250
        %v2257 = vmul.f32 %v2145, %v2250
        %v2258 = vmul.f32 %v2148, %v2250
        %v2259 = vmul.f32 %v2153, %v2250
        %v2260 = vmul.f32 %v2156, %v2250
        %v2261 = vmul.f32 %v2161, %v2250
        %v2262 = vmul.f32 %v2164, %v2250
        %v2263 = vmul.f32 %v2169, %v2250
        %v2264 = vmul.f32 %v2172, %v2250
        %v2265 = vmul.f32 %v2177, %v2250
        %v2266 = vmul.f32 %v2180, %v2250
        %v2267 = vmul.f32 %v2185, %v2250
        %v2268 = vmul.f32 %v2188, %v2250
        %v2269 = vmul.f32 %v2193, %v2250
        %v2270 = vmul.f32 %v2196, %v2250
        %v2271 = vmul.f32 %v2201, %v2250
        %v2272 = vmul.f32 %v2204, %v2250
        %v2273 = vmul.f32 %v2209, %v2250
        %v2274 = vmul.f32 %v2212, %v2250
        %v2275 = vmul.f32 %v2217, %v2250
        %v2276 = vmul.f32 %v2220, %v2250
        %v2277 = vmul.f32 %v2225, %v2250
        %v2278 = vmul.f32 %v2228, %v2250
        %v2279 = vmul.f32 %v2233, %v2250
        %v2280 = vmul.f32 %v2236, %v2250
        %v2281 = vmul.f32 %v2241, %v2250
        %v2282 = vmul.f32 %v2244, %v2250
        %v2283 = vlaneseq
        %v2284 = vshrl.u32 %v2283, 7
        %v2285 = vsub.s32 2, %v2284
        %v2286 = vrot.slane %v2033, %v2285
        %v2287 = vadd.f32 %v2251, %v2286
        %v2288 = vadd.f32 %v2252, %v2286
        %v2289 = vadd.f32 %v2253, %v2286
        %v2290 = vadd.f32 %v2254, %v2286
        %v2291 = vadd.f32 %v2255, %v2286
        %v2292 = vadd.f32 %v2256, %v2286
        %v2293 = vadd.f32 %v2257, %v2286
        %v2294 = vadd.f32 %v2258, %v2286
        %v2295 = vadd.f32 %v2259, %v2286
        %v2296 = vadd.f32 %v2260, %v2286
        %v2297 = vadd.f32 %v2261, %v2286
        %v2298 = vadd.f32 %v2262, %v2286
        %v2299 = vadd.f32 %v2263, %v2286
        %v2300 = vadd.f32 %v2264, %v2286
        %v2301 = vadd.f32 %v2265, %v2286
        %v2302 = vadd.f32 %v2266, %v2286
        %v2303 = vadd.f32 %v2267, %v2286
        %v2304 = vadd.f32 %v2268, %v2286
        %v2305 = vadd.f32 %v2269, %v2286
        %v2306 = vadd.f32 %v2270, %v2286
        %v2307 = vadd.f32 %v2271, %v2286
        %v2308 = vadd.f32 %v2272, %v2286
        %v2309 = vadd.f32 %v2273, %v2286
        %v2310 = vadd.f32 %v2274, %v2286
        %v2311 = vadd.f32 %v2275, %v2286
        %v2312 = vadd.f32 %v2276, %v2286
        %v2313 = vadd.f32 %v2277, %v2286
        %v2314 = vadd.f32 %v2278, %v2286
        %v2315 = vadd.f32 %v2279, %v2286
        %v2316 = vadd.f32 %v2280, %v2286
        %v2317 = vadd.f32 %v2281, %v2286
        %v2318 = vadd.f32 %v2282, %v2286
        %v2319 = vmax.f32 %v2287, 0.0
        %v2320 = vmax.f32 %v2288, 0.0
        %v2321 = vmax.f32 %v2289, 0.0
        %v2322 = vmax.f32 %v2290, 0.0
        %v2323 = vmax.f32 %v2291, 0.0
        %v2324 = vmax.f32 %v2292, 0.0
        %v2325 = vmax.f32 %v2293, 0.0
        %v2326 = vmax.f32 %v2294, 0.0
        %v2327 = vmax.f32 %v2295, 0.0
        %v2328 = vmax.f32 %v2296, 0.0
        %v2329 = vmax.f32 %v2297, 0.0
        %v2330 = vmax.f32 %v2298, 0.0
        %v2331 = vmax.f32 %v2299, 0.0
        %v2332 = vmax.f32 %v2300, 0.0
        %v2333 = vmax.f32 %v2301, 0.0
        %v2334 = vmax.f32 %v2302, 0.0
        %v2335 = vmax.f32 %v2303, 0.0
        %v2336 = vmax.f32 %v2304, 0.0
        %v2337 = vmax.f32 %v2305, 0.0
        %v2338 = vmax.f32 %v2306, 0.0
        %v2339 = vmax.f32 %v2307, 0.0
        %v2340 = vmax.f32 %v2308, 0.0
        %v2341 = vmax.f32 %v2309, 0.0
        %v2342 = vmax.f32 %v2310, 0.0
        %v2343 = vmax.f32 %v2311, 0.0
        %v2344 = vmax.f32 %v2312, 0.0
        %v2345 = vmax.f32 %v2313, 0.0
        %v2346 = vmax.f32 %v2314, 0.0
        %v2347 = vmax.f32 %v2315, 0.0
        %v2348 = vmax.f32 %v2316, 0.0
        %v2349 = vmax.f32 %v2317, 0.0
        %v2350 = vmax.f32 %v2318, 0.0
        %v2352 = vcombine.high %v732, %v732
        %2354 = vmatprep.subr.mxu0 0.0
        %2355 = vmatpush1.msra.mxu0 %v2319
        %2356 = vmatprep.subr.mxu0 0.0
        %2357 = vmatpush1.msra.mxu0 %v2320
        %2358 = vmatprep.subr.mxu0 0.0
        %2359 = vmatpush1.msra.mxu0 %v2321
        %2360 = vmatprep.subr.mxu0 0.0
        %2361 = vmatpush1.msra.mxu0 %v2322
        %2362 = vmatprep.subr.mxu0 0.0
        %2363 = vmatpush1.msra.mxu0 %v2323
        %2364 = vmatprep.subr.mxu0 0.0
        %2365 = vmatpush1.msra.mxu0 %v2324
        %2366 = vmatprep.subr.mxu0 0.0
        %2367 = vmatpush1.msra.mxu0 %v2325
        %2368 = vmatprep.subr.mxu0 0.0
        %2369 = vmatpush1.msra.mxu0 %v2326
        %2370 = vmatprep.subr.mxu0 0.0
        %2371 = vmatpush1.msra.mxu0 %v2327
        %2372 = vmatprep.subr.mxu0 0.0
        %2373 = vmatpush1.msra.mxu0 %v2328
        %2374 = vmatprep.subr.mxu0 0.0
        %2375 = vmatpush1.msra.mxu0 %v2329
        %2376 = vmatprep.subr.mxu0 0.0
        %2377 = vmatpush1.msra.mxu0 %v2330
        %2378 = vmatprep.subr.mxu0 0.0
        %2379 = vmatpush1.msra.mxu0 %v2331
        %2380 = vmatprep.subr.mxu0 0.0
        %2381 = vmatpush1.msra.mxu0 %v2332
        %2382 = vmatprep.subr.mxu0 0.0
        %2383 = vmatpush1.msra.mxu0 %v2333
        %2384 = vmatprep.subr.mxu0 0.0
        %2385 = vmatpush1.msra.mxu0 %v2334
        %2386 = vmatprep.subr.mxu0 0.0
        %2387 = vmatpush1.msra.mxu0 %v2335
        %2388 = vmatprep.subr.mxu0 0.0
        %2389 = vmatpush1.msra.mxu0 %v2336
        %2390 = vmatprep.subr.mxu0 0.0
        %2391 = vmatpush1.msra.mxu0 %v2337
        %2392 = vmatprep.subr.mxu0 0.0
        %2393 = vmatpush1.msra.mxu0 %v2338
        %2394 = vmatprep.subr.mxu0 0.0
        %2395 = vmatpush1.msra.mxu0 %v2339
        %2396 = vmatprep.subr.mxu0 0.0
        %2397 = vmatpush1.msra.mxu0 %v2340
        %2398 = vmatprep.subr.mxu0 0.0
        %2399 = vmatpush1.msra.mxu0 %v2341
        %2400 = vmatprep.subr.mxu0 0.0
        %2401 = vmatpush1.msra.mxu0 %v2342
        %2402 = vmatprep.subr.mxu0 0.0
        %2403 = vmatpush1.msra.mxu0 %v2343
        %2404 = vmatprep.subr.mxu0 0.0
        %2405 = vmatpush1.msra.mxu0 %v2344
        %2406 = vmatprep.subr.mxu0 0.0
        %2407 = vmatpush1.msra.mxu0 %v2345
        %2408 = vmatprep.subr.mxu0 0.0
        %2409 = vmatpush1.msra.mxu0 %v2346
        %2410 = vmatprep.subr.mxu0 0.0
        %2411 = vmatpush1.msra.mxu0 %v2347
        %2412 = vmatprep.subr.mxu0 0.0
        %2413 = vmatpush1.msra.mxu0 %v2348
        %2414 = vmatprep.subr.mxu0 0.0
        %2415 = vmatpush1.msra.mxu0 %v2349
        %2416 = vmatprep.subr.mxu0 0.0
        %2417 = vmatpush1.msra.mxu0 %v2350
        %2418 = vmatprep.mubr.f32.mxu0 %v2352
        %2419 = vmatmul.mubr.f32.gmra.mrb[0].mxu0 %v732
        %v2420 = vpop.f32.mrb[0].mxu0
        %v2421 = vadd.f32 0.0, %v2420
        %v2422 = vpop.f32.mrb[0].mxu0
        %2423 = vdwg.mxu0
        %2424 = vst [vmem:[%s681] sm:$0xf] %v2421
        %v2425 = vpack.c.bf16 %v1238, %v1237
        %v2426 = vpack.c.bf16 %v1240, %v1239
        %v2427 = vpack.c.bf16 %v1242, %v1241
        %v2428 = vpack.c.bf16 %v1244, %v1243
        %v2429 = vpack.c.bf16 %v1246, %v1245
        %v2430 = vpack.c.bf16 %v1248, %v1247
        %v2431 = vpack.c.bf16 %v1250, %v1249
        %v2432 = vpack.c.bf16 %v1252, %v1251
        %v2433 = vpack.c.bf16 %v1254, %v1253
        %v2434 = vpack.c.bf16 %v1256, %v1255
        %v2435 = vpack.c.bf16 %v1258, %v1257
        %v2436 = vpack.c.bf16 %v1260, %v1259
        %v2437 = vpack.c.bf16 %v1262, %v1261
        %v2438 = vpack.c.bf16 %v1264, %v1263
        %v2439 = vpack.c.bf16 %v1266, %v1265
        %v2440 = vpack.c.bf16 %v1268, %v1267
        %v2441 = vld [vmem:[#allocation14] sm:$0xf]
        %v2442 = vld [vmem:[#allocation14 + $0x4] sm:$0xf]
        %v2443 = vld [vmem:[#allocation14 + $0x8] sm:$0xf]
        %v2444 = vld [vmem:[#allocation14 + $0xc] sm:$0xf]
        %v2445 = vld [vmem:[#allocation14 + $0x10] sm:$0xf]
        %v2446 = vld [vmem:[#allocation14 + $0x14] sm:$0xf]
        %v2447 = vld [vmem:[#allocation14 + $0x18] sm:$0xf]
        %v2448 = vld [vmem:[#allocation14 + $0x1c] sm:$0xf]
        %v2449 = vld [vmem:[#allocation14 + $0x20] sm:$0xf]
        %v2450 = vld [vmem:[#allocation14 + $0x24] sm:$0xf]
        %v2451 = vld [vmem:[#allocation14 + $0x28] sm:$0xf]
        %v2452 = vld [vmem:[#allocation14 + $0x2c] sm:$0xf]
        %v2453 = vld [vmem:[#allocation14 + $0x30] sm:$0xf]
        %v2454 = vld [vmem:[#allocation14 + $0x34] sm:$0xf]
        %v2455 = vld [vmem:[#allocation14 + $0x38] sm:$0xf]
        %v2456 = vld [vmem:[#allocation14 + $0x3c] sm:$0xf]
        %v2457 = vld [vmem:[%s12] sm:$0x1]
        %v2459 = vlaneseq
        %v2460 = vshrl.u32 %v2459, 7
        %v2461 = vsub.s32 0, %v2460
        %v2462 = vrot.slane %v2457, %v2461
        %v2480 = vunpack.c.l.b16 %v2441
        %v2481 = vunpack.c.l.b16 %v2442
        %v2482 = vunpack.c.l.b16 %v2443
        %v2483 = vunpack.c.l.b16 %v2444
        %v2484 = vunpack.c.l.b16 %v2445
        %v2485 = vunpack.c.l.b16 %v2446
        %v2486 = vunpack.c.l.b16 %v2447
        %v2487 = vunpack.c.l.b16 %v2448
        %v2488 = vunpack.c.l.b16 %v2449
        %v2489 = vunpack.c.l.b16 %v2450
        %v2490 = vunpack.c.l.b16 %v2451
        %v2491 = vunpack.c.l.b16 %v2452
        %v2492 = vunpack.c.l.b16 %v2453
        %v2493 = vunpack.c.l.b16 %v2454
        %v2494 = vunpack.c.l.b16 %v2455
        %v2495 = vunpack.c.l.b16 %v2456
        %v2496 = vpack.c.b16 %v2481, %v2480
        %v2497 = vpack.c.b16 %v2483, %v2482
        %v2498 = vpack.c.b16 %v2485, %v2484
        %v2499 = vpack.c.b16 %v2487, %v2486
        %v2500 = vpack.c.b16 %v2489, %v2488
        %v2501 = vpack.c.b16 %v2491, %v2490
        %v2502 = vpack.c.b16 %v2493, %v2492
        %v2503 = vpack.c.b16 %v2495, %v2494
        %2512 = vmatprep.subr.bf16.mxu0 0
        %2513 = vmatpush1.bf16.msra.mxu0 %v2496
        %2514 = vmatprep.subr.bf16.mxu0 0
        %2515 = vmatpush1.bf16.msra.mxu0 %v2497
        %2516 = vmatprep.subr.bf16.mxu0 0
        %2517 = vmatpush1.bf16.msra.mxu0 %v2498
        %2518 = vmatprep.subr.bf16.mxu0 0
        %2519 = vmatpush1.bf16.msra.mxu0 %v2499
        %2520 = vmatprep.subr.bf16.mxu0 0
        %2521 = vmatpush1.bf16.msra.mxu0 %v2500
        %2522 = vmatprep.subr.bf16.mxu0 0
        %2523 = vmatpush1.bf16.msra.mxu0 %v2501
        %2524 = vmatprep.subr.bf16.mxu0 0
        %2525 = vmatpush1.bf16.msra.mxu0 %v2502
        %2526 = vmatprep.subr.bf16.mxu0 0
        %2527 = vmatpush1.bf16.msra.mxu0 %v2503
        %2528 = vmatprep.subr.bf16.mxu0 0
        %2529 = vmatpush1.bf16.msra.mxu0 0
        %2530 = vmatprep.subr.bf16.mxu0 0
        %2531 = vmatpush1.bf16.msra.mxu0 0
        %2532 = vmatprep.subr.bf16.mxu0 0
        %2533 = vmatpush1.bf16.msra.mxu0 0
        %2534 = vmatprep.subr.bf16.mxu0 0
        %2535 = vmatpush1.bf16.msra.mxu0 0
        %2536 = vmatprep.subr.bf16.mxu0 0
        %2537 = vmatpush1.bf16.msra.mxu0 0
        %2538 = vmatprep.subr.bf16.mxu0 0
        %2539 = vmatpush1.bf16.msra.mxu0 0
        %2540 = vmatprep.subr.bf16.mxu0 0
        %2541 = vmatpush1.bf16.msra.mxu0 0
        %2542 = vmatprep.subr.bf16.mxu0 0
        %2543 = vmatpush1.bf16.msra.mxu0 0
        %2544 = vmatprep.mubr.bf16.mxu0 0
        %2545 = vmatmul.mubr.bf16.gmra.mrb[0].mxu0 %v2425
        %v2546 = vpop.f32.mrb[0].mxu0
        %v2547 = vadd.f32 %v2462, %v2546
        %v2548 = vpop.f32.mrb[0].mxu0
        %v2549 = vpop.f32.mrb[0].mxu0
        %v2550 = vadd.f32 %v2462, %v2549
        %v2551 = vpop.f32.mrb[0].mxu0
        %2552 = vmatprep.mubr.bf16.mxu0 0
        %2553 = vmatmul.mubr.bf16.gmra.mrb[0].mxu0 %v2426
        %v2554 = vpop.f32.mrb[0].mxu0
        %v2555 = vadd.f32 %v2462, %v2554
        %v2556 = vpop.f32.mrb[0].mxu0
        %v2557 = vpop.f32.mrb[0].mxu0
        %v2558 = vadd.f32 %v2462, %v2557
        %v2559 = vpop.f32.mrb[0].mxu0
        %2560 = vmatprep.mubr.bf16.mxu0 0
        %2561 = vmatmul.mubr.bf16.gmra.mrb[0].mxu0 %v2427
        %v2562 = vpop.f32.mrb[0].mxu0
        %v2563 = vadd.f32 %v2462, %v2562
        %v2564 = vpop.f32.mrb[0].mxu0
        %v2565 = vpop.f32.mrb[0].mxu0
        %v2566 = vadd.f32 %v2462, %v2565
        %v2567 = vpop.f32.mrb[0].mxu0
        %2568 = vmatprep.mubr.bf16.mxu0 0
        %2569 = vmatmul.mubr.bf16.gmra.mrb[0].mxu0 %v2428
        %v2570 = vpop.f32.mrb[0].mxu0
        %v2571 = vadd.f32 %v2462, %v2570
        %v2572 = vpop.f32.mrb[0].mxu0
        %v2573 = vpop.f32.mrb[0].mxu0
        %v2574 = vadd.f32 %v2462, %v2573
        %v2575 = vpop.f32.mrb[0].mxu0
        %2576 = vmatprep.mubr.bf16.mxu0 0
        %2577 = vmatmul.mubr.bf16.gmra.mrb[0].mxu0 %v2429
        %v2578 = vpop.f32.mrb[0].mxu0
        %v2579 = vadd.f32 %v2462, %v2578
        %v2580 = vpop.f32.mrb[0].mxu0
        %v2581 = vpop.f32.mrb[0].mxu0
        %v2582 = vadd.f32 %v2462, %v2581
        %v2583 = vpop.f32.mrb[0].mxu0
        %2584 = vmatprep.mubr.bf16.mxu0 0
        %2585 = vmatmul.mubr.bf16.gmra.mrb[0].mxu0 %v2430
        %v2586 = vpop.f32.mrb[0].mxu0
        %v2587 = vadd.f32 %v2462, %v2586
        %v2588 = vpop.f32.mrb[0].mxu0
        %v2589 = vpop.f32.mrb[0].mxu0
        %v2590 = vadd.f32 %v2462, %v2589
        %v2591 = vpop.f32.mrb[0].mxu0
        %2592 = vmatprep.mubr.bf16.mxu0 0
        %2593 = vmatmul.mubr.bf16.gmra.mrb[0].mxu0 %v2431
        %v2594 = vpop.f32.mrb[0].mxu0
        %v2595 = vadd.f32 %v2462, %v2594
        %v2596 = vpop.f32.mrb[0].mxu0
        %v2597 = vpop.f32.mrb[0].mxu0
        %v2598 = vadd.f32 %v2462, %v2597
        %v2599 = vpop.f32.mrb[0].mxu0
        %2600 = vmatprep.mubr.bf16.mxu0 0
        %2601 = vmatmul.mubr.bf16.gmra.mrb[0].mxu0 %v2432
        %v2602 = vpop.f32.mrb[0].mxu0
        %v2603 = vadd.f32 %v2462, %v2602
        %v2604 = vpop.f32.mrb[0].mxu0
        %v2605 = vpop.f32.mrb[0].mxu0
        %v2606 = vadd.f32 %v2462, %v2605
        %v2607 = vpop.f32.mrb[0].mxu0
        %2608 = vmatprep.mubr.bf16.mxu0 0
        %2609 = vmatmul.mubr.bf16.gmra.mrb[0].mxu0 %v2433
        %v2610 = vpop.f32.mrb[0].mxu0
        %v2611 = vadd.f32 %v2462, %v2610
        %v2612 = vpop.f32.mrb[0].mxu0
        %v2613 = vpop.f32.mrb[0].mxu0
        %v2614 = vadd.f32 %v2462, %v2613
        %v2615 = vpop.f32.mrb[0].mxu0
        %2616 = vmatprep.mubr.bf16.mxu0 0
        %2617 = vmatmul.mubr.bf16.gmra.mrb[0].mxu0 %v2434
        %v2618 = vpop.f32.mrb[0].mxu0
        %v2619 = vadd.f32 %v2462, %v2618
        %v2620 = vpop.f32.mrb[0].mxu0
        %v2621 = vpop.f32.mrb[0].mxu0
        %v2622 = vadd.f32 %v2462, %v2621
        %v2623 = vpop.f32.mrb[0].mxu0
        %2624 = vmatprep.mubr.bf16.mxu0 0
        %2625 = vmatmul.mubr.bf16.gmra.mrb[0].mxu0 %v2435
        %v2626 = vpop.f32.mrb[0].mxu0
        %v2627 = vadd.f32 %v2462, %v2626
        %v2628 = vpop.f32.mrb[0].mxu0
        %v2629 = vpop.f32.mrb[0].mxu0
        %v2630 = vadd.f32 %v2462, %v2629
        %v2631 = vpop.f32.mrb[0].mxu0
        %2632 = vmatprep.mubr.bf16.mxu0 0
        %2633 = vmatmul.mubr.bf16.gmra.mrb[0].mxu0 %v2436
        %v2634 = vpop.f32.mrb[0].mxu0
        %v2635 = vadd.f32 %v2462, %v2634
        %v2636 = vpop.f32.mrb[0].mxu0
        %v2637 = vpop.f32.mrb[0].mxu0
        %v2638 = vadd.f32 %v2462, %v2637
        %v2639 = vpop.f32.mrb[0].mxu0
        %2640 = vmatprep.mubr.bf16.mxu0 0
        %2641 = vmatmul.mubr.bf16.gmra.mrb[0].mxu0 %v2437
        %v2642 = vpop.f32.mrb[0].mxu0
        %v2643 = vadd.f32 %v2462, %v2642
        %v2644 = vpop.f32.mrb[0].mxu0
        %v2645 = vpop.f32.mrb[0].mxu0
        %v2646 = vadd.f32 %v2462, %v2645
        %v2647 = vpop.f32.mrb[0].mxu0
        %2648 = vmatprep.mubr.bf16.mxu0 0
        %2649 = vmatmul.mubr.bf16.gmra.mrb[0].mxu0 %v2438
        %v2650 = vpop.f32.mrb[0].mxu0
        %v2651 = vadd.f32 %v2462, %v2650
        %v2652 = vpop.f32.mrb[0].mxu0
        %v2653 = vpop.f32.mrb[0].mxu0
        %v2654 = vadd.f32 %v2462, %v2653
        %v2655 = vpop.f32.mrb[0].mxu0
        %2656 = vmatprep.mubr.bf16.mxu0 0
        %2657 = vmatmul.mubr.bf16.gmra.mrb[0].mxu0 %v2439
        %v2658 = vpop.f32.mrb[0].mxu0
        %v2659 = vadd.f32 %v2462, %v2658
        %v2660 = vpop.f32.mrb[0].mxu0
        %v2661 = vpop.f32.mrb[0].mxu0
        %v2662 = vadd.f32 %v2462, %v2661
        %v2663 = vpop.f32.mrb[0].mxu0
        %2664 = vmatprep.mubr.bf16.mxu0 0
        %2665 = vmatmul.mubr.bf16.gmra.mrb[0].mxu0 %v2440
        %v2666 = vpop.f32.mrb[0].mxu0
        %v2667 = vadd.f32 %v2462, %v2666
        %v2668 = vpop.f32.mrb[0].mxu0
        %v2669 = vpop.f32.mrb[0].mxu0
        %v2670 = vadd.f32 %v2462, %v2669
        %v2671 = vpop.f32.mrb[0].mxu0
        %2672 = vdwg.mxu0
        %v2673 = vlaneseq
        %v2674 = vand.u32 %v2673, 127
        %vm2675 = vcmp.lt.s32.totalorder %v2674, 24
        %vm2676 = vcmp.lt.s32.totalorder %v2674, 48
        %v2709 = vrot.slane %v1237, 7
        %v2710 = vrot.slane %v1238, 7
        %v2711 = vrot.slane %v1239, 7
        %v2712 = vrot.slane %v1240, 7
        %v2713 = vrot.slane %v1241, 7
        %v2714 = vrot.slane %v1242, 7
        %v2715 = vrot.slane %v1243, 7
        %v2716 = vrot.slane %v1244, 7
        %v2717 = vrot.slane %v1245, 7
        %v2718 = vrot.slane %v1246, 7
        %v2719 = vrot.slane %v1247, 7
        %v2720 = vrot.slane %v1248, 7
        %v2721 = vrot.slane %v1249, 7
        %v2722 = vrot.slane %v1250, 7
        %v2723 = vrot.slane %v1251, 7
        %v2724 = vrot.slane %v1252, 7
        %v2725 = vrot.slane %v1253, 7
        %v2726 = vrot.slane %v1254, 7
        %v2727 = vrot.slane %v1255, 7
        %v2728 = vrot.slane %v1256, 7
        %v2729 = vrot.slane %v1257, 7
        %v2730 = vrot.slane %v1258, 7
        %v2731 = vrot.slane %v1259, 7
        %v2732 = vrot.slane %v1260, 7
        %v2733 = vrot.slane %v1261, 7
        %v2734 = vrot.slane %v1262, 7
        %v2735 = vrot.slane %v1263, 7
        %v2736 = vrot.slane %v1264, 7
        %v2737 = vrot.slane %v1265, 7
        %v2738 = vrot.slane %v1266, 7
        %v2739 = vrot.slane %v1267, 7
        %v2740 = vrot.slane %v1268, 7
        %vm2773 = vcmask 1040384
        %v2774 = vsel %vm2773, %v1237, %v2709
        %v2775 = vsel %vm2773, %v1238, %v2710
        %v2776 = vsel %vm2773, %v1239, %v2711
        %v2777 = vsel %vm2773, %v1240, %v2712
        %v2778 = vsel %vm2773, %v1241, %v2713
        %v2779 = vsel %vm2773, %v1242, %v2714
        %v2780 = vsel %vm2773, %v1243, %v2715
        %v2781 = vsel %vm2773, %v1244, %v2716
        %v2782 = vsel %vm2773, %v1245, %v2717
        %v2783 = vsel %vm2773, %v1246, %v2718
        %v2784 = vsel %vm2773, %v1247, %v2719
        %v2785 = vsel %vm2773, %v1248, %v2720
        %v2786 = vsel %vm2773, %v1249, %v2721
        %v2787 = vsel %vm2773, %v1250, %v2722
        %v2788 = vsel %vm2773, %v1251, %v2723
        %v2789 = vsel %vm2773, %v1252, %v2724
        %v2790 = vsel %vm2773, %v1253, %v2725
        %v2791 = vsel %vm2773, %v1254, %v2726
        %v2792 = vsel %vm2773, %v1255, %v2727
        %v2793 = vsel %vm2773, %v1256, %v2728
        %v2794 = vsel %vm2773, %v1257, %v2729
        %v2795 = vsel %vm2773, %v1258, %v2730
        %v2796 = vsel %vm2773, %v1259, %v2731
        %v2797 = vsel %vm2773, %v1260, %v2732
        %v2798 = vsel %vm2773, %v1261, %v2733
        %v2799 = vsel %vm2773, %v1262, %v2734
        %v2800 = vsel %vm2773, %v1263, %v2735
        %v2801 = vsel %vm2773, %v1264, %v2736
        %v2802 = vsel %vm2773, %v1265, %v2737
        %v2803 = vsel %vm2773, %v1266, %v2738
        %v2804 = vsel %vm2773, %v1267, %v2739
        %v2805 = vsel %vm2773, %v1268, %v2740
        %v2806 = vrot.slane %v1237, 1
        %v2807 = vrot.slane %v1238, 1
        %v2808 = vrot.slane %v1239, 1
        %v2809 = vrot.slane %v1240, 1
        %v2810 = vrot.slane %v1241, 1
        %v2811 = vrot.slane %v1242, 1
        %v2812 = vrot.slane %v1243, 1
        %v2813 = vrot.slane %v1244, 1
        %v2814 = vrot.slane %v1245, 1
        %v2815 = vrot.slane %v1246, 1
        %v2816 = vrot.slane %v1247, 1
        %v2817 = vrot.slane %v1248, 1
        %v2818 = vrot.slane %v1249, 1
        %v2819 = vrot.slane %v1250, 1
        %v2820 = vrot.slane %v1251, 1
        %v2821 = vrot.slane %v1252, 1
        %v2822 = vrot.slane %v1253, 1
        %v2823 = vrot.slane %v1254, 1
        %v2824 = vrot.slane %v1255, 1
        %v2825 = vrot.slane %v1256, 1
        %v2826 = vrot.slane %v1257, 1
        %v2827 = vrot.slane %v1258, 1
        %v2828 = vrot.slane %v1259, 1
        %v2829 = vrot.slane %v1260, 1
        %v2830 = vrot.slane %v1261, 1
        %v2831 = vrot.slane %v1262, 1
        %v2832 = vrot.slane %v1263, 1
        %v2833 = vrot.slane %v1264, 1
        %v2834 = vrot.slane %v1265, 1
        %v2835 = vrot.slane %v1266, 1
        %v2836 = vrot.slane %v1267, 1
        %v2837 = vrot.slane %v1268, 1
        %vm2870 = vcmask 1046528
        %v2871 = vsel %vm2870, %v2806, %v1237
        %v2872 = vsel %vm2870, %v2807, %v1238
        %v2873 = vsel %vm2870, %v2808, %v1239
        %v2874 = vsel %vm2870, %v2809, %v1240
        %v2875 = vsel %vm2870, %v2810, %v1241
        %v2876 = vsel %vm2870, %v2811, %v1242
        %v2877 = vsel %vm2870, %v2812, %v1243
        %v2878 = vsel %vm2870, %v2813, %v1244
        %v2879 = vsel %vm2870, %v2814, %v1245
        %v2880 = vsel %vm2870, %v2815, %v1246
        %v2881 = vsel %vm2870, %v2816, %v1247
        %v2882 = vsel %vm2870, %v2817, %v1248
        %v2883 = vsel %vm2870, %v2818, %v1249
        %v2884 = vsel %vm2870, %v2819, %v1250
        %v2885 = vsel %vm2870, %v2820, %v1251
        %v2886 = vsel %vm2870, %v2821, %v1252
        %v2887 = vsel %vm2870, %v2822, %v1253
        %v2888 = vsel %vm2870, %v2823, %v1254
        %v2889 = vsel %vm2870, %v2824, %v1255
        %v2890 = vsel %vm2870, %v2825, %v1256
        %v2891 = vsel %vm2870, %v2826, %v1257
        %v2892 = vsel %vm2870, %v2827, %v1258
        %v2893 = vsel %vm2870, %v2828, %v1259
        %v2894 = vsel %vm2870, %v2829, %v1260
        %v2895 = vsel %vm2870, %v2830, %v1261
        %v2896 = vsel %vm2870, %v2831, %v1262
        %v2897 = vsel %vm2870, %v2832, %v1263
        %v2898 = vsel %vm2870, %v2833, %v1264
        %v2899 = vsel %vm2870, %v2834, %v1265
        %v2900 = vsel %vm2870, %v2835, %v1266
        %v2901 = vsel %vm2870, %v2836, %v1267
        %v2902 = vsel %vm2870, %v2837, %v1268
        %v2903 = vsel %vm2676, 1, 0
        %vm2904 = vcmp.eq.s32.totalorder %v2903, 1
        %v2905 = vsel %vm2904, %v1237, %v2871
        %v2906 = vsel %vm2904, %v1238, %v2872
        %v2907 = vsel %vm2904, %v1239, %v2873
        %v2908 = vsel %vm2904, %v1240, %v2874
        %v2909 = vsel %vm2904, %v1241, %v2875
        %v2910 = vsel %vm2904, %v1242, %v2876
        %v2911 = vsel %vm2904, %v1243, %v2877
        %v2912 = vsel %vm2904, %v1244, %v2878
        %v2913 = vsel %vm2904, %v1245, %v2879
        %v2914 = vsel %vm2904, %v1246, %v2880
        %v2915 = vsel %vm2904, %v1247, %v2881
        %v2916 = vsel %vm2904, %v1248, %v2882
        %v2917 = vsel %vm2904, %v1249, %v2883
        %v2918 = vsel %vm2904, %v1250, %v2884
        %v2919 = vsel %vm2904, %v1251, %v2885
        %v2920 = vsel %vm2904, %v1252, %v2886
        %v2921 = vsel %vm2904, %v1253, %v2887
        %v2922 = vsel %vm2904, %v1254, %v2888
        %v2923 = vsel %vm2904, %v1255, %v2889
        %v2924 = vsel %vm2904, %v1256, %v2890
        %v2925 = vsel %vm2904, %v1257, %v2891
        %v2926 = vsel %vm2904, %v1258, %v2892
        %v2927 = vsel %vm2904, %v1259, %v2893
        %v2928 = vsel %vm2904, %v1260, %v2894
        %v2929 = vsel %vm2904, %v1261, %v2895
        %v2930 = vsel %vm2904, %v1262, %v2896
        %v2931 = vsel %vm2904, %v1263, %v2897
        %v2932 = vsel %vm2904, %v1264, %v2898
        %v2933 = vsel %vm2904, %v1265, %v2899
        %v2934 = vsel %vm2904, %v1266, %v2900
        %v2935 = vsel %vm2904, %v1267, %v2901
        %v2936 = vsel %vm2904, %v1268, %v2902
        %v2937 = vsel %vm2675, 1, 0
        %vm2938 = vcmp.eq.s32.totalorder %v2937, 1
        %v2939 = vsel %vm2938, %v2774, %v2905
        %v2940 = vsel %vm2938, %v2775, %v2906
        %v2941 = vsel %vm2938, %v2776, %v2907
        %v2942 = vsel %vm2938, %v2777, %v2908
        %v2943 = vsel %vm2938, %v2778, %v2909
        %v2944 = vsel %vm2938, %v2779, %v2910
        %v2945 = vsel %vm2938, %v2780, %v2911
        %v2946 = vsel %vm2938, %v2781, %v2912
        %v2947 = vsel %vm2938, %v2782, %v2913
        %v2948 = vsel %vm2938, %v2783, %v2914
        %v2949 = vsel %vm2938, %v2784, %v2915
        %v2950 = vsel %vm2938, %v2785, %v2916
        %v2951 = vsel %vm2938, %v2786, %v2917
        %v2952 = vsel %vm2938, %v2787, %v2918
        %v2953 = vsel %vm2938, %v2788, %v2919
        %v2954 = vsel %vm2938, %v2789, %v2920
        %v2955 = vsel %vm2938, %v2790, %v2921
        %v2956 = vsel %vm2938, %v2791, %v2922
        %v2957 = vsel %vm2938, %v2792, %v2923
        %v2958 = vsel %vm2938, %v2793, %v2924
        %v2959 = vsel %vm2938, %v2794, %v2925
        %v2960 = vsel %vm2938, %v2795, %v2926
        %v2961 = vsel %vm2938, %v2796, %v2927
        %v2962 = vsel %vm2938, %v2797, %v2928
        %v2963 = vsel %vm2938, %v2798, %v2929
        %v2964 = vsel %vm2938, %v2799, %v2930
        %v2965 = vsel %vm2938, %v2800, %v2931
        %v2966 = vsel %vm2938, %v2801, %v2932
        %v2967 = vsel %vm2938, %v2802, %v2933
        %v2968 = vsel %vm2938, %v2803, %v2934
        %v2969 = vsel %vm2938, %v2804, %v2935
        %v2970 = vsel %vm2938, %v2805, %v2936
        %v2971 = vpack.c.bf16 %v2939, %v2939
        %v2972 = vpack.c.bf16 %v2940, %v2940
        %v2973 = vpack.c.bf16 %v2941, %v2941
        %v2974 = vpack.c.bf16 %v2942, %v2942
        %v2975 = vpack.c.bf16 %v2943, %v2943
        %v2976 = vpack.c.bf16 %v2944, %v2944
        %v2977 = vpack.c.bf16 %v2945, %v2945
        %v2978 = vpack.c.bf16 %v2946, %v2946
        %v2979 = vpack.c.bf16 %v2947, %v2947
        %v2980 = vpack.c.bf16 %v2948, %v2948
        %v2981 = vpack.c.bf16 %v2949, %v2949
        %v2982 = vpack.c.bf16 %v2950, %v2950
        %v2983 = vpack.c.bf16 %v2951, %v2951
        %v2984 = vpack.c.bf16 %v2952, %v2952
        %v2985 = vpack.c.bf16 %v2953, %v2953
        %v2986 = vpack.c.bf16 %v2954, %v2954
        %v2987 = vpack.c.bf16 %v2955, %v2955
        %v2988 = vpack.c.bf16 %v2956, %v2956
        %v2989 = vpack.c.bf16 %v2957, %v2957
        %v2990 = vpack.c.bf16 %v2958, %v2958
        %v2991 = vpack.c.bf16 %v2959, %v2959
        %v2992 = vpack.c.bf16 %v2960, %v2960
        %v2993 = vpack.c.bf16 %v2961, %v2961
        %v2994 = vpack.c.bf16 %v2962, %v2962
        %v2995 = vpack.c.bf16 %v2963, %v2963
        %v2996 = vpack.c.bf16 %v2964, %v2964
        %v2997 = vpack.c.bf16 %v2965, %v2965
        %v2998 = vpack.c.bf16 %v2966, %v2966
        %v2999 = vpack.c.bf16 %v2967, %v2967
        %v3000 = vpack.c.bf16 %v2968, %v2968
        %v3001 = vpack.c.bf16 %v2969, %v2969
        %v3002 = vpack.c.bf16 %v2970, %v2970
        %s3003 = scalar_lea.vmem [#allocation2], 4
        %3004 = vst [vmem:[%s3003] sm:$0xf] %v2971
        %3005 = vst [vmem:[%s3003 + $0x4] sm:$0xf] %v2972
        %3006 = vst [vmem:[%s3003 + $0x8] sm:$0xf] %v2973
        %3007 = vst [vmem:[%s3003 + $0xc] sm:$0xf] %v2974
        %3008 = vst [vmem:[%s3003 + $0x10] sm:$0xf] %v2975
        %3009 = vst [vmem:[%s3003 + $0x14] sm:$0xf] %v2976
        %3010 = vst [vmem:[%s3003 + $0x18] sm:$0xf] %v2977
        %3011 = vst [vmem:[%s3003 + $0x1c] sm:$0xf] %v2978
        %3012 = vst [vmem:[%s3003 + $0x28] sm:$0xf] %v2979
        %3013 = vst [vmem:[%s3003 + $0x2c] sm:$0xf] %v2980
        %3014 = vst [vmem:[%s3003 + $0x30] sm:$0xf] %v2981
        %3015 = vst [vmem:[%s3003 + $0x34] sm:$0xf] %v2982
        %3016 = vst [vmem:[%s3003 + $0x38] sm:$0xf] %v2983
        %3017 = vst [vmem:[%s3003 + $0x3c] sm:$0xf] %v2984
        %3018 = vst [vmem:[%s3003 + $0x40] sm:$0xf] %v2985
        %3019 = vst [vmem:[%s3003 + $0x44] sm:$0xf] %v2986
        %3020 = vst [vmem:[%s3003 + $0x50] sm:$0xf] %v2987
        %3021 = vst [vmem:[%s3003 + $0x54] sm:$0xf] %v2988
        %3022 = vst [vmem:[%s3003 + $0x58] sm:$0xf] %v2989
        %3023 = vst [vmem:[%s3003 + $0x5c] sm:$0xf] %v2990
        %3024 = vst [vmem:[%s3003 + $0x60] sm:$0xf] %v2991
        %3025 = vst [vmem:[%s3003 + $0x64] sm:$0xf] %v2992
        %3026 = vst [vmem:[%s3003 + $0x68] sm:$0xf] %v2993
        %3027 = vst [vmem:[%s3003 + $0x6c] sm:$0xf] %v2994
        %3028 = vst [vmem:[%s3003 + $0x78] sm:$0xf] %v2995
        %3029 = vst [vmem:[%s3003 + $0x7c] sm:$0xf] %v2996
        %3030 = vst [vmem:[%s3003 + $0x80] sm:$0xf] %v2997
        %3031 = vst [vmem:[%s3003 + $0x84] sm:$0xf] %v2998
        %3032 = vst [vmem:[%s3003 + $0x88] sm:$0xf] %v2999
        %3033 = vst [vmem:[%s3003 + $0x8c] sm:$0xf] %v3000
        %3034 = vst [vmem:[%s3003 + $0x90] sm:$0xf] %v3001
        %3035 = vst [vmem:[%s3003 + $0x94] sm:$0xf] %v3002
        %3036 = vst [vmem:[#allocation2] sm:$0xf] %v2971
        %3037 = vst [vmem:[#allocation2 + $0x28] sm:$0xf] %v2979
        %3038 = vst [vmem:[#allocation2 + $0x50] sm:$0xf] %v2987
        %3039 = vst [vmem:[#allocation2 + $0x78] sm:$0xf] %v2995
        %s3040 = scalar_lea.vmem [#allocation2], 36
        %3041 = vst [vmem:[%s3040] sm:$0xf] %v2978
        %3042 = vst [vmem:[%s3040 + $0x28] sm:$0xf] %v2986
        %3043 = vst [vmem:[%s3040 + $0x50] sm:$0xf] %v2994
        %3044 = vst [vmem:[%s3040 + $0x78] sm:$0xf] %v3002
        %v3045 = vld [vmem:[#allocation2] sm:$0xf]
        %v3046 = vld [vmem:[#allocation2 + $0x4] sm:$0xf]
        %v3047 = vld [vmem:[#allocation2 + $0x8] sm:$0xf]
        %v3048 = vld [vmem:[#allocation2 + $0xc] sm:$0xf]
        %v3049 = vld [vmem:[#allocation2 + $0x10] sm:$0xf]
        %v3050 = vld [vmem:[#allocation2 + $0x14] sm:$0xf]
        %v3051 = vld [vmem:[#allocation2 + $0x18] sm:$0xf]
        %v3052 = vld [vmem:[#allocation2 + $0x1c] sm:$0xf]
        %v3053 = vld [vmem:[#allocation2 + $0x28] sm:$0xf]
        %v3054 = vld [vmem:[#allocation2 + $0x2c] sm:$0xf]
        %v3055 = vld [vmem:[#allocation2 + $0x30] sm:$0xf]
        %v3056 = vld [vmem:[#allocation2 + $0x34] sm:$0xf]
        %v3057 = vld [vmem:[#allocation2 + $0x38] sm:$0xf]
        %v3058 = vld [vmem:[#allocation2 + $0x3c] sm:$0xf]
        %v3059 = vld [vmem:[#allocation2 + $0x40] sm:$0xf]
        %v3060 = vld [vmem:[#allocation2 + $0x44] sm:$0xf]
        %v3061 = vld [vmem:[#allocation2 + $0x50] sm:$0xf]
        %v3062 = vld [vmem:[#allocation2 + $0x54] sm:$0xf]
        %v3063 = vld [vmem:[#allocation2 + $0x58] sm:$0xf]
        %v3064 = vld [vmem:[#allocation2 + $0x5c] sm:$0xf]
        %v3065 = vld [vmem:[#allocation2 + $0x60] sm:$0xf]
        %v3066 = vld [vmem:[#allocation2 + $0x64] sm:$0xf]
        %v3067 = vld [vmem:[#allocation2 + $0x68] sm:$0xf]
        %v3068 = vld [vmem:[#allocation2 + $0x6c] sm:$0xf]
        %v3069 = vld [vmem:[#allocation2 + $0x78] sm:$0xf]
        %v3070 = vld [vmem:[#allocation2 + $0x7c] sm:$0xf]
        %v3071 = vld [vmem:[#allocation2 + $0x80] sm:$0xf]
        %v3072 = vld [vmem:[#allocation2 + $0x84] sm:$0xf]
        %v3073 = vld [vmem:[#allocation2 + $0x88] sm:$0xf]
        %v3074 = vld [vmem:[#allocation2 + $0x8c] sm:$0xf]
        %v3075 = vld [vmem:[#allocation2 + $0x90] sm:$0xf]
        %v3076 = vld [vmem:[#allocation2 + $0x94] sm:$0xf]
        %v3077 = vld [vmem:[#allocation15] sm:$0xf]
        %v3078 = vld [vmem:[#allocation15 + $0x4] sm:$0xf]
        %v3079 = vld [vmem:[#allocation15 + $0x8] sm:$0xf]
        %v3080 = vld [vmem:[#allocation15 + $0xc] sm:$0xf]
        %v3081 = vld [vmem:[#allocation15 + $0x10] sm:$0xf]
        %v3082 = vld [vmem:[#allocation15 + $0x14] sm:$0xf]
        %v3083 = vld [vmem:[#allocation15 + $0x18] sm:$0xf]
        %v3084 = vld [vmem:[#allocation15 + $0x1c] sm:$0xf]
        %v3085 = vld [vmem:[#allocation15 + $0x20] sm:$0xf]
        %v3086 = vld [vmem:[#allocation15 + $0x24] sm:$0xf]
        %v3087 = vld [vmem:[#allocation15 + $0x28] sm:$0xf]
        %v3088 = vld [vmem:[#allocation15 + $0x2c] sm:$0xf]
        %v3089 = vld [vmem:[#allocation15 + $0x30] sm:$0xf]
        %v3090 = vld [vmem:[#allocation15 + $0x34] sm:$0xf]
        %v3091 = vld [vmem:[#allocation15 + $0x38] sm:$0xf]
        %v3092 = vld [vmem:[#allocation15 + $0x3c] sm:$0xf]
        %v3093 = vld [vmem:[%s3003] sm:$0xf]
        %v3094 = vld [vmem:[%s3003 + $0x4] sm:$0xf]
        %v3095 = vld [vmem:[%s3003 + $0x8] sm:$0xf]
        %v3096 = vld [vmem:[%s3003 + $0xc] sm:$0xf]
        %v3097 = vld [vmem:[%s3003 + $0x10] sm:$0xf]
        %v3098 = vld [vmem:[%s3003 + $0x14] sm:$0xf]
        %v3099 = vld [vmem:[%s3003 + $0x18] sm:$0xf]
        %v3100 = vld [vmem:[%s3003 + $0x1c] sm:$0xf]
        %v3101 = vld [vmem:[%s3003 + $0x28] sm:$0xf]
        %v3102 = vld [vmem:[%s3003 + $0x2c] sm:$0xf]
        %v3103 = vld [vmem:[%s3003 + $0x30] sm:$0xf]
        %v3104 = vld [vmem:[%s3003 + $0x34] sm:$0xf]
        %v3105 = vld [vmem:[%s3003 + $0x38] sm:$0xf]
        %v3106 = vld [vmem:[%s3003 + $0x3c] sm:$0xf]
        %v3107 = vld [vmem:[%s3003 + $0x40] sm:$0xf]
        %v3108 = vld [vmem:[%s3003 + $0x44] sm:$0xf]
        %v3109 = vld [vmem:[%s3003 + $0x50] sm:$0xf]
        %v3110 = vld [vmem:[%s3003 + $0x54] sm:$0xf]
        %v3111 = vld [vmem:[%s3003 + $0x58] sm:$0xf]
        %v3112 = vld [vmem:[%s3003 + $0x5c] sm:$0xf]
        %v3113 = vld [vmem:[%s3003 + $0x60] sm:$0xf]
        %v3114 = vld [vmem:[%s3003 + $0x64] sm:$0xf]
        %v3115 = vld [vmem:[%s3003 + $0x68] sm:$0xf]
        %v3116 = vld [vmem:[%s3003 + $0x6c] sm:$0xf]
        %v3117 = vld [vmem:[%s3003 + $0x78] sm:$0xf]
        %v3118 = vld [vmem:[%s3003 + $0x7c] sm:$0xf]
        %v3119 = vld [vmem:[%s3003 + $0x80] sm:$0xf]
        %v3120 = vld [vmem:[%s3003 + $0x84] sm:$0xf]
        %v3121 = vld [vmem:[%s3003 + $0x88] sm:$0xf]
        %v3122 = vld [vmem:[%s3003 + $0x8c] sm:$0xf]
        %v3123 = vld [vmem:[%s3003 + $0x90] sm:$0xf]
        %v3124 = vld [vmem:[%s3003 + $0x94] sm:$0xf]
        %s3125 = scalar_lea.vmem [#allocation15], 64
        %v3126 = vld [vmem:[%s3125] sm:$0xf]
        %v3127 = vld [vmem:[%s3125 + $0x4] sm:$0xf]
        %v3128 = vld [vmem:[%s3125 + $0x8] sm:$0xf]
        %v3129 = vld [vmem:[%s3125 + $0xc] sm:$0xf]
        %v3130 = vld [vmem:[%s3125 + $0x10] sm:$0xf]
        %v3131 = vld [vmem:[%s3125 + $0x14] sm:$0xf]
        %v3132 = vld [vmem:[%s3125 + $0x18] sm:$0xf]
        %v3133 = vld [vmem:[%s3125 + $0x1c] sm:$0xf]
        %v3134 = vld [vmem:[%s3125 + $0x20] sm:$0xf]
        %v3135 = vld [vmem:[%s3125 + $0x24] sm:$0xf]
        %v3136 = vld [vmem:[%s3125 + $0x28] sm:$0xf]
        %v3137 = vld [vmem:[%s3125 + $0x2c] sm:$0xf]
        %v3138 = vld [vmem:[%s3125 + $0x30] sm:$0xf]
        %v3139 = vld [vmem:[%s3125 + $0x34] sm:$0xf]
        %v3140 = vld [vmem:[%s3125 + $0x38] sm:$0xf]
        %v3141 = vld [vmem:[%s3125 + $0x3c] sm:$0xf]
        %v3174 = vunpack.c.l.b16 %v3093
        %v3175 = vunpack.c.l.b16 %v3094
        %v3176 = vunpack.c.l.b16 %v3095
        %v3177 = vunpack.c.l.b16 %v3096
        %v3178 = vunpack.c.l.b16 %v3097
        %v3179 = vunpack.c.l.b16 %v3098
        %v3180 = vunpack.c.l.b16 %v3099
        %v3181 = vunpack.c.l.b16 %v3100
        %v3182 = vunpack.c.l.b16 %v3101
        %v3183 = vunpack.c.l.b16 %v3102
        %v3184 = vunpack.c.l.b16 %v3103
        %v3185 = vunpack.c.l.b16 %v3104
        %v3186 = vunpack.c.l.b16 %v3105
        %v3187 = vunpack.c.l.b16 %v3106
        %v3188 = vunpack.c.l.b16 %v3107
        %v3189 = vunpack.c.l.b16 %v3108
        %v3190 = vunpack.c.l.b16 %v3109
        %v3191 = vunpack.c.l.b16 %v3110
        %v3192 = vunpack.c.l.b16 %v3111
        %v3193 = vunpack.c.l.b16 %v3112
        %v3194 = vunpack.c.l.b16 %v3113
        %v3195 = vunpack.c.l.b16 %v3114
        %v3196 = vunpack.c.l.b16 %v3115
        %v3197 = vunpack.c.l.b16 %v3116
        %v3198 = vunpack.c.l.b16 %v3117
        %v3199 = vunpack.c.l.b16 %v3118
        %v3200 = vunpack.c.l.b16 %v3119
        %v3201 = vunpack.c.l.b16 %v3120
        %v3202 = vunpack.c.l.b16 %v3121
        %v3203 = vunpack.c.l.b16 %v3122
        %v3204 = vunpack.c.l.b16 %v3123
        %v3205 = vunpack.c.l.b16 %v3124
        %v3206 = vpack.c.b16 %v3175, %v3174
        %v3207 = vpack.c.b16 %v3177, %v3176
        %v3208 = vpack.c.b16 %v3179, %v3178
        %v3209 = vpack.c.b16 %v3181, %v3180
        %v3210 = vpack.c.b16 %v3183, %v3182
        %v3211 = vpack.c.b16 %v3185, %v3184
        %v3212 = vpack.c.b16 %v3187, %v3186
        %v3213 = vpack.c.b16 %v3189, %v3188
        %v3214 = vpack.c.b16 %v3191, %v3190
        %v3215 = vpack.c.b16 %v3193, %v3192
        %v3216 = vpack.c.b16 %v3195, %v3194
        %v3217 = vpack.c.b16 %v3197, %v3196
        %v3218 = vpack.c.b16 %v3199, %v3198
        %v3219 = vpack.c.b16 %v3201, %v3200
        %v3220 = vpack.c.b16 %v3203, %v3202
        %v3221 = vpack.c.b16 %v3205, %v3204
        %v3254 = vunpack.c.l.b16 %v3126
        %v3255 = vunpack.c.l.b16 %v3127
        %v3256 = vunpack.c.l.b16 %v3128
        %v3257 = vunpack.c.l.b16 %v3129
        %v3258 = vunpack.c.l.b16 %v3130
        %v3259 = vunpack.c.l.b16 %v3131
        %v3260 = vunpack.c.l.b16 %v3132
        %v3261 = vunpack.c.l.b16 %v3133
        %v3262 = vunpack.c.l.b16 %v3134
        %v3263 = vunpack.c.l.b16 %v3135
        %v3264 = vunpack.c.l.b16 %v3136
        %v3265 = vunpack.c.l.b16 %v3137
        %v3266 = vunpack.c.l.b16 %v3138
        %v3267 = vunpack.c.l.b16 %v3139
        %v3268 = vunpack.c.l.b16 %v3140
        %v3269 = vunpack.c.l.b16 %v3141
        %v3270 = vpack.c.b16 %v3255, %v3254
        %v3271 = vpack.c.b16 %v3257, %v3256
        %v3272 = vpack.c.b16 %v3259, %v3258
        %v3273 = vpack.c.b16 %v3261, %v3260
        %v3274 = vpack.c.b16 %v3263, %v3262
        %v3275 = vpack.c.b16 %v3265, %v3264
        %v3276 = vpack.c.b16 %v3267, %v3266
        %v3277 = vpack.c.b16 %v3269, %v3268
        %3286 = vmatprep.subr.bf16.mxu0 0
        %3287 = vmatpush1.bf16.msra.mxu0 %v3270
        %3288 = vmatprep.subr.bf16.mxu0 0
        %3289 = vmatpush1.bf16.msra.mxu0 %v3271
        %3290 = vmatprep.subr.bf16.mxu0 0
        %3291 = vmatpush1.bf16.msra.mxu0 %v3272
        %3292 = vmatprep.subr.bf16.mxu0 0
        %3293 = vmatpush1.bf16.msra.mxu0 %v3273
        %3294 = vmatprep.subr.bf16.mxu0 0
        %3295 = vmatpush1.bf16.msra.mxu0 %v3274
        %3296 = vmatprep.subr.bf16.mxu0 0
        %3297 = vmatpush1.bf16.msra.mxu0 %v3275
        %3298 = vmatprep.subr.bf16.mxu0 0
        %3299 = vmatpush1.bf16.msra.mxu0 %v3276
        %3300 = vmatprep.subr.bf16.mxu0 0
        %3301 = vmatpush1.bf16.msra.mxu0 %v3277
        %3302 = vmatprep.subr.bf16.mxu0 0
        %3303 = vmatpush1.bf16.msra.mxu0 0
        %3304 = vmatprep.subr.bf16.mxu0 0
        %3305 = vmatpush1.bf16.msra.mxu0 0
        %3306 = vmatprep.subr.bf16.mxu0 0
        %3307 = vmatpush1.bf16.msra.mxu0 0
        %3308 = vmatprep.subr.bf16.mxu0 0
        %3309 = vmatpush1.bf16.msra.mxu0 0
        %3310 = vmatprep.subr.bf16.mxu0 0
        %3311 = vmatpush1.bf16.msra.mxu0 0
        %3312 = vmatprep.subr.bf16.mxu0 0
        %3313 = vmatpush1.bf16.msra.mxu0 0
        %3314 = vmatprep.subr.bf16.mxu0 0
        %3315 = vmatpush1.bf16.msra.mxu0 0
        %3316 = vmatprep.subr.bf16.mxu0 0
        %3317 = vmatpush1.bf16.msra.mxu0 0
        %3318 = vmatprep.mubr.bf16.mxu0 0
        %3319 = vmatmul.mubr.bf16.gmra.mrb[0].mxu0 %v3206
        %v3320 = vpop.f32.mrb[0].mxu0
        %v3321 = vadd.f32 0.0, %v3320
        %v3322 = vpop.f32.mrb[0].mxu0
        %v3323 = vpop.f32.mrb[0].mxu0
        %v3324 = vadd.f32 0.0, %v3323
        %v3325 = vpop.f32.mrb[0].mxu0
        %3326 = vmatprep.mubr.bf16.mxu0 0
        %3327 = vmatmul.mubr.bf16.gmra.mrb[0].mxu0 %v3207
        %v3328 = vpop.f32.mrb[0].mxu0
        %v3329 = vadd.f32 0.0, %v3328
        %v3330 = vpop.f32.mrb[0].mxu0
        %v3331 = vpop.f32.mrb[0].mxu0
        %v3332 = vadd.f32 0.0, %v3331
        %v3333 = vpop.f32.mrb[0].mxu0
        %3334 = vmatprep.mubr.bf16.mxu0 0
        %3335 = vmatmul.mubr.bf16.gmra.mrb[0].mxu0 %v3208
        %v3336 = vpop.f32.mrb[0].mxu0
        %v3337 = vadd.f32 0.0, %v3336
        %v3338 = vpop.f32.mrb[0].mxu0
        %v3339 = vpop.f32.mrb[0].mxu0
        %v3340 = vadd.f32 0.0, %v3339
        %v3341 = vpop.f32.mrb[0].mxu0
        %3342 = vmatprep.mubr.bf16.mxu0 0
        %3343 = vmatmul.mubr.bf16.gmra.mrb[0].mxu0 %v3209
        %v3344 = vpop.f32.mrb[0].mxu0
        %v3345 = vadd.f32 0.0, %v3344
        %v3346 = vpop.f32.mrb[0].mxu0
        %v3347 = vpop.f32.mrb[0].mxu0
        %v3348 = vadd.f32 0.0, %v3347
        %v3349 = vpop.f32.mrb[0].mxu0
        %3350 = vmatprep.mubr.bf16.mxu0 0
        %3351 = vmatmul.mubr.bf16.gmra.mrb[0].mxu0 %v3210
        %v3352 = vpop.f32.mrb[0].mxu0
        %v3353 = vadd.f32 0.0, %v3352
        %v3354 = vpop.f32.mrb[0].mxu0
        %v3355 = vpop.f32.mrb[0].mxu0
        %v3356 = vadd.f32 0.0, %v3355
        %v3357 = vpop.f32.mrb[0].mxu0
        %3358 = vmatprep.mubr.bf16.mxu0 0
        %3359 = vmatmul.mubr.bf16.gmra.mrb[0].mxu0 %v3211
        %v3360 = vpop.f32.mrb[0].mxu0
        %v3361 = vadd.f32 0.0, %v3360
        %v3362 = vpop.f32.mrb[0].mxu0
        %v3363 = vpop.f32.mrb[0].mxu0
        %v3364 = vadd.f32 0.0, %v3363
        %v3365 = vpop.f32.mrb[0].mxu0
        %3366 = vmatprep.mubr.bf16.mxu0 0
        %3367 = vmatmul.mubr.bf16.gmra.mrb[0].mxu0 %v3212
        %v3368 = vpop.f32.mrb[0].mxu0
        %v3369 = vadd.f32 0.0, %v3368
        %v3370 = vpop.f32.mrb[0].mxu0
        %v3371 = vpop.f32.mrb[0].mxu0
        %v3372 = vadd.f32 0.0, %v3371
        %v3373 = vpop.f32.mrb[0].mxu0
        %3374 = vmatprep.mubr.bf16.mxu0 0
        %3375 = vmatmul.mubr.bf16.gmra.mrb[0].mxu0 %v3213
        %v3376 = vpop.f32.mrb[0].mxu0
        %v3377 = vadd.f32 0.0, %v3376
        %v3378 = vpop.f32.mrb[0].mxu0
        %v3379 = vpop.f32.mrb[0].mxu0
        %v3380 = vadd.f32 0.0, %v3379
        %v3381 = vpop.f32.mrb[0].mxu0
        %3382 = vmatprep.mubr.bf16.mxu0 0
        %3383 = vmatmul.mubr.bf16.gmra.mrb[0].mxu0 %v3214
        %v3384 = vpop.f32.mrb[0].mxu0
        %v3385 = vadd.f32 0.0, %v3384
        %v3386 = vpop.f32.mrb[0].mxu0
        %v3387 = vpop.f32.mrb[0].mxu0
        %v3388 = vadd.f32 0.0, %v3387
        %v3389 = vpop.f32.mrb[0].mxu0
        %3390 = vmatprep.mubr.bf16.mxu0 0
        %3391 = vmatmul.mubr.bf16.gmra.mrb[0].mxu0 %v3215
        %v3392 = vpop.f32.mrb[0].mxu0
        %v3393 = vadd.f32 0.0, %v3392
        %v3394 = vpop.f32.mrb[0].mxu0
        %v3395 = vpop.f32.mrb[0].mxu0
        %v3396 = vadd.f32 0.0, %v3395
        %v3397 = vpop.f32.mrb[0].mxu0
        %3398 = vmatprep.mubr.bf16.mxu0 0
        %3399 = vmatmul.mubr.bf16.gmra.mrb[0].mxu0 %v3216
        %v3400 = vpop.f32.mrb[0].mxu0
        %v3401 = vadd.f32 0.0, %v3400
        %v3402 = vpop.f32.mrb[0].mxu0
        %v3403 = vpop.f32.mrb[0].mxu0
        %v3404 = vadd.f32 0.0, %v3403
        %v3405 = vpop.f32.mrb[0].mxu0
        %3406 = vmatprep.mubr.bf16.mxu0 0
        %3407 = vmatmul.mubr.bf16.gmra.mrb[0].mxu0 %v3217
        %v3408 = vpop.f32.mrb[0].mxu0
        %v3409 = vadd.f32 0.0, %v3408
        %v3410 = vpop.f32.mrb[0].mxu0
        %v3411 = vpop.f32.mrb[0].mxu0
        %v3412 = vadd.f32 0.0, %v3411
        %v3413 = vpop.f32.mrb[0].mxu0
        %3414 = vmatprep.mubr.bf16.mxu0 0
        %3415 = vmatmul.mubr.bf16.gmra.mrb[0].mxu0 %v3218
        %v3416 = vpop.f32.mrb[0].mxu0
        %v3417 = vadd.f32 0.0, %v3416
        %v3418 = vpop.f32.mrb[0].mxu0
        %v3419 = vpop.f32.mrb[0].mxu0
        %v3420 = vadd.f32 0.0, %v3419
        %v3421 = vpop.f32.mrb[0].mxu0
        %3422 = vmatprep.mubr.bf16.mxu0 0
        %3423 = vmatmul.mubr.bf16.gmra.mrb[0].mxu0 %v3219
        %v3424 = vpop.f32.mrb[0].mxu0
        %v3425 = vadd.f32 0.0, %v3424
        %v3426 = vpop.f32.mrb[0].mxu0
        %v3427 = vpop.f32.mrb[0].mxu0
        %v3428 = vadd.f32 0.0, %v3427
        %v3429 = vpop.f32.mrb[0].mxu0
        %3430 = vmatprep.mubr.bf16.mxu0 0
        %3431 = vmatmul.mubr.bf16.gmra.mrb[0].mxu0 %v3220
        %v3432 = vpop.f32.mrb[0].mxu0
        %v3433 = vadd.f32 0.0, %v3432
        %v3434 = vpop.f32.mrb[0].mxu0
        %v3435 = vpop.f32.mrb[0].mxu0
        %v3436 = vadd.f32 0.0, %v3435
        %v3437 = vpop.f32.mrb[0].mxu0
        %3438 = vmatprep.mubr.bf16.mxu0 0
        %3439 = vmatmul.mubr.bf16.gmra.mrb[0].mxu0 %v3221
        %v3440 = vpop.f32.mrb[0].mxu0
        %v3441 = vadd.f32 0.0, %v3440
        %v3442 = vpop.f32.mrb[0].mxu0
        %v3443 = vpop.f32.mrb[0].mxu0
        %v3444 = vadd.f32 0.0, %v3443
        %v3445 = vpop.f32.mrb[0].mxu0
        %3446 = vdwg.mxu0
        %v3479 = vunpack.c.l.b16 %v3045
        %v3480 = vunpack.c.l.b16 %v3046
        %v3481 = vunpack.c.l.b16 %v3047
        %v3482 = vunpack.c.l.b16 %v3048
        %v3483 = vunpack.c.l.b16 %v3049
        %v3484 = vunpack.c.l.b16 %v3050
        %v3485 = vunpack.c.l.b16 %v3051
        %v3486 = vunpack.c.l.b16 %v3052
        %v3487 = vunpack.c.l.b16 %v3053
        %v3488 = vunpack.c.l.b16 %v3054
        %v3489 = vunpack.c.l.b16 %v3055
        %v3490 = vunpack.c.l.b16 %v3056
        %v3491 = vunpack.c.l.b16 %v3057
        %v3492 = vunpack.c.l.b16 %v3058
        %v3493 = vunpack.c.l.b16 %v3059
        %v3494 = vunpack.c.l.b16 %v3060
        %v3495 = vunpack.c.l.b16 %v3061
        %v3496 = vunpack.c.l.b16 %v3062
        %v3497 = vunpack.c.l.b16 %v3063
        %v3498 = vunpack.c.l.b16 %v3064
        %v3499 = vunpack.c.l.b16 %v3065
        %v3500 = vunpack.c.l.b16 %v3066
        %v3501 = vunpack.c.l.b16 %v3067
        %v3502 = vunpack.c.l.b16 %v3068
        %v3503 = vunpack.c.l.b16 %v3069
        %v3504 = vunpack.c.l.b16 %v3070
        %v3505 = vunpack.c.l.b16 %v3071
        %v3506 = vunpack.c.l.b16 %v3072
        %v3507 = vunpack.c.l.b16 %v3073
        %v3508 = vunpack.c.l.b16 %v3074
        %v3509 = vunpack.c.l.b16 %v3075
        %v3510 = vunpack.c.l.b16 %v3076
        %v3511 = vpack.c.b16 %v3480, %v3479
        %v3512 = vpack.c.b16 %v3482, %v3481
        %v3513 = vpack.c.b16 %v3484, %v3483
        %v3514 = vpack.c.b16 %v3486, %v3485
        %v3515 = vpack.c.b16 %v3488, %v3487
        %v3516 = vpack.c.b16 %v3490, %v3489
        %v3517 = vpack.c.b16 %v3492, %v3491
        %v3518 = vpack.c.b16 %v3494, %v3493
        %v3519 = vpack.c.b16 %v3496, %v3495
        %v3520 = vpack.c.b16 %v3498, %v3497
        %v3521 = vpack.c.b16 %v3500, %v3499
        %v3522 = vpack.c.b16 %v3502, %v3501
        %v3523 = vpack.c.b16 %v3504, %v3503
        %v3524 = vpack.c.b16 %v3506, %v3505
        %v3525 = vpack.c.b16 %v3508, %v3507
        %v3526 = vpack.c.b16 %v3510, %v3509
        %v3559 = vunpack.c.l.b16 %v3077
        %v3560 = vunpack.c.l.b16 %v3078
        %v3561 = vunpack.c.l.b16 %v3079
        %v3562 = vunpack.c.l.b16 %v3080
        %v3563 = vunpack.c.l.b16 %v3081
        %v3564 = vunpack.c.l.b16 %v3082
        %v3565 = vunpack.c.l.b16 %v3083
        %v3566 = vunpack.c.l.b16 %v3084
        %v3567 = vunpack.c.l.b16 %v3085
        %v3568 = vunpack.c.l.b16 %v3086
        %v3569 = vunpack.c.l.b16 %v3087
        %v3570 = vunpack.c.l.b16 %v3088
        %v3571 = vunpack.c.l.b16 %v3089
        %v3572 = vunpack.c.l.b16 %v3090
        %v3573 = vunpack.c.l.b16 %v3091
        %v3574 = vunpack.c.l.b16 %v3092
        %v3575 = vpack.c.b16 %v3560, %v3559
        %v3576 = vpack.c.b16 %v3562, %v3561
        %v3577 = vpack.c.b16 %v3564, %v3563
        %v3578 = vpack.c.b16 %v3566, %v3565
        %v3579 = vpack.c.b16 %v3568, %v3567
        %v3580 = vpack.c.b16 %v3570, %v3569
        %v3581 = vpack.c.b16 %v3572, %v3571
        %v3582 = vpack.c.b16 %v3574, %v3573
        %3591 = vmatprep.subr.bf16.mxu0 0
        %3592 = vmatpush1.bf16.msra.mxu0 %v3575
        %3593 = vmatprep.subr.bf16.mxu0 0
        %3594 = vmatpush1.bf16.msra.mxu0 %v3576
        %3595 = vmatprep.subr.bf16.mxu0 0
        %3596 = vmatpush1.bf16.msra.mxu0 %v3577
        %3597 = vmatprep.subr.bf16.mxu0 0
        %3598 = vmatpush1.bf16.msra.mxu0 %v3578
        %3599 = vmatprep.subr.bf16.mxu0 0
        %3600 = vmatpush1.bf16.msra.mxu0 %v3579
        %3601 = vmatprep.subr.bf16.mxu0 0
        %3602 = vmatpush1.bf16.msra.mxu0 %v3580
        %3603 = vmatprep.subr.bf16.mxu0 0
        %3604 = vmatpush1.bf16.msra.mxu0 %v3581
        %3605 = vmatprep.subr.bf16.mxu0 0
        %3606 = vmatpush1.bf16.msra.mxu0 %v3582
        %3607 = vmatprep.subr.bf16.mxu0 0
        %3608 = vmatpush1.bf16.msra.mxu0 0
        %3609 = vmatprep.subr.bf16.mxu0 0
        %3610 = vmatpush1.bf16.msra.mxu0 0
        %3611 = vmatprep.subr.bf16.mxu0 0
        %3612 = vmatpush1.bf16.msra.mxu0 0
        %3613 = vmatprep.subr.bf16.mxu0 0
        %3614 = vmatpush1.bf16.msra.mxu0 0
        %3615 = vmatprep.subr.bf16.mxu0 0
        %3616 = vmatpush1.bf16.msra.mxu0 0
        %3617 = vmatprep.subr.bf16.mxu0 0
        %3618 = vmatpush1.bf16.msra.mxu0 0
        %3619 = vmatprep.subr.bf16.mxu0 0
        %3620 = vmatpush1.bf16.msra.mxu0 0
        %3621 = vmatprep.subr.bf16.mxu0 0
        %3622 = vmatpush1.bf16.msra.mxu0 0
        %3623 = vmatprep.mubr.bf16.mxu0 0
        %3624 = vmatmul.mubr.bf16.gmra.mrb[0].mxu0 %v3511
        %v3625 = vpop.f32.mrb[0].mxu0
        %v3626 = vadd.f32 %v3321, %v3625
        %v3627 = vpop.f32.mrb[0].mxu0
        %v3628 = vpop.f32.mrb[0].mxu0
        %v3629 = vadd.f32 %v3324, %v3628
        %v3630 = vpop.f32.mrb[0].mxu0
        %3631 = vmatprep.mubr.bf16.mxu0 0
        %3632 = vmatmul.mubr.bf16.gmra.mrb[0].mxu0 %v3512
        %v3633 = vpop.f32.mrb[0].mxu0
        %v3634 = vadd.f32 %v3329, %v3633
        %v3635 = vpop.f32.mrb[0].mxu0
        %v3636 = vpop.f32.mrb[0].mxu0
        %v3637 = vadd.f32 %v3332, %v3636
        %v3638 = vpop.f32.mrb[0].mxu0
        %3639 = vmatprep.mubr.bf16.mxu0 0
        %3640 = vmatmul.mubr.bf16.gmra.mrb[0].mxu0 %v3513
        %v3641 = vpop.f32.mrb[0].mxu0
        %v3642 = vadd.f32 %v3337, %v3641
        %v3643 = vpop.f32.mrb[0].mxu0
        %v3644 = vpop.f32.mrb[0].mxu0
        %v3645 = vadd.f32 %v3340, %v3644
        %v3646 = vpop.f32.mrb[0].mxu0
        %3647 = vmatprep.mubr.bf16.mxu0 0
        %3648 = vmatmul.mubr.bf16.gmra.mrb[0].mxu0 %v3514
        %v3649 = vpop.f32.mrb[0].mxu0
        %v3650 = vadd.f32 %v3345, %v3649
        %v3651 = vpop.f32.mrb[0].mxu0
        %v3652 = vpop.f32.mrb[0].mxu0
        %v3653 = vadd.f32 %v3348, %v3652
        %v3654 = vpop.f32.mrb[0].mxu0
        %3655 = vmatprep.mubr.bf16.mxu0 0
        %3656 = vmatmul.mubr.bf16.gmra.mrb[0].mxu0 %v3515
        %v3657 = vpop.f32.mrb[0].mxu0
        %v3658 = vadd.f32 %v3353, %v3657
        %v3659 = vpop.f32.mrb[0].mxu0
        %v3660 = vpop.f32.mrb[0].mxu0
        %v3661 = vadd.f32 %v3356, %v3660
        %v3662 = vpop.f32.mrb[0].mxu0
        %3663 = vmatprep.mubr.bf16.mxu0 0
        %3664 = vmatmul.mubr.bf16.gmra.mrb[0].mxu0 %v3516
        %v3665 = vpop.f32.mrb[0].mxu0
        %v3666 = vadd.f32 %v3361, %v3665
        %v3667 = vpop.f32.mrb[0].mxu0
        %v3668 = vpop.f32.mrb[0].mxu0
        %v3669 = vadd.f32 %v3364, %v3668
        %v3670 = vpop.f32.mrb[0].mxu0
        %3671 = vmatprep.mubr.bf16.mxu0 0
        %3672 = vmatmul.mubr.bf16.gmra.mrb[0].mxu0 %v3517
        %v3673 = vpop.f32.mrb[0].mxu0
        %v3674 = vadd.f32 %v3369, %v3673
        %v3675 = vpop.f32.mrb[0].mxu0
        %v3676 = vpop.f32.mrb[0].mxu0
        %v3677 = vadd.f32 %v3372, %v3676
        %v3678 = vpop.f32.mrb[0].mxu0
        %3679 = vmatprep.mubr.bf16.mxu0 0
        %3680 = vmatmul.mubr.bf16.gmra.mrb[0].mxu0 %v3518
        %v3681 = vpop.f32.mrb[0].mxu0
        %v3682 = vadd.f32 %v3377, %v3681
        %v3683 = vpop.f32.mrb[0].mxu0
        %v3684 = vpop.f32.mrb[0].mxu0
        %v3685 = vadd.f32 %v3380, %v3684
        %v3686 = vpop.f32.mrb[0].mxu0
        %3687 = vmatprep.mubr.bf16.mxu0 0
        %3688 = vmatmul.mubr.bf16.gmra.mrb[0].mxu0 %v3519
        %v3689 = vpop.f32.mrb[0].mxu0
        %v3690 = vadd.f32 %v3385, %v3689
        %v3691 = vpop.f32.mrb[0].mxu0
        %v3692 = vpop.f32.mrb[0].mxu0
        %v3693 = vadd.f32 %v3388, %v3692
        %v3694 = vpop.f32.mrb[0].mxu0
        %3695 = vmatprep.mubr.bf16.mxu0 0
        %3696 = vmatmul.mubr.bf16.gmra.mrb[0].mxu0 %v3520
        %v3697 = vpop.f32.mrb[0].mxu0
        %v3698 = vadd.f32 %v3393, %v3697
        %v3699 = vpop.f32.mrb[0].mxu0
        %v3700 = vpop.f32.mrb[0].mxu0
        %v3701 = vadd.f32 %v3396, %v3700
        %v3702 = vpop.f32.mrb[0].mxu0
        %3703 = vmatprep.mubr.bf16.mxu0 0
        %3704 = vmatmul.mubr.bf16.gmra.mrb[0].mxu0 %v3521
        %v3705 = vpop.f32.mrb[0].mxu0
        %v3706 = vadd.f32 %v3401, %v3705
        %v3707 = vpop.f32.mrb[0].mxu0
        %v3708 = vpop.f32.mrb[0].mxu0
        %v3709 = vadd.f32 %v3404, %v3708
        %v3710 = vpop.f32.mrb[0].mxu0
        %3711 = vmatprep.mubr.bf16.mxu0 0
        %3712 = vmatmul.mubr.bf16.gmra.mrb[0].mxu0 %v3522
        %v3713 = vpop.f32.mrb[0].mxu0
        %v3714 = vadd.f32 %v3409, %v3713
        %v3715 = vpop.f32.mrb[0].mxu0
        %v3716 = vpop.f32.mrb[0].mxu0
        %v3717 = vadd.f32 %v3412, %v3716
        %v3718 = vpop.f32.mrb[0].mxu0
        %3719 = vmatprep.mubr.bf16.mxu0 0
        %3720 = vmatmul.mubr.bf16.gmra.mrb[0].mxu0 %v3523
        %v3721 = vpop.f32.mrb[0].mxu0
        %v3722 = vadd.f32 %v3417, %v3721
        %v3723 = vpop.f32.mrb[0].mxu0
        %v3724 = vpop.f32.mrb[0].mxu0
        %v3725 = vadd.f32 %v3420, %v3724
        %v3726 = vpop.f32.mrb[0].mxu0
        %3727 = vmatprep.mubr.bf16.mxu0 0
        %3728 = vmatmul.mubr.bf16.gmra.mrb[0].mxu0 %v3524
        %v3729 = vpop.f32.mrb[0].mxu0
        %v3730 = vadd.f32 %v3425, %v3729
        %v3731 = vpop.f32.mrb[0].mxu0
        %v3732 = vpop.f32.mrb[0].mxu0
        %v3733 = vadd.f32 %v3428, %v3732
        %v3734 = vpop.f32.mrb[0].mxu0
        %3735 = vmatprep.mubr.bf16.mxu0 0
        %3736 = vmatmul.mubr.bf16.gmra.mrb[0].mxu0 %v3525
        %v3737 = vpop.f32.mrb[0].mxu0
        %v3738 = vadd.f32 %v3433, %v3737
        %v3739 = vpop.f32.mrb[0].mxu0
        %v3740 = vpop.f32.mrb[0].mxu0
        %v3741 = vadd.f32 %v3436, %v3740
        %v3742 = vpop.f32.mrb[0].mxu0
        %3743 = vmatprep.mubr.bf16.mxu0 0
        %3744 = vmatmul.mubr.bf16.gmra.mrb[0].mxu0 %v3526
        %v3745 = vpop.f32.mrb[0].mxu0
        %v3746 = vadd.f32 %v3441, %v3745
        %v3747 = vpop.f32.mrb[0].mxu0
        %v3748 = vpop.f32.mrb[0].mxu0
        %v3749 = vadd.f32 %v3444, %v3748
        %v3750 = vpop.f32.mrb[0].mxu0
        %3751 = vdwg.mxu0
        %s3752 = scalar_lea.vmem [#allocation2], 8
        %v3753 = vld [vmem:[%s3752] sm:$0xf]
        %v3754 = vld [vmem:[%s3752 + $0x4] sm:$0xf]
        %v3755 = vld [vmem:[%s3752 + $0x8] sm:$0xf]
        %v3756 = vld [vmem:[%s3752 + $0xc] sm:$0xf]
        %v3757 = vld [vmem:[%s3752 + $0x10] sm:$0xf]
        %v3758 = vld [vmem:[%s3752 + $0x14] sm:$0xf]
        %v3759 = vld [vmem:[%s3752 + $0x18] sm:$0xf]
        %v3760 = vld [vmem:[%s3752 + $0x1c] sm:$0xf]
        %v3761 = vld [vmem:[%s3752 + $0x28] sm:$0xf]
        %v3762 = vld [vmem:[%s3752 + $0x2c] sm:$0xf]
        %v3763 = vld [vmem:[%s3752 + $0x30] sm:$0xf]
        %v3764 = vld [vmem:[%s3752 + $0x34] sm:$0xf]
        %v3765 = vld [vmem:[%s3752 + $0x38] sm:$0xf]
        %v3766 = vld [vmem:[%s3752 + $0x3c] sm:$0xf]
        %v3767 = vld [vmem:[%s3752 + $0x40] sm:$0xf]
        %v3768 = vld [vmem:[%s3752 + $0x44] sm:$0xf]
        %v3769 = vld [vmem:[%s3752 + $0x50] sm:$0xf]
        %v3770 = vld [vmem:[%s3752 + $0x54] sm:$0xf]
        %v3771 = vld [vmem:[%s3752 + $0x58] sm:$0xf]
        %v3772 = vld [vmem:[%s3752 + $0x5c] sm:$0xf]
        %v3773 = vld [vmem:[%s3752 + $0x60] sm:$0xf]
        %v3774 = vld [vmem:[%s3752 + $0x64] sm:$0xf]
        %v3775 = vld [vmem:[%s3752 + $0x68] sm:$0xf]
        %v3776 = vld [vmem:[%s3752 + $0x6c] sm:$0xf]
        %v3777 = vld [vmem:[%s3752 + $0x78] sm:$0xf]
        %v3778 = vld [vmem:[%s3752 + $0x7c] sm:$0xf]
        %v3779 = vld [vmem:[%s3752 + $0x80] sm:$0xf]
        %v3780 = vld [vmem:[%s3752 + $0x84] sm:$0xf]
        %v3781 = vld [vmem:[%s3752 + $0x88] sm:$0xf]
        %v3782 = vld [vmem:[%s3752 + $0x8c] sm:$0xf]
        %v3783 = vld [vmem:[%s3752 + $0x90] sm:$0xf]
        %v3784 = vld [vmem:[%s3752 + $0x94] sm:$0xf]
        %s3785 = scalar_lea.vmem [#allocation15], 128
        %v3786 = vld [vmem:[%s3785] sm:$0xf]
        %v3787 = vld [vmem:[%s3785 + $0x4] sm:$0xf]
        %v3788 = vld [vmem:[%s3785 + $0x8] sm:$0xf]
        %v3789 = vld [vmem:[%s3785 + $0xc] sm:$0xf]
        %v3790 = vld [vmem:[%s3785 + $0x10] sm:$0xf]
        %v3791 = vld [vmem:[%s3785 + $0x14] sm:$0xf]
        %v3792 = vld [vmem:[%s3785 + $0x18] sm:$0xf]
        %v3793 = vld [vmem:[%s3785 + $0x1c] sm:$0xf]
        %v3794 = vld [vmem:[%s3785 + $0x20] sm:$0xf]
        %v3795 = vld [vmem:[%s3785 + $0x24] sm:$0xf]
        %v3796 = vld [vmem:[%s3785 + $0x28] sm:$0xf]
        %v3797 = vld [vmem:[%s3785 + $0x2c] sm:$0xf]
        %v3798 = vld [vmem:[%s3785 + $0x30] sm:$0xf]
        %v3799 = vld [vmem:[%s3785 + $0x34] sm:$0xf]
        %v3800 = vld [vmem:[%s3785 + $0x38] sm:$0xf]
        %v3801 = vld [vmem:[%s3785 + $0x3c] sm:$0xf]
        %v3834 = vunpack.c.l.b16 %v3753
        %v3835 = vunpack.c.l.b16 %v3754
        %v3836 = vunpack.c.l.b16 %v3755
        %v3837 = vunpack.c.l.b16 %v3756
        %v3838 = vunpack.c.l.b16 %v3757
        %v3839 = vunpack.c.l.b16 %v3758
        %v3840 = vunpack.c.l.b16 %v3759
        %v3841 = vunpack.c.l.b16 %v3760
        %v3842 = vunpack.c.l.b16 %v3761
        %v3843 = vunpack.c.l.b16 %v3762
        %v3844 = vunpack.c.l.b16 %v3763
        %v3845 = vunpack.c.l.b16 %v3764
        %v3846 = vunpack.c.l.b16 %v3765
        %v3847 = vunpack.c.l.b16 %v3766
        %v3848 = vunpack.c.l.b16 %v3767
        %v3849 = vunpack.c.l.b16 %v3768
        %v3850 = vunpack.c.l.b16 %v3769
        %v3851 = vunpack.c.l.b16 %v3770
        %v3852 = vunpack.c.l.b16 %v3771
        %v3853 = vunpack.c.l.b16 %v3772
        %v3854 = vunpack.c.l.b16 %v3773
        %v3855 = vunpack.c.l.b16 %v3774
        %v3856 = vunpack.c.l.b16 %v3775
        %v3857 = vunpack.c.l.b16 %v3776
        %v3858 = vunpack.c.l.b16 %v3777
        %v3859 = vunpack.c.l.b16 %v3778
        %v3860 = vunpack.c.l.b16 %v3779
        %v3861 = vunpack.c.l.b16 %v3780
        %v3862 = vunpack.c.l.b16 %v3781
        %v3863 = vunpack.c.l.b16 %v3782
        %v3864 = vunpack.c.l.b16 %v3783
        %v3865 = vunpack.c.l.b16 %v3784
        %v3866 = vpack.c.b16 %v3835, %v3834
        %v3867 = vpack.c.b16 %v3837, %v3836
        %v3868 = vpack.c.b16 %v3839, %v3838
        %v3869 = vpack.c.b16 %v3841, %v3840
        %v3870 = vpack.c.b16 %v3843, %v3842
        %v3871 = vpack.c.b16 %v3845, %v3844
        %v3872 = vpack.c.b16 %v3847, %v3846
        %v3873 = vpack.c.b16 %v3849, %v3848
        %v3874 = vpack.c.b16 %v3851, %v3850
        %v3875 = vpack.c.b16 %v3853, %v3852
        %v3876 = vpack.c.b16 %v3855, %v3854
        %v3877 = vpack.c.b16 %v3857, %v3856
        %v3878 = vpack.c.b16 %v3859, %v3858
        %v3879 = vpack.c.b16 %v3861, %v3860
        %v3880 = vpack.c.b16 %v3863, %v3862
        %v3881 = vpack.c.b16 %v3865, %v3864
        %v3914 = vunpack.c.l.b16 %v3786
        %v3915 = vunpack.c.l.b16 %v3787
        %v3916 = vunpack.c.l.b16 %v3788
        %v3917 = vunpack.c.l.b16 %v3789
        %v3918 = vunpack.c.l.b16 %v3790
        %v3919 = vunpack.c.l.b16 %v3791
        %v3920 = vunpack.c.l.b16 %v3792
        %v3921 = vunpack.c.l.b16 %v3793
        %v3922 = vunpack.c.l.b16 %v3794
        %v3923 = vunpack.c.l.b16 %v3795
        %v3924 = vunpack.c.l.b16 %v3796
        %v3925 = vunpack.c.l.b16 %v3797
        %v3926 = vunpack.c.l.b16 %v3798
        %v3927 = vunpack.c.l.b16 %v3799
        %v3928 = vunpack.c.l.b16 %v3800
        %v3929 = vunpack.c.l.b16 %v3801
        %v3930 = vpack.c.b16 %v3915, %v3914
        %v3931 = vpack.c.b16 %v3917, %v3916
        %v3932 = vpack.c.b16 %v3919, %v3918
        %v3933 = vpack.c.b16 %v3921, %v3920
        %v3934 = vpack.c.b16 %v3923, %v3922
        %v3935 = vpack.c.b16 %v3925, %v3924
        %v3936 = vpack.c.b16 %v3927, %v3926
        %v3937 = vpack.c.b16 %v3929, %v3928
        %3946 = vmatprep.subr.bf16.mxu0 0
        %3947 = vmatpush1.bf16.msra.mxu0 %v3930
        %3948 = vmatprep.subr.bf16.mxu0 0
        %3949 = vmatpush1.bf16.msra.mxu0 %v3931
        %3950 = vmatprep.subr.bf16.mxu0 0
        %3951 = vmatpush1.bf16.msra.mxu0 %v3932
        %3952 = vmatprep.subr.bf16.mxu0 0
        %3953 = vmatpush1.bf16.msra.mxu0 %v3933
        %3954 = vmatprep.subr.bf16.mxu0 0
        %3955 = vmatpush1.bf16.msra.mxu0 %v3934
        %3956 = vmatprep.subr.bf16.mxu0 0
        %3957 = vmatpush1.bf16.msra.mxu0 %v3935
        %3958 = vmatprep.subr.bf16.mxu0 0
        %3959 = vmatpush1.bf16.msra.mxu0 %v3936
        %3960 = vmatprep.subr.bf16.mxu0 0
        %3961 = vmatpush1.bf16.msra.mxu0 %v3937
        %3962 = vmatprep.subr.bf16.mxu0 0
        %3963 = vmatpush1.bf16.msra.mxu0 0
        %3964 = vmatprep.subr.bf16.mxu0 0
        %3965 = vmatpush1.bf16.msra.mxu0 0
        %3966 = vmatprep.subr.bf16.mxu0 0
        %3967 = vmatpush1.bf16.msra.mxu0 0
        %3968 = vmatprep.subr.bf16.mxu0 0
        %3969 = vmatpush1.bf16.msra.mxu0 0
        %3970 = vmatprep.subr.bf16.mxu0 0
        %3971 = vmatpush1.bf16.msra.mxu0 0
        %3972 = vmatprep.subr.bf16.mxu0 0
        %3973 = vmatpush1.bf16.msra.mxu0 0
        %3974 = vmatprep.subr.bf16.mxu0 0
        %3975 = vmatpush1.bf16.msra.mxu0 0
        %3976 = vmatprep.subr.bf16.mxu0 0
        %3977 = vmatpush1.bf16.msra.mxu0 0
        %3978 = vmatprep.mubr.bf16.mxu0 0
        %3979 = vmatmul.mubr.bf16.gmra.mrb[0].mxu0 %v3866
        %v3980 = vpop.f32.mrb[0].mxu0
        %v3981 = vadd.f32 0.0, %v3980
        %v3982 = vpop.f32.mrb[0].mxu0
        %v3983 = vpop.f32.mrb[0].mxu0
        %v3984 = vadd.f32 0.0, %v3983
        %v3985 = vpop.f32.mrb[0].mxu0
        %3986 = vmatprep.mubr.bf16.mxu0 0
        %3987 = vmatmul.mubr.bf16.gmra.mrb[0].mxu0 %v3867
        %v3988 = vpop.f32.mrb[0].mxu0
        %v3989 = vadd.f32 0.0, %v3988
        %v3990 = vpop.f32.mrb[0].mxu0
        %v3991 = vpop.f32.mrb[0].mxu0
        %v3992 = vadd.f32 0.0, %v3991
        %v3993 = vpop.f32.mrb[0].mxu0
        %3994 = vmatprep.mubr.bf16.mxu0 0
        %3995 = vmatmul.mubr.bf16.gmra.mrb[0].mxu0 %v3868
        %v3996 = vpop.f32.mrb[0].mxu0
        %v3997 = vadd.f32 0.0, %v3996
        %v3998 = vpop.f32.mrb[0].mxu0
        %v3999 = vpop.f32.mrb[0].mxu0
        %v4000 = vadd.f32 0.0, %v3999
        %v4001 = vpop.f32.mrb[0].mxu0
        %4002 = vmatprep.mubr.bf16.mxu0 0
        %4003 = vmatmul.mubr.bf16.gmra.mrb[0].mxu0 %v3869
        %v4004 = vpop.f32.mrb[0].mxu0
        %v4005 = vadd.f32 0.0, %v4004
        %v4006 = vpop.f32.mrb[0].mxu0
        %v4007 = vpop.f32.mrb[0].mxu0
        %v4008 = vadd.f32 0.0, %v4007
        %v4009 = vpop.f32.mrb[0].mxu0
        %4010 = vmatprep.mubr.bf16.mxu0 0
        %4011 = vmatmul.mubr.bf16.gmra.mrb[0].mxu0 %v3870
        %v4012 = vpop.f32.mrb[0].mxu0
        %v4013 = vadd.f32 0.0, %v4012
        %v4014 = vpop.f32.mrb[0].mxu0
        %v4015 = vpop.f32.mrb[0].mxu0
        %v4016 = vadd.f32 0.0, %v4015
        %v4017 = vpop.f32.mrb[0].mxu0
        %4018 = vmatprep.mubr.bf16.mxu0 0
        %4019 = vmatmul.mubr.bf16.gmra.mrb[0].mxu0 %v3871
        %v4020 = vpop.f32.mrb[0].mxu0
        %v4021 = vadd.f32 0.0, %v4020
        %v4022 = vpop.f32.mrb[0].mxu0
        %v4023 = vpop.f32.mrb[0].mxu0
        %v4024 = vadd.f32 0.0, %v4023
        %v4025 = vpop.f32.mrb[0].mxu0
        %4026 = vmatprep.mubr.bf16.mxu0 0
        %4027 = vmatmul.mubr.bf16.gmra.mrb[0].mxu0 %v3872
        %v4028 = vpop.f32.mrb[0].mxu0
        %v4029 = vadd.f32 0.0, %v4028
        %v4030 = vpop.f32.mrb[0].mxu0
        %v4031 = vpop.f32.mrb[0].mxu0
        %v4032 = vadd.f32 0.0, %v4031
        %v4033 = vpop.f32.mrb[0].mxu0
        %4034 = vmatprep.mubr.bf16.mxu0 0
        %4035 = vmatmul.mubr.bf16.gmra.mrb[0].mxu0 %v3873
        %v4036 = vpop.f32.mrb[0].mxu0
        %v4037 = vadd.f32 0.0, %v4036
        %v4038 = vpop.f32.mrb[0].mxu0
        %v4039 = vpop.f32.mrb[0].mxu0
        %v4040 = vadd.f32 0.0, %v4039
        %v4041 = vpop.f32.mrb[0].mxu0
        %4042 = vmatprep.mubr.bf16.mxu0 0
        %4043 = vmatmul.mubr.bf16.gmra.mrb[0].mxu0 %v3874
        %v4044 = vpop.f32.mrb[0].mxu0
        %v4045 = vadd.f32 0.0, %v4044
        %v4046 = vpop.f32.mrb[0].mxu0
        %v4047 = vpop.f32.mrb[0].mxu0
        %v4048 = vadd.f32 0.0, %v4047
        %v4049 = vpop.f32.mrb[0].mxu0
        %4050 = vmatprep.mubr.bf16.mxu0 0
        %4051 = vmatmul.mubr.bf16.gmra.mrb[0].mxu0 %v3875
        %v4052 = vpop.f32.mrb[0].mxu0
        %v4053 = vadd.f32 0.0, %v4052
        %v4054 = vpop.f32.mrb[0].mxu0
        %v4055 = vpop.f32.mrb[0].mxu0
        %v4056 = vadd.f32 0.0, %v4055
        %v4057 = vpop.f32.mrb[0].mxu0
        %4058 = vmatprep.mubr.bf16.mxu0 0
        %4059 = vmatmul.mubr.bf16.gmra.mrb[0].mxu0 %v3876
        %v4060 = vpop.f32.mrb[0].mxu0
        %v4061 = vadd.f32 0.0, %v4060
        %v4062 = vpop.f32.mrb[0].mxu0
        %v4063 = vpop.f32.mrb[0].mxu0
        %v4064 = vadd.f32 0.0, %v4063
        %v4065 = vpop.f32.mrb[0].mxu0
        %4066 = vmatprep.mubr.bf16.mxu0 0
        %4067 = vmatmul.mubr.bf16.gmra.mrb[0].mxu0 %v3877
        %v4068 = vpop.f32.mrb[0].mxu0
        %v4069 = vadd.f32 0.0, %v4068
        %v4070 = vpop.f32.mrb[0].mxu0
        %v4071 = vpop.f32.mrb[0].mxu0
        %v4072 = vadd.f32 0.0, %v4071
        %v4073 = vpop.f32.mrb[0].mxu0
        %4074 = vmatprep.mubr.bf16.mxu0 0
        %4075 = vmatmul.mubr.bf16.gmra.mrb[0].mxu0 %v3878
        %v4076 = vpop.f32.mrb[0].mxu0
        %v4077 = vadd.f32 0.0, %v4076
        %v4078 = vpop.f32.mrb[0].mxu0
        %v4079 = vpop.f32.mrb[0].mxu0
        %v4080 = vadd.f32 0.0, %v4079
        %v4081 = vpop.f32.mrb[0].mxu0
        %4082 = vmatprep.mubr.bf16.mxu0 0
        %4083 = vmatmul.mubr.bf16.gmra.mrb[0].mxu0 %v3879
        %v4084 = vpop.f32.mrb[0].mxu0
        %v4085 = vadd.f32 0.0, %v4084
        %v4086 = vpop.f32.mrb[0].mxu0
        %v4087 = vpop.f32.mrb[0].mxu0
        %v4088 = vadd.f32 0.0, %v4087
        %v4089 = vpop.f32.mrb[0].mxu0
        %4090 = vmatprep.mubr.bf16.mxu0 0
        %4091 = vmatmul.mubr.bf16.gmra.mrb[0].mxu0 %v3880
        %v4092 = vpop.f32.mrb[0].mxu0
        %v4093 = vadd.f32 0.0, %v4092
        %v4094 = vpop.f32.mrb[0].mxu0
        %v4095 = vpop.f32.mrb[0].mxu0
        %v4096 = vadd.f32 0.0, %v4095
        %v4097 = vpop.f32.mrb[0].mxu0
        %4098 = vmatprep.mubr.bf16.mxu0 0
        %4099 = vmatmul.mubr.bf16.gmra.mrb[0].mxu0 %v3881
        %v4100 = vpop.f32.mrb[0].mxu0
        %v4101 = vadd.f32 0.0, %v4100
        %v4102 = vpop.f32.mrb[0].mxu0
        %v4103 = vpop.f32.mrb[0].mxu0
        %v4104 = vadd.f32 0.0, %v4103
        %v4105 = vpop.f32.mrb[0].mxu0
        %4106 = vdwg.mxu0
        %v4107 = vadd.f32 %v3626, %v3981
        %v4108 = vadd.f32 %v3629, %v3984
        %v4109 = vadd.f32 %v3634, %v3989
        %v4110 = vadd.f32 %v3637, %v3992
        %v4111 = vadd.f32 %v3642, %v3997
        %v4112 = vadd.f32 %v3645, %v4000
        %v4113 = vadd.f32 %v3650, %v4005
        %v4114 = vadd.f32 %v3653, %v4008
        %v4115 = vadd.f32 %v3658, %v4013
        %v4116 = vadd.f32 %v3661, %v4016
        %v4117 = vadd.f32 %v3666, %v4021
        %v4118 = vadd.f32 %v3669, %v4024
        %v4119 = vadd.f32 %v3674, %v4029
        %v4120 = vadd.f32 %v3677, %v4032
        %v4121 = vadd.f32 %v3682, %v4037
        %v4122 = vadd.f32 %v3685, %v4040
        %v4123 = vadd.f32 %v3690, %v4045
        %v4124 = vadd.f32 %v3693, %v4048
        %v4125 = vadd.f32 %v3698, %v4053
        %v4126 = vadd.f32 %v3701, %v4056
        %v4127 = vadd.f32 %v3706, %v4061
        %v4128 = vadd.f32 %v3709, %v4064
        %v4129 = vadd.f32 %v3714, %v4069
        %v4130 = vadd.f32 %v3717, %v4072
        %v4131 = vadd.f32 %v3722, %v4077
        %v4132 = vadd.f32 %v3725, %v4080
        %v4133 = vadd.f32 %v3730, %v4085
        %v4134 = vadd.f32 %v3733, %v4088
        %v4135 = vadd.f32 %v3738, %v4093
        %v4136 = vadd.f32 %v3741, %v4096
        %v4137 = vadd.f32 %v3746, %v4101
        %v4138 = vadd.f32 %v3749, %v4104
        %v4139 = vld [vmem:[%s14] sm:$0x7]
        %v4140 = vlaneseq
        %v4141 = vshrl.u32 %v4140, 7
        %v4142 = vsub.s32 0, %v4141
        %v4143 = vrot.slane %v4139, %v4142
        %v4144 = vadd.f32 %v4107, %v4143
        %v4145 = vadd.f32 %v4108, %v4143
        %v4146 = vadd.f32 %v4109, %v4143
        %v4147 = vadd.f32 %v4110, %v4143
        %v4148 = vadd.f32 %v4111, %v4143
        %v4149 = vadd.f32 %v4112, %v4143
        %v4150 = vadd.f32 %v4113, %v4143
        %v4151 = vadd.f32 %v4114, %v4143
        %v4152 = vadd.f32 %v4115, %v4143
        %v4153 = vadd.f32 %v4116, %v4143
        %v4154 = vadd.f32 %v4117, %v4143
        %v4155 = vadd.f32 %v4118, %v4143
        %v4156 = vadd.f32 %v4119, %v4143
        %v4157 = vadd.f32 %v4120, %v4143
        %v4158 = vadd.f32 %v4121, %v4143
        %v4159 = vadd.f32 %v4122, %v4143
        %v4160 = vadd.f32 %v4123, %v4143
        %v4161 = vadd.f32 %v4124, %v4143
        %v4162 = vadd.f32 %v4125, %v4143
        %v4163 = vadd.f32 %v4126, %v4143
        %v4164 = vadd.f32 %v4127, %v4143
        %v4165 = vadd.f32 %v4128, %v4143
        %v4166 = vadd.f32 %v4129, %v4143
        %v4167 = vadd.f32 %v4130, %v4143
        %v4168 = vadd.f32 %v4131, %v4143
        %v4169 = vadd.f32 %v4132, %v4143
        %v4170 = vadd.f32 %v4133, %v4143
        %v4171 = vadd.f32 %v4134, %v4143
        %v4172 = vadd.f32 %v4135, %v4143
        %v4173 = vadd.f32 %v4136, %v4143
        %v4174 = vadd.f32 %v4137, %v4143
        %v4175 = vadd.f32 %v4138, %v4143
        %v4176 = vlaneseq
        %v4177 = vshrl.u32 %v4176, 7
        %v4178 = vsub.s32 1, %v4177
        %v4179 = vrot.slane %v4139, %v4178
        %v4180 = vmul.f32 %v4144, %v4179
        %v4181 = vmul.f32 %v4145, %v4179
        %v4182 = vmul.f32 %v4146, %v4179
        %v4183 = vmul.f32 %v4147, %v4179
        %v4184 = vmul.f32 %v4148, %v4179
        %v4185 = vmul.f32 %v4149, %v4179
        %v4186 = vmul.f32 %v4150, %v4179
        %v4187 = vmul.f32 %v4151, %v4179
        %v4188 = vmul.f32 %v4152, %v4179
        %v4189 = vmul.f32 %v4153, %v4179
        %v4190 = vmul.f32 %v4154, %v4179
        %v4191 = vmul.f32 %v4155, %v4179
        %v4192 = vmul.f32 %v4156, %v4179
        %v4193 = vmul.f32 %v4157, %v4179
        %v4194 = vmul.f32 %v4158, %v4179
        %v4195 = vmul.f32 %v4159, %v4179
        %v4196 = vmul.f32 %v4160, %v4179
        %v4197 = vmul.f32 %v4161, %v4179
        %v4198 = vmul.f32 %v4162, %v4179
        %v4199 = vmul.f32 %v4163, %v4179
        %v4200 = vmul.f32 %v4164, %v4179
        %v4201 = vmul.f32 %v4165, %v4179
        %v4202 = vmul.f32 %v4166, %v4179
        %v4203 = vmul.f32 %v4167, %v4179
        %v4204 = vmul.f32 %v4168, %v4179
        %v4205 = vmul.f32 %v4169, %v4179
        %v4206 = vmul.f32 %v4170, %v4179
        %v4207 = vmul.f32 %v4171, %v4179
        %v4208 = vmul.f32 %v4172, %v4179
        %v4209 = vmul.f32 %v4173, %v4179
        %v4210 = vmul.f32 %v4174, %v4179
        %v4211 = vmul.f32 %v4175, %v4179
        %v4212 = vlaneseq
        %v4213 = vshrl.u32 %v4212, 7
        %v4214 = vsub.s32 2, %v4213
        %v4215 = vrot.slane %v4139, %v4214
        %v4216 = vadd.f32 %v4180, %v4215
        %v4217 = vadd.f32 %v4181, %v4215
        %v4218 = vadd.f32 %v4182, %v4215
        %v4219 = vadd.f32 %v4183, %v4215
        %v4220 = vadd.f32 %v4184, %v4215
        %v4221 = vadd.f32 %v4185, %v4215
        %v4222 = vadd.f32 %v4186, %v4215
        %v4223 = vadd.f32 %v4187, %v4215
        %v4224 = vadd.f32 %v4188, %v4215
        %v4225 = vadd.f32 %v4189, %v4215
        %v4226 = vadd.f32 %v4190, %v4215
        %v4227 = vadd.f32 %v4191, %v4215
        %v4228 = vadd.f32 %v4192, %v4215
        %v4229 = vadd.f32 %v4193, %v4215
        %v4230 = vadd.f32 %v4194, %v4215
        %v4231 = vadd.f32 %v4195, %v4215
        %v4232 = vadd.f32 %v4196, %v4215
        %v4233 = vadd.f32 %v4197, %v4215
        %v4234 = vadd.f32 %v4198, %v4215
        %v4235 = vadd.f32 %v4199, %v4215
        %v4236 = vadd.f32 %v4200, %v4215
        %v4237 = vadd.f32 %v4201, %v4215
        %v4238 = vadd.f32 %v4202, %v4215
        %v4239 = vadd.f32 %v4203, %v4215
        %v4240 = vadd.f32 %v4204, %v4215
        %v4241 = vadd.f32 %v4205, %v4215
        %v4242 = vadd.f32 %v4206, %v4215
        %v4243 = vadd.f32 %v4207, %v4215
        %v4244 = vadd.f32 %v4208, %v4215
        %v4245 = vadd.f32 %v4209, %v4215
        %v4246 = vadd.f32 %v4210, %v4215
        %v4247 = vadd.f32 %v4211, %v4215
        %v4248 = vmax.f32 %v4216, 0.0
        %v4249 = vmax.f32 %v4217, 0.0
        %v4250 = vmax.f32 %v4218, 0.0
        %v4251 = vmax.f32 %v4219, 0.0
        %v4252 = vmax.f32 %v4220, 0.0
        %v4253 = vmax.f32 %v4221, 0.0
        %v4254 = vmax.f32 %v4222, 0.0
        %v4255 = vmax.f32 %v4223, 0.0
        %v4256 = vmax.f32 %v4224, 0.0
        %v4257 = vmax.f32 %v4225, 0.0
        %v4258 = vmax.f32 %v4226, 0.0
        %v4259 = vmax.f32 %v4227, 0.0
        %v4260 = vmax.f32 %v4228, 0.0
        %v4261 = vmax.f32 %v4229, 0.0
        %v4262 = vmax.f32 %v4230, 0.0
        %v4263 = vmax.f32 %v4231, 0.0
        %v4264 = vmax.f32 %v4232, 0.0
        %v4265 = vmax.f32 %v4233, 0.0
        %v4266 = vmax.f32 %v4234, 0.0
        %v4267 = vmax.f32 %v4235, 0.0
        %v4268 = vmax.f32 %v4236, 0.0
        %v4269 = vmax.f32 %v4237, 0.0
        %v4270 = vmax.f32 %v4238, 0.0
        %v4271 = vmax.f32 %v4239, 0.0
        %v4272 = vmax.f32 %v4240, 0.0
        %v4273 = vmax.f32 %v4241, 0.0
        %v4274 = vmax.f32 %v4242, 0.0
        %v4275 = vmax.f32 %v4243, 0.0
        %v4276 = vmax.f32 %v4244, 0.0
        %v4277 = vmax.f32 %v4245, 0.0
        %v4278 = vmax.f32 %v4246, 0.0
        %v4279 = vmax.f32 %v4247, 0.0
        %v4312 = vrot.slane %v4248, 7
        %v4313 = vrot.slane %v4249, 7
        %v4314 = vrot.slane %v4250, 7
        %v4315 = vrot.slane %v4251, 7
        %v4316 = vrot.slane %v4252, 7
        %v4317 = vrot.slane %v4253, 7
        %v4318 = vrot.slane %v4254, 7
        %v4319 = vrot.slane %v4255, 7
        %v4320 = vrot.slane %v4256, 7
        %v4321 = vrot.slane %v4257, 7
        %v4322 = vrot.slane %v4258, 7
        %v4323 = vrot.slane %v4259, 7
        %v4324 = vrot.slane %v4260, 7
        %v4325 = vrot.slane %v4261, 7
        %v4326 = vrot.slane %v4262, 7
        %v4327 = vrot.slane %v4263, 7
        %v4328 = vrot.slane %v4264, 7
        %v4329 = vrot.slane %v4265, 7
        %v4330 = vrot.slane %v4266, 7
        %v4331 = vrot.slane %v4267, 7
        %v4332 = vrot.slane %v4268, 7
        %v4333 = vrot.slane %v4269, 7
        %v4334 = vrot.slane %v4270, 7
        %v4335 = vrot.slane %v4271, 7
        %v4336 = vrot.slane %v4272, 7
        %v4337 = vrot.slane %v4273, 7
        %v4338 = vrot.slane %v4274, 7
        %v4339 = vrot.slane %v4275, 7
        %v4340 = vrot.slane %v4276, 7
        %v4341 = vrot.slane %v4277, 7
        %v4342 = vrot.slane %v4278, 7
        %v4343 = vrot.slane %v4279, 7
        %v4376 = vsel %vm2773, %v4248, %v4312
        %v4377 = vsel %vm2773, %v4249, %v4313
        %v4378 = vsel %vm2773, %v4250, %v4314
        %v4379 = vsel %vm2773, %v4251, %v4315
        %v4380 = vsel %vm2773, %v4252, %v4316
        %v4381 = vsel %vm2773, %v4253, %v4317
        %v4382 = vsel %vm2773, %v4254, %v4318
        %v4383 = vsel %vm2773, %v4255, %v4319
        %v4384 = vsel %vm2773, %v4256, %v4320
        %v4385 = vsel %vm2773, %v4257, %v4321
        %v4386 = vsel %vm2773, %v4258, %v4322
        %v4387 = vsel %vm2773, %v4259, %v4323
        %v4388 = vsel %vm2773, %v4260, %v4324
        %v4389 = vsel %vm2773, %v4261, %v4325
        %v4390 = vsel %vm2773, %v4262, %v4326
        %v4391 = vsel %vm2773, %v4263, %v4327
        %v4392 = vsel %vm2773, %v4264, %v4328
        %v4393 = vsel %vm2773, %v4265, %v4329
        %v4394 = vsel %vm2773, %v4266, %v4330
        %v4395 = vsel %vm2773, %v4267, %v4331
        %v4396 = vsel %vm2773, %v4268, %v4332
        %v4397 = vsel %vm2773, %v4269, %v4333
        %v4398 = vsel %vm2773, %v4270, %v4334
        %v4399 = vsel %vm2773, %v4271, %v4335
        %v4400 = vsel %vm2773, %v4272, %v4336
        %v4401 = vsel %vm2773, %v4273, %v4337
        %v4402 = vsel %vm2773, %v4274, %v4338
        %v4403 = vsel %vm2773, %v4275, %v4339
        %v4404 = vsel %vm2773, %v4276, %v4340
        %v4405 = vsel %vm2773, %v4277, %v4341
        %v4406 = vsel %vm2773, %v4278, %v4342
        %v4407 = vsel %vm2773, %v4279, %v4343
        %v4408 = vrot.slane %v4248, 1
        %v4409 = vrot.slane %v4249, 1
        %v4410 = vrot.slane %v4250, 1
        %v4411 = vrot.slane %v4251, 1
        %v4412 = vrot.slane %v4252, 1
        %v4413 = vrot.slane %v4253, 1
        %v4414 = vrot.slane %v4254, 1
        %v4415 = vrot.slane %v4255, 1
        %v4416 = vrot.slane %v4256, 1
        %v4417 = vrot.slane %v4257, 1
        %v4418 = vrot.slane %v4258, 1
        %v4419 = vrot.slane %v4259, 1
        %v4420 = vrot.slane %v4260, 1
        %v4421 = vrot.slane %v4261, 1
        %v4422 = vrot.slane %v4262, 1
        %v4423 = vrot.slane %v4263, 1
        %v4424 = vrot.slane %v4264, 1
        %v4425 = vrot.slane %v4265, 1
        %v4426 = vrot.slane %v4266, 1
        %v4427 = vrot.slane %v4267, 1
        %v4428 = vrot.slane %v4268, 1
        %v4429 = vrot.slane %v4269, 1
        %v4430 = vrot.slane %v4270, 1
        %v4431 = vrot.slane %v4271, 1
        %v4432 = vrot.slane %v4272, 1
        %v4433 = vrot.slane %v4273, 1
        %v4434 = vrot.slane %v4274, 1
        %v4435 = vrot.slane %v4275, 1
        %v4436 = vrot.slane %v4276, 1
        %v4437 = vrot.slane %v4277, 1
        %v4438 = vrot.slane %v4278, 1
        %v4439 = vrot.slane %v4279, 1
        %v4472 = vsel %vm2870, %v4408, %v4248
        %v4473 = vsel %vm2870, %v4409, %v4249
        %v4474 = vsel %vm2870, %v4410, %v4250
        %v4475 = vsel %vm2870, %v4411, %v4251
        %v4476 = vsel %vm2870, %v4412, %v4252
        %v4477 = vsel %vm2870, %v4413, %v4253
        %v4478 = vsel %vm2870, %v4414, %v4254
        %v4479 = vsel %vm2870, %v4415, %v4255
        %v4480 = vsel %vm2870, %v4416, %v4256
        %v4481 = vsel %vm2870, %v4417, %v4257
        %v4482 = vsel %vm2870, %v4418, %v4258
        %v4483 = vsel %vm2870, %v4419, %v4259
        %v4484 = vsel %vm2870, %v4420, %v4260
        %v4485 = vsel %vm2870, %v4421, %v4261
        %v4486 = vsel %vm2870, %v4422, %v4262
        %v4487 = vsel %vm2870, %v4423, %v4263
        %v4488 = vsel %vm2870, %v4424, %v4264
        %v4489 = vsel %vm2870, %v4425, %v4265
        %v4490 = vsel %vm2870, %v4426, %v4266
        %v4491 = vsel %vm2870, %v4427, %v4267
        %v4492 = vsel %vm2870, %v4428, %v4268
        %v4493 = vsel %vm2870, %v4429, %v4269
        %v4494 = vsel %vm2870, %v4430, %v4270
        %v4495 = vsel %vm2870, %v4431, %v4271
        %v4496 = vsel %vm2870, %v4432, %v4272
        %v4497 = vsel %vm2870, %v4433, %v4273
        %v4498 = vsel %vm2870, %v4434, %v4274
        %v4499 = vsel %vm2870, %v4435, %v4275
        %v4500 = vsel %vm2870, %v4436, %v4276
        %v4501 = vsel %vm2870, %v4437, %v4277
        %v4502 = vsel %vm2870, %v4438, %v4278
        %v4503 = vsel %vm2870, %v4439, %v4279
        %v4504 = vsel %vm2904, %v4248, %v4472
        %v4505 = vsel %vm2904, %v4249, %v4473
        %v4506 = vsel %vm2904, %v4250, %v4474
        %v4507 = vsel %vm2904, %v4251, %v4475
        %v4508 = vsel %vm2904, %v4252, %v4476
        %v4509 = vsel %vm2904, %v4253, %v4477
        %v4510 = vsel %vm2904, %v4254, %v4478
        %v4511 = vsel %vm2904, %v4255, %v4479
        %v4512 = vsel %vm2904, %v4256, %v4480
        %v4513 = vsel %vm2904, %v4257, %v4481
        %v4514 = vsel %vm2904, %v4258, %v4482
        %v4515 = vsel %vm2904, %v4259, %v4483
        %v4516 = vsel %vm2904, %v4260, %v4484
        %v4517 = vsel %vm2904, %v4261, %v4485
        %v4518 = vsel %vm2904, %v4262, %v4486
        %v4519 = vsel %vm2904, %v4263, %v4487
        %v4520 = vsel %vm2904, %v4264, %v4488
        %v4521 = vsel %vm2904, %v4265, %v4489
        %v4522 = vsel %vm2904, %v4266, %v4490
        %v4523 = vsel %vm2904, %v4267, %v4491
        %v4524 = vsel %vm2904, %v4268, %v4492
        %v4525 = vsel %vm2904, %v4269, %v4493
        %v4526 = vsel %vm2904, %v4270, %v4494
        %v4527 = vsel %vm2904, %v4271, %v4495
        %v4528 = vsel %vm2904, %v4272, %v4496
        %v4529 = vsel %vm2904, %v4273, %v4497
        %v4530 = vsel %vm2904, %v4274, %v4498
        %v4531 = vsel %vm2904, %v4275, %v4499
        %v4532 = vsel %vm2904, %v4276, %v4500
        %v4533 = vsel %vm2904, %v4277, %v4501
        %v4534 = vsel %vm2904, %v4278, %v4502
        %v4535 = vsel %vm2904, %v4279, %v4503
        %v4536 = vsel %vm2938, %v4376, %v4504
        %v4537 = vsel %vm2938, %v4377, %v4505
        %v4538 = vsel %vm2938, %v4378, %v4506
        %v4539 = vsel %vm2938, %v4379, %v4507
        %v4540 = vsel %vm2938, %v4380, %v4508
        %v4541 = vsel %vm2938, %v4381, %v4509
        %v4542 = vsel %vm2938, %v4382, %v4510
        %v4543 = vsel %vm2938, %v4383, %v4511
        %v4544 = vsel %vm2938, %v4384, %v4512
        %v4545 = vsel %vm2938, %v4385, %v4513
        %v4546 = vsel %vm2938, %v4386, %v4514
        %v4547 = vsel %vm2938, %v4387, %v4515
        %v4548 = vsel %vm2938, %v4388, %v4516
        %v4549 = vsel %vm2938, %v4389, %v4517
        %v4550 = vsel %vm2938, %v4390, %v4518
        %v4551 = vsel %vm2938, %v4391, %v4519
        %v4552 = vsel %vm2938, %v4392, %v4520
        %v4553 = vsel %vm2938, %v4393, %v4521
        %v4554 = vsel %vm2938, %v4394, %v4522
        %v4555 = vsel %vm2938, %v4395, %v4523
        %v4556 = vsel %vm2938, %v4396, %v4524
        %v4557 = vsel %vm2938, %v4397, %v4525
        %v4558 = vsel %vm2938, %v4398, %v4526
        %v4559 = vsel %vm2938, %v4399, %v4527
        %v4560 = vsel %vm2938, %v4400, %v4528
        %v4561 = vsel %vm2938, %v4401, %v4529
        %v4562 = vsel %vm2938, %v4402, %v4530
        %v4563 = vsel %vm2938, %v4403, %v4531
        %v4564 = vsel %vm2938, %v4404, %v4532
        %v4565 = vsel %vm2938, %v4405, %v4533
        %v4566 = vsel %vm2938, %v4406, %v4534
        %v4567 = vsel %vm2938, %v4407, %v4535
        %v4568 = vpack.c.bf16 %v4536, %v4536
        %v4569 = vpack.c.bf16 %v4537, %v4537
        %v4570 = vpack.c.bf16 %v4538, %v4538
        %v4571 = vpack.c.bf16 %v4539, %v4539
        %v4572 = vpack.c.bf16 %v4540, %v4540
        %v4573 = vpack.c.bf16 %v4541, %v4541
        %v4574 = vpack.c.bf16 %v4542, %v4542
        %v4575 = vpack.c.bf16 %v4543, %v4543
        %v4576 = vpack.c.bf16 %v4544, %v4544
        %v4577 = vpack.c.bf16 %v4545, %v4545
        %v4578 = vpack.c.bf16 %v4546, %v4546
        %v4579 = vpack.c.bf16 %v4547, %v4547
        %v4580 = vpack.c.bf16 %v4548, %v4548
        %v4581 = vpack.c.bf16 %v4549, %v4549
        %v4582 = vpack.c.bf16 %v4550, %v4550
        %v4583 = vpack.c.bf16 %v4551, %v4551
        %v4584 = vpack.c.bf16 %v4552, %v4552
        %v4585 = vpack.c.bf16 %v4553, %v4553
        %v4586 = vpack.c.bf16 %v4554, %v4554
        %v4587 = vpack.c.bf16 %v4555, %v4555
        %v4588 = vpack.c.bf16 %v4556, %v4556
        %v4589 = vpack.c.bf16 %v4557, %v4557
        %v4590 = vpack.c.bf16 %v4558, %v4558
        %v4591 = vpack.c.bf16 %v4559, %v4559
        %v4592 = vpack.c.bf16 %v4560, %v4560
        %v4593 = vpack.c.bf16 %v4561, %v4561
        %v4594 = vpack.c.bf16 %v4562, %v4562
        %v4595 = vpack.c.bf16 %v4563, %v4563
        %v4596 = vpack.c.bf16 %v4564, %v4564
        %v4597 = vpack.c.bf16 %v4565, %v4565
        %v4598 = vpack.c.bf16 %v4566, %v4566
        %v4599 = vpack.c.bf16 %v4567, %v4567
        %4600 = vst [vmem:[%s3003] sm:$0xf] %v4568
        %4601 = vst [vmem:[%s3003 + $0x4] sm:$0xf] %v4569
        %4602 = vst [vmem:[%s3003 + $0x8] sm:$0xf] %v4570
        %4603 = vst [vmem:[%s3003 + $0xc] sm:$0xf] %v4571
        %4604 = vst [vmem:[%s3003 + $0x10] sm:$0xf] %v4572
        %4605 = vst [vmem:[%s3003 + $0x14] sm:$0xf] %v4573
        %4606 = vst [vmem:[%s3003 + $0x18] sm:$0xf] %v4574
        %4607 = vst [vmem:[%s3003 + $0x1c] sm:$0xf] %v4575
        %4608 = vst [vmem:[%s3003 + $0x28] sm:$0xf] %v4576
        %4609 = vst [vmem:[%s3003 + $0x2c] sm:$0xf] %v4577
        %4610 = vst [vmem:[%s3003 + $0x30] sm:$0xf] %v4578
        %4611 = vst [vmem:[%s3003 + $0x34] sm:$0xf] %v4579
        %4612 = vst [vmem:[%s3003 + $0x38] sm:$0xf] %v4580
        %4613 = vst [vmem:[%s3003 + $0x3c] sm:$0xf] %v4581
        %4614 = vst [vmem:[%s3003 + $0x40] sm:$0xf] %v4582
        %4615 = vst [vmem:[%s3003 + $0x44] sm:$0xf] %v4583
        %4616 = vst [vmem:[%s3003 + $0x50] sm:$0xf] %v4584
        %4617 = vst [vmem:[%s3003 + $0x54] sm:$0xf] %v4585
        %4618 = vst [vmem:[%s3003 + $0x58] sm:$0xf] %v4586
        %4619 = vst [vmem:[%s3003 + $0x5c] sm:$0xf] %v4587
        %4620 = vst [vmem:[%s3003 + $0x60] sm:$0xf] %v4588
        %4621 = vst [vmem:[%s3003 + $0x64] sm:$0xf] %v4589
        %4622 = vst [vmem:[%s3003 + $0x68] sm:$0xf] %v4590
        %4623 = vst [vmem:[%s3003 + $0x6c] sm:$0xf] %v4591
        %4624 = vst [vmem:[%s3003 + $0x78] sm:$0xf] %v4592
        %4625 = vst [vmem:[%s3003 + $0x7c] sm:$0xf] %v4593
        %4626 = vst [vmem:[%s3003 + $0x80] sm:$0xf] %v4594
        %4627 = vst [vmem:[%s3003 + $0x84] sm:$0xf] %v4595
        %4628 = vst [vmem:[%s3003 + $0x88] sm:$0xf] %v4596
        %4629 = vst [vmem:[%s3003 + $0x8c] sm:$0xf] %v4597
        %4630 = vst [vmem:[%s3003 + $0x90] sm:$0xf] %v4598
        %4631 = vst [vmem:[%s3003 + $0x94] sm:$0xf] %v4599
        %4632 = vst [vmem:[#allocation2] sm:$0xf] %v4568
        %4633 = vst [vmem:[#allocation2 + $0x28] sm:$0xf] %v4576
        %4634 = vst [vmem:[#allocation2 + $0x50] sm:$0xf] %v4584
        %4635 = vst [vmem:[#allocation2 + $0x78] sm:$0xf] %v4592
        %4636 = vst [vmem:[%s3040] sm:$0xf] %v4575
        %4637 = vst [vmem:[%s3040 + $0x28] sm:$0xf] %v4583
        %4638 = vst [vmem:[%s3040 + $0x50] sm:$0xf] %v4591
        %4639 = vst [vmem:[%s3040 + $0x78] sm:$0xf] %v4599
        %v4640 = vld [vmem:[#allocation2] sm:$0xf]
        %v4641 = vld [vmem:[#allocation2 + $0x4] sm:$0xf]
        %v4642 = vld [vmem:[#allocation2 + $0x8] sm:$0xf]
        %v4643 = vld [vmem:[#allocation2 + $0xc] sm:$0xf]
        %v4644 = vld [vmem:[#allocation2 + $0x10] sm:$0xf]
        %v4645 = vld [vmem:[#allocation2 + $0x14] sm:$0xf]
        %v4646 = vld [vmem:[#allocation2 + $0x18] sm:$0xf]
        %v4647 = vld [vmem:[#allocation2 + $0x1c] sm:$0xf]
        %v4648 = vld [vmem:[#allocation2 + $0x28] sm:$0xf]
        %v4649 = vld [vmem:[#allocation2 + $0x2c] sm:$0xf]
        %v4650 = vld [vmem:[#allocation2 + $0x30] sm:$0xf]
        %v4651 = vld [vmem:[#allocation2 + $0x34] sm:$0xf]
        %v4652 = vld [vmem:[#allocation2 + $0x38] sm:$0xf]
        %v4653 = vld [vmem:[#allocation2 + $0x3c] sm:$0xf]
        %v4654 = vld [vmem:[#allocation2 + $0x40] sm:$0xf]
        %v4655 = vld [vmem:[#allocation2 + $0x44] sm:$0xf]
        %v4656 = vld [vmem:[#allocation2 + $0x50] sm:$0xf]
        %v4657 = vld [vmem:[#allocation2 + $0x54] sm:$0xf]
        %v4658 = vld [vmem:[#allocation2 + $0x58] sm:$0xf]
        %v4659 = vld [vmem:[#allocation2 + $0x5c] sm:$0xf]
        %v4660 = vld [vmem:[#allocation2 + $0x60] sm:$0xf]
        %v4661 = vld [vmem:[#allocation2 + $0x64] sm:$0xf]
        %v4662 = vld [vmem:[#allocation2 + $0x68] sm:$0xf]
        %v4663 = vld [vmem:[#allocation2 + $0x6c] sm:$0xf]
        %v4664 = vld [vmem:[#allocation2 + $0x78] sm:$0xf]
        %v4665 = vld [vmem:[#allocation2 + $0x7c] sm:$0xf]
        %v4666 = vld [vmem:[#allocation2 + $0x80] sm:$0xf]
        %v4667 = vld [vmem:[#allocation2 + $0x84] sm:$0xf]
        %v4668 = vld [vmem:[#allocation2 + $0x88] sm:$0xf]
        %v4669 = vld [vmem:[#allocation2 + $0x8c] sm:$0xf]
        %v4670 = vld [vmem:[#allocation2 + $0x90] sm:$0xf]
        %v4671 = vld [vmem:[#allocation2 + $0x94] sm:$0xf]
        %v4672 = vld [vmem:[#allocation17] sm:$0xf]
        %v4673 = vld [vmem:[#allocation17 + $0x4] sm:$0xf]
        %v4674 = vld [vmem:[#allocation17 + $0x8] sm:$0xf]
        %v4675 = vld [vmem:[#allocation17 + $0xc] sm:$0xf]
        %v4676 = vld [vmem:[#allocation17 + $0x10] sm:$0xf]
        %v4677 = vld [vmem:[#allocation17 + $0x14] sm:$0xf]
        %v4678 = vld [vmem:[#allocation17 + $0x18] sm:$0xf]
        %v4679 = vld [vmem:[#allocation17 + $0x1c] sm:$0xf]
        %v4680 = vld [vmem:[#allocation17 + $0x20] sm:$0xf]
        %v4681 = vld [vmem:[#allocation17 + $0x24] sm:$0xf]
        %v4682 = vld [vmem:[#allocation17 + $0x28] sm:$0xf]
        %v4683 = vld [vmem:[#allocation17 + $0x2c] sm:$0xf]
        %v4684 = vld [vmem:[#allocation17 + $0x30] sm:$0xf]
        %v4685 = vld [vmem:[#allocation17 + $0x34] sm:$0xf]
        %v4686 = vld [vmem:[#allocation17 + $0x38] sm:$0xf]
        %v4687 = vld [vmem:[#allocation17 + $0x3c] sm:$0xf]
        %v4688 = vld [vmem:[%s3003] sm:$0xf]
        %v4689 = vld [vmem:[%s3003 + $0x4] sm:$0xf]
        %v4690 = vld [vmem:[%s3003 + $0x8] sm:$0xf]
        %v4691 = vld [vmem:[%s3003 + $0xc] sm:$0xf]
        %v4692 = vld [vmem:[%s3003 + $0x10] sm:$0xf]
        %v4693 = vld [vmem:[%s3003 + $0x14] sm:$0xf]
        %v4694 = vld [vmem:[%s3003 + $0x18] sm:$0xf]
        %v4695 = vld [vmem:[%s3003 + $0x1c] sm:$0xf]
        %v4696 = vld [vmem:[%s3003 + $0x28] sm:$0xf]
        %v4697 = vld [vmem:[%s3003 + $0x2c] sm:$0xf]
        %v4698 = vld [vmem:[%s3003 + $0x30] sm:$0xf]
        %v4699 = vld [vmem:[%s3003 + $0x34] sm:$0xf]
        %v4700 = vld [vmem:[%s3003 + $0x38] sm:$0xf]
        %v4701 = vld [vmem:[%s3003 + $0x3c] sm:$0xf]
        %v4702 = vld [vmem:[%s3003 + $0x40] sm:$0xf]
        %v4703 = vld [vmem:[%s3003 + $0x44] sm:$0xf]
        %v4704 = vld [vmem:[%s3003 + $0x50] sm:$0xf]
        %v4705 = vld [vmem:[%s3003 + $0x54] sm:$0xf]
        %v4706 = vld [vmem:[%s3003 + $0x58] sm:$0xf]
        %v4707 = vld [vmem:[%s3003 + $0x5c] sm:$0xf]
        %v4708 = vld [vmem:[%s3003 + $0x60] sm:$0xf]
        %v4709 = vld [vmem:[%s3003 + $0x64] sm:$0xf]
        %v4710 = vld [vmem:[%s3003 + $0x68] sm:$0xf]
        %v4711 = vld [vmem:[%s3003 + $0x6c] sm:$0xf]
        %v4712 = vld [vmem:[%s3003 + $0x78] sm:$0xf]
        %v4713 = vld [vmem:[%s3003 + $0x7c] sm:$0xf]
        %v4714 = vld [vmem:[%s3003 + $0x80] sm:$0xf]
        %v4715 = vld [vmem:[%s3003 + $0x84] sm:$0xf]
        %v4716 = vld [vmem:[%s3003 + $0x88] sm:$0xf]
        %v4717 = vld [vmem:[%s3003 + $0x8c] sm:$0xf]
        %v4718 = vld [vmem:[%s3003 + $0x90] sm:$0xf]
        %v4719 = vld [vmem:[%s3003 + $0x94] sm:$0xf]
        %s4720 = scalar_lea.vmem [#allocation17], 64
        %v4721 = vld [vmem:[%s4720] sm:$0xf]
        %v4722 = vld [vmem:[%s4720 + $0x4] sm:$0xf]
        %v4723 = vld [vmem:[%s4720 + $0x8] sm:$0xf]
        %v4724 = vld [vmem:[%s4720 + $0xc] sm:$0xf]
        %v4725 = vld [vmem:[%s4720 + $0x10] sm:$0xf]
        %v4726 = vld [vmem:[%s4720 + $0x14] sm:$0xf]
        %v4727 = vld [vmem:[%s4720 + $0x18] sm:$0xf]
        %v4728 = vld [vmem:[%s4720 + $0x1c] sm:$0xf]
        %v4729 = vld [vmem:[%s4720 + $0x20] sm:$0xf]
        %v4730 = vld [vmem:[%s4720 + $0x24] sm:$0xf]
        %v4731 = vld [vmem:[%s4720 + $0x28] sm:$0xf]
        %v4732 = vld [vmem:[%s4720 + $0x2c] sm:$0xf]
        %v4733 = vld [vmem:[%s4720 + $0x30] sm:$0xf]
        %v4734 = vld [vmem:[%s4720 + $0x34] sm:$0xf]
        %v4735 = vld [vmem:[%s4720 + $0x38] sm:$0xf]
        %v4736 = vld [vmem:[%s4720 + $0x3c] sm:$0xf]
        %v4769 = vunpack.c.l.b16 %v4688
        %v4770 = vunpack.c.l.b16 %v4689
        %v4771 = vunpack.c.l.b16 %v4690
        %v4772 = vunpack.c.l.b16 %v4691
        %v4773 = vunpack.c.l.b16 %v4692
        %v4774 = vunpack.c.l.b16 %v4693
        %v4775 = vunpack.c.l.b16 %v4694
        %v4776 = vunpack.c.l.b16 %v4695
        %v4777 = vunpack.c.l.b16 %v4696
        %v4778 = vunpack.c.l.b16 %v4697
        %v4779 = vunpack.c.l.b16 %v4698
        %v4780 = vunpack.c.l.b16 %v4699
        %v4781 = vunpack.c.l.b16 %v4700
        %v4782 = vunpack.c.l.b16 %v4701
        %v4783 = vunpack.c.l.b16 %v4702
        %v4784 = vunpack.c.l.b16 %v4703
        %v4785 = vunpack.c.l.b16 %v4704
        %v4786 = vunpack.c.l.b16 %v4705
        %v4787 = vunpack.c.l.b16 %v4706
        %v4788 = vunpack.c.l.b16 %v4707
        %v4789 = vunpack.c.l.b16 %v4708
        %v4790 = vunpack.c.l.b16 %v4709
        %v4791 = vunpack.c.l.b16 %v4710
        %v4792 = vunpack.c.l.b16 %v4711
        %v4793 = vunpack.c.l.b16 %v4712
        %v4794 = vunpack.c.l.b16 %v4713
        %v4795 = vunpack.c.l.b16 %v4714
        %v4796 = vunpack.c.l.b16 %v4715
        %v4797 = vunpack.c.l.b16 %v4716
        %v4798 = vunpack.c.l.b16 %v4717
        %v4799 = vunpack.c.l.b16 %v4718
        %v4800 = vunpack.c.l.b16 %v4719
        %v4801 = vpack.c.b16 %v4770, %v4769
        %v4802 = vpack.c.b16 %v4772, %v4771
        %v4803 = vpack.c.b16 %v4774, %v4773
        %v4804 = vpack.c.b16 %v4776, %v4775
        %v4805 = vpack.c.b16 %v4778, %v4777
        %v4806 = vpack.c.b16 %v4780, %v4779
        %v4807 = vpack.c.b16 %v4782, %v4781
        %v4808 = vpack.c.b16 %v4784, %v4783
        %v4809 = vpack.c.b16 %v4786, %v4785
        %v4810 = vpack.c.b16 %v4788, %v4787
        %v4811 = vpack.c.b16 %v4790, %v4789
        %v4812 = vpack.c.b16 %v4792, %v4791
        %v4813 = vpack.c.b16 %v4794, %v4793
        %v4814 = vpack.c.b16 %v4796, %v4795
        %v4815 = vpack.c.b16 %v4798, %v4797
        %v4816 = vpack.c.b16 %v4800, %v4799
        %v4849 = vunpack.c.l.b16 %v4721
        %v4850 = vunpack.c.l.b16 %v4722
        %v4851 = vunpack.c.l.b16 %v4723
        %v4852 = vunpack.c.l.b16 %v4724
        %v4853 = vunpack.c.l.b16 %v4725
        %v4854 = vunpack.c.l.b16 %v4726
        %v4855 = vunpack.c.l.b16 %v4727
        %v4856 = vunpack.c.l.b16 %v4728
        %v4857 = vunpack.c.l.b16 %v4729
        %v4858 = vunpack.c.l.b16 %v4730
        %v4859 = vunpack.c.l.b16 %v4731
        %v4860 = vunpack.c.l.b16 %v4732
        %v4861 = vunpack.c.l.b16 %v4733
        %v4862 = vunpack.c.l.b16 %v4734
        %v4863 = vunpack.c.l.b16 %v4735
        %v4864 = vunpack.c.l.b16 %v4736
        %v4865 = vpack.c.b16 %v4850, %v4849
        %v4866 = vpack.c.b16 %v4852, %v4851
        %v4867 = vpack.c.b16 %v4854, %v4853
        %v4868 = vpack.c.b16 %v4856, %v4855
        %v4869 = vpack.c.b16 %v4858, %v4857
        %v4870 = vpack.c.b16 %v4860, %v4859
        %v4871 = vpack.c.b16 %v4862, %v4861
        %v4872 = vpack.c.b16 %v4864, %v4863
        %4881 = vmatprep.subr.bf16.mxu0 0
        %4882 = vmatpush1.bf16.msra.mxu0 %v4865
        %4883 = vmatprep.subr.bf16.mxu0 0
        %4884 = vmatpush1.bf16.msra.mxu0 %v4866
        %4885 = vmatprep.subr.bf16.mxu0 0
        %4886 = vmatpush1.bf16.msra.mxu0 %v4867
        %4887 = vmatprep.subr.bf16.mxu0 0
        %4888 = vmatpush1.bf16.msra.mxu0 %v4868
        %4889 = vmatprep.subr.bf16.mxu0 0
        %4890 = vmatpush1.bf16.msra.mxu0 %v4869
        %4891 = vmatprep.subr.bf16.mxu0 0
        %4892 = vmatpush1.bf16.msra.mxu0 %v4870
        %4893 = vmatprep.subr.bf16.mxu0 0
        %4894 = vmatpush1.bf16.msra.mxu0 %v4871
        %4895 = vmatprep.subr.bf16.mxu0 0
        %4896 = vmatpush1.bf16.msra.mxu0 %v4872
        %4897 = vmatprep.subr.bf16.mxu0 0
        %4898 = vmatpush1.bf16.msra.mxu0 0
        %4899 = vmatprep.subr.bf16.mxu0 0
        %4900 = vmatpush1.bf16.msra.mxu0 0
        %4901 = vmatprep.subr.bf16.mxu0 0
        %4902 = vmatpush1.bf16.msra.mxu0 0
        %4903 = vmatprep.subr.bf16.mxu0 0
        %4904 = vmatpush1.bf16.msra.mxu0 0
        %4905 = vmatprep.subr.bf16.mxu0 0
        %4906 = vmatpush1.bf16.msra.mxu0 0
        %4907 = vmatprep.subr.bf16.mxu0 0
        %4908 = vmatpush1.bf16.msra.mxu0 0
        %4909 = vmatprep.subr.bf16.mxu0 0
        %4910 = vmatpush1.bf16.msra.mxu0 0
        %4911 = vmatprep.subr.bf16.mxu0 0
        %4912 = vmatpush1.bf16.msra.mxu0 0
        %4913 = vmatprep.mubr.bf16.mxu0 0
        %4914 = vmatmul.mubr.bf16.gmra.mrb[0].mxu0 %v4801
        %v4915 = vpop.f32.mrb[0].mxu0
        %v4916 = vadd.f32 0.0, %v4915
        %v4917 = vpop.f32.mrb[0].mxu0
        %v4918 = vpop.f32.mrb[0].mxu0
        %v4919 = vadd.f32 0.0, %v4918
        %v4920 = vpop.f32.mrb[0].mxu0
        %4921 = vmatprep.mubr.bf16.mxu0 0
        %4922 = vmatmul.mubr.bf16.gmra.mrb[0].mxu0 %v4802
        %v4923 = vpop.f32.mrb[0].mxu0
        %v4924 = vadd.f32 0.0, %v4923
        %v4925 = vpop.f32.mrb[0].mxu0
        %v4926 = vpop.f32.mrb[0].mxu0
        %v4927 = vadd.f32 0.0, %v4926
        %v4928 = vpop.f32.mrb[0].mxu0
        %4929 = vmatprep.mubr.bf16.mxu0 0
        %4930 = vmatmul.mubr.bf16.gmra.mrb[0].mxu0 %v4803
        %v4931 = vpop.f32.mrb[0].mxu0
        %v4932 = vadd.f32 0.0, %v4931
        %v4933 = vpop.f32.mrb[0].mxu0
        %v4934 = vpop.f32.mrb[0].mxu0
        %v4935 = vadd.f32 0.0, %v4934
        %v4936 = vpop.f32.mrb[0].mxu0
        %4937 = vmatprep.mubr.bf16.mxu0 0
        %4938 = vmatmul.mubr.bf16.gmra.mrb[0].mxu0 %v4804
        %v4939 = vpop.f32.mrb[0].mxu0
        %v4940 = vadd.f32 0.0, %v4939
        %v4941 = vpop.f32.mrb[0].mxu0
        %v4942 = vpop.f32.mrb[0].mxu0
        %v4943 = vadd.f32 0.0, %v4942
        %v4944 = vpop.f32.mrb[0].mxu0
        %4945 = vmatprep.mubr.bf16.mxu0 0
        %4946 = vmatmul.mubr.bf16.gmra.mrb[0].mxu0 %v4805
        %v4947 = vpop.f32.mrb[0].mxu0
        %v4948 = vadd.f32 0.0, %v4947
        %v4949 = vpop.f32.mrb[0].mxu0
        %v4950 = vpop.f32.mrb[0].mxu0
        %v4951 = vadd.f32 0.0, %v4950
        %v4952 = vpop.f32.mrb[0].mxu0
        %4953 = vmatprep.mubr.bf16.mxu0 0
        %4954 = vmatmul.mubr.bf16.gmra.mrb[0].mxu0 %v4806
        %v4955 = vpop.f32.mrb[0].mxu0
        %v4956 = vadd.f32 0.0, %v4955
        %v4957 = vpop.f32.mrb[0].mxu0
        %v4958 = vpop.f32.mrb[0].mxu0
        %v4959 = vadd.f32 0.0, %v4958
        %v4960 = vpop.f32.mrb[0].mxu0
        %4961 = vmatprep.mubr.bf16.mxu0 0
        %4962 = vmatmul.mubr.bf16.gmra.mrb[0].mxu0 %v4807
        %v4963 = vpop.f32.mrb[0].mxu0
        %v4964 = vadd.f32 0.0, %v4963
        %v4965 = vpop.f32.mrb[0].mxu0
        %v4966 = vpop.f32.mrb[0].mxu0
        %v4967 = vadd.f32 0.0, %v4966
        %v4968 = vpop.f32.mrb[0].mxu0
        %4969 = vmatprep.mubr.bf16.mxu0 0
        %4970 = vmatmul.mubr.bf16.gmra.mrb[0].mxu0 %v4808
        %v4971 = vpop.f32.mrb[0].mxu0
        %v4972 = vadd.f32 0.0, %v4971
        %v4973 = vpop.f32.mrb[0].mxu0
        %v4974 = vpop.f32.mrb[0].mxu0
        %v4975 = vadd.f32 0.0, %v4974
        %v4976 = vpop.f32.mrb[0].mxu0
        %4977 = vmatprep.mubr.bf16.mxu0 0
        %4978 = vmatmul.mubr.bf16.gmra.mrb[0].mxu0 %v4809
        %v4979 = vpop.f32.mrb[0].mxu0
        %v4980 = vadd.f32 0.0, %v4979
        %v4981 = vpop.f32.mrb[0].mxu0
        %v4982 = vpop.f32.mrb[0].mxu0
        %v4983 = vadd.f32 0.0, %v4982
        %v4984 = vpop.f32.mrb[0].mxu0
        %4985 = vmatprep.mubr.bf16.mxu0 0
        %4986 = vmatmul.mubr.bf16.gmra.mrb[0].mxu0 %v4810
        %v4987 = vpop.f32.mrb[0].mxu0
        %v4988 = vadd.f32 0.0, %v4987
        %v4989 = vpop.f32.mrb[0].mxu0
        %v4990 = vpop.f32.mrb[0].mxu0
        %v4991 = vadd.f32 0.0, %v4990
        %v4992 = vpop.f32.mrb[0].mxu0
        %4993 = vmatprep.mubr.bf16.mxu0 0
        %4994 = vmatmul.mubr.bf16.gmra.mrb[0].mxu0 %v4811
        %v4995 = vpop.f32.mrb[0].mxu0
        %v4996 = vadd.f32 0.0, %v4995
        %v4997 = vpop.f32.mrb[0].mxu0
        %v4998 = vpop.f32.mrb[0].mxu0
        %v4999 = vadd.f32 0.0, %v4998
        %v5000 = vpop.f32.mrb[0].mxu0
        %5001 = vmatprep.mubr.bf16.mxu0 0
        %5002 = vmatmul.mubr.bf16.gmra.mrb[0].mxu0 %v4812
        %v5003 = vpop.f32.mrb[0].mxu0
        %v5004 = vadd.f32 0.0, %v5003
        %v5005 = vpop.f32.mrb[0].mxu0
        %v5006 = vpop.f32.mrb[0].mxu0
        %v5007 = vadd.f32 0.0, %v5006
        %v5008 = vpop.f32.mrb[0].mxu0
        %5009 = vmatprep.mubr.bf16.mxu0 0
        %5010 = vmatmul.mubr.bf16.gmra.mrb[0].mxu0 %v4813
        %v5011 = vpop.f32.mrb[0].mxu0
        %v5012 = vadd.f32 0.0, %v5011
        %v5013 = vpop.f32.mrb[0].mxu0
        %v5014 = vpop.f32.mrb[0].mxu0
        %v5015 = vadd.f32 0.0, %v5014
        %v5016 = vpop.f32.mrb[0].mxu0
        %5017 = vmatprep.mubr.bf16.mxu0 0
        %5018 = vmatmul.mubr.bf16.gmra.mrb[0].mxu0 %v4814
        %v5019 = vpop.f32.mrb[0].mxu0
        %v5020 = vadd.f32 0.0, %v5019
        %v5021 = vpop.f32.mrb[0].mxu0
        %v5022 = vpop.f32.mrb[0].mxu0
        %v5023 = vadd.f32 0.0, %v5022
        %v5024 = vpop.f32.mrb[0].mxu0
        %5025 = vmatprep.mubr.bf16.mxu0 0
        %5026 = vmatmul.mubr.bf16.gmra.mrb[0].mxu0 %v4815
        %v5027 = vpop.f32.mrb[0].mxu0
        %v5028 = vadd.f32 0.0, %v5027
        %v5029 = vpop.f32.mrb[0].mxu0
        %v5030 = vpop.f32.mrb[0].mxu0
        %v5031 = vadd.f32 0.0, %v5030
        %v5032 = vpop.f32.mrb[0].mxu0
        %5033 = vmatprep.mubr.bf16.mxu0 0
        %5034 = vmatmul.mubr.bf16.gmra.mrb[0].mxu0 %v4816
        %v5035 = vpop.f32.mrb[0].mxu0
        %v5036 = vadd.f32 0.0, %v5035
        %v5037 = vpop.f32.mrb[0].mxu0
        %v5038 = vpop.f32.mrb[0].mxu0
        %v5039 = vadd.f32 0.0, %v5038
        %v5040 = vpop.f32.mrb[0].mxu0
        %5041 = vdwg.mxu0
        %v5074 = vunpack.c.l.b16 %v4640
        %v5075 = vunpack.c.l.b16 %v4641
        %v5076 = vunpack.c.l.b16 %v4642
        %v5077 = vunpack.c.l.b16 %v4643
        %v5078 = vunpack.c.l.b16 %v4644
        %v5079 = vunpack.c.l.b16 %v4645
        %v5080 = vunpack.c.l.b16 %v4646
        %v5081 = vunpack.c.l.b16 %v4647
        %v5082 = vunpack.c.l.b16 %v4648
        %v5083 = vunpack.c.l.b16 %v4649
        %v5084 = vunpack.c.l.b16 %v4650
        %v5085 = vunpack.c.l.b16 %v4651
        %v5086 = vunpack.c.l.b16 %v4652
        %v5087 = vunpack.c.l.b16 %v4653
        %v5088 = vunpack.c.l.b16 %v4654
        %v5089 = vunpack.c.l.b16 %v4655
        %v5090 = vunpack.c.l.b16 %v4656
        %v5091 = vunpack.c.l.b16 %v4657
        %v5092 = vunpack.c.l.b16 %v4658
        %v5093 = vunpack.c.l.b16 %v4659
        %v5094 = vunpack.c.l.b16 %v4660
        %v5095 = vunpack.c.l.b16 %v4661
        %v5096 = vunpack.c.l.b16 %v4662
        %v5097 = vunpack.c.l.b16 %v4663
        %v5098 = vunpack.c.l.b16 %v4664
        %v5099 = vunpack.c.l.b16 %v4665
        %v5100 = vunpack.c.l.b16 %v4666
        %v5101 = vunpack.c.l.b16 %v4667
        %v5102 = vunpack.c.l.b16 %v4668
        %v5103 = vunpack.c.l.b16 %v4669
        %v5104 = vunpack.c.l.b16 %v4670
        %v5105 = vunpack.c.l.b16 %v4671
        %v5106 = vpack.c.b16 %v5075, %v5074
        %v5107 = vpack.c.b16 %v5077, %v5076
        %v5108 = vpack.c.b16 %v5079, %v5078
        %v5109 = vpack.c.b16 %v5081, %v5080
        %v5110 = vpack.c.b16 %v5083, %v5082
        %v5111 = vpack.c.b16 %v5085, %v5084
        %v5112 = vpack.c.b16 %v5087, %v5086
        %v5113 = vpack.c.b16 %v5089, %v5088
        %v5114 = vpack.c.b16 %v5091, %v5090
        %v5115 = vpack.c.b16 %v5093, %v5092
        %v5116 = vpack.c.b16 %v5095, %v5094
        %v5117 = vpack.c.b16 %v5097, %v5096
        %v5118 = vpack.c.b16 %v5099, %v5098
        %v5119 = vpack.c.b16 %v5101, %v5100
        %v5120 = vpack.c.b16 %v5103, %v5102
        %v5121 = vpack.c.b16 %v5105, %v5104
        %v5154 = vunpack.c.l.b16 %v4672
        %v5155 = vunpack.c.l.b16 %v4673
        %v5156 = vunpack.c.l.b16 %v4674
        %v5157 = vunpack.c.l.b16 %v4675
        %v5158 = vunpack.c.l.b16 %v4676
        %v5159 = vunpack.c.l.b16 %v4677
        %v5160 = vunpack.c.l.b16 %v4678
        %v5161 = vunpack.c.l.b16 %v4679
        %v5162 = vunpack.c.l.b16 %v4680
        %v5163 = vunpack.c.l.b16 %v4681
        %v5164 = vunpack.c.l.b16 %v4682
        %v5165 = vunpack.c.l.b16 %v4683
        %v5166 = vunpack.c.l.b16 %v4684
        %v5167 = vunpack.c.l.b16 %v4685
        %v5168 = vunpack.c.l.b16 %v4686
        %v5169 = vunpack.c.l.b16 %v4687
        %v5170 = vpack.c.b16 %v5155, %v5154
        %v5171 = vpack.c.b16 %v5157, %v5156
        %v5172 = vpack.c.b16 %v5159, %v5158
        %v5173 = vpack.c.b16 %v5161, %v5160
        %v5174 = vpack.c.b16 %v5163, %v5162
        %v5175 = vpack.c.b16 %v5165, %v5164
        %v5176 = vpack.c.b16 %v5167, %v5166
        %v5177 = vpack.c.b16 %v5169, %v5168
        %5186 = vmatprep.subr.bf16.mxu0 0
        %5187 = vmatpush1.bf16.msra.mxu0 %v5170
        %5188 = vmatprep.subr.bf16.mxu0 0
        %5189 = vmatpush1.bf16.msra.mxu0 %v5171
        %5190 = vmatprep.subr.bf16.mxu0 0
        %5191 = vmatpush1.bf16.msra.mxu0 %v5172
        %5192 = vmatprep.subr.bf16.mxu0 0
        %5193 = vmatpush1.bf16.msra.mxu0 %v5173
        %5194 = vmatprep.subr.bf16.mxu0 0
        %5195 = vmatpush1.bf16.msra.mxu0 %v5174
        %5196 = vmatprep.subr.bf16.mxu0 0
        %5197 = vmatpush1.bf16.msra.mxu0 %v5175
        %5198 = vmatprep.subr.bf16.mxu0 0
        %5199 = vmatpush1.bf16.msra.mxu0 %v5176
        %5200 = vmatprep.subr.bf16.mxu0 0
        %5201 = vmatpush1.bf16.msra.mxu0 %v5177
        %5202 = vmatprep.subr.bf16.mxu0 0
        %5203 = vmatpush1.bf16.msra.mxu0 0
        %5204 = vmatprep.subr.bf16.mxu0 0
        %5205 = vmatpush1.bf16.msra.mxu0 0
        %5206 = vmatprep.subr.bf16.mxu0 0
        %5207 = vmatpush1.bf16.msra.mxu0 0
        %5208 = vmatprep.subr.bf16.mxu0 0
        %5209 = vmatpush1.bf16.msra.mxu0 0
        %5210 = vmatprep.subr.bf16.mxu0 0
        %5211 = vmatpush1.bf16.msra.mxu0 0
        %5212 = vmatprep.subr.bf16.mxu0 0
        %5213 = vmatpush1.bf16.msra.mxu0 0
        %5214 = vmatprep.subr.bf16.mxu0 0
        %5215 = vmatpush1.bf16.msra.mxu0 0
        %5216 = vmatprep.subr.bf16.mxu0 0
        %5217 = vmatpush1.bf16.msra.mxu0 0
        %5218 = vmatprep.mubr.bf16.mxu0 0
        %5219 = vmatmul.mubr.bf16.gmra.mrb[0].mxu0 %v5106
        %v5220 = vpop.f32.mrb[0].mxu0
        %v5221 = vadd.f32 %v4916, %v5220
        %v5222 = vpop.f32.mrb[0].mxu0
        %v5223 = vpop.f32.mrb[0].mxu0
        %v5224 = vadd.f32 %v4919, %v5223
        %v5225 = vpop.f32.mrb[0].mxu0
        %5226 = vmatprep.mubr.bf16.mxu0 0
        %5227 = vmatmul.mubr.bf16.gmra.mrb[0].mxu0 %v5107
        %v5228 = vpop.f32.mrb[0].mxu0
        %v5229 = vadd.f32 %v4924, %v5228
        %v5230 = vpop.f32.mrb[0].mxu0
        %v5231 = vpop.f32.mrb[0].mxu0
        %v5232 = vadd.f32 %v4927, %v5231
        %v5233 = vpop.f32.mrb[0].mxu0
        %5234 = vmatprep.mubr.bf16.mxu0 0
        %5235 = vmatmul.mubr.bf16.gmra.mrb[0].mxu0 %v5108
        %v5236 = vpop.f32.mrb[0].mxu0
        %v5237 = vadd.f32 %v4932, %v5236
        %v5238 = vpop.f32.mrb[0].mxu0
        %v5239 = vpop.f32.mrb[0].mxu0
        %v5240 = vadd.f32 %v4935, %v5239
        %v5241 = vpop.f32.mrb[0].mxu0
        %5242 = vmatprep.mubr.bf16.mxu0 0
        %5243 = vmatmul.mubr.bf16.gmra.mrb[0].mxu0 %v5109
        %v5244 = vpop.f32.mrb[0].mxu0
        %v5245 = vadd.f32 %v4940, %v5244
        %v5246 = vpop.f32.mrb[0].mxu0
        %v5247 = vpop.f32.mrb[0].mxu0
        %v5248 = vadd.f32 %v4943, %v5247
        %v5249 = vpop.f32.mrb[0].mxu0
        %5250 = vmatprep.mubr.bf16.mxu0 0
        %5251 = vmatmul.mubr.bf16.gmra.mrb[0].mxu0 %v5110
        %v5252 = vpop.f32.mrb[0].mxu0
        %v5253 = vadd.f32 %v4948, %v5252
        %v5254 = vpop.f32.mrb[0].mxu0
        %v5255 = vpop.f32.mrb[0].mxu0
        %v5256 = vadd.f32 %v4951, %v5255
        %v5257 = vpop.f32.mrb[0].mxu0
        %5258 = vmatprep.mubr.bf16.mxu0 0
        %5259 = vmatmul.mubr.bf16.gmra.mrb[0].mxu0 %v5111
        %v5260 = vpop.f32.mrb[0].mxu0
        %v5261 = vadd.f32 %v4956, %v5260
        %v5262 = vpop.f32.mrb[0].mxu0
        %v5263 = vpop.f32.mrb[0].mxu0
        %v5264 = vadd.f32 %v4959, %v5263
        %v5265 = vpop.f32.mrb[0].mxu0
        %5266 = vmatprep.mubr.bf16.mxu0 0
        %5267 = vmatmul.mubr.bf16.gmra.mrb[0].mxu0 %v5112
        %v5268 = vpop.f32.mrb[0].mxu0
        %v5269 = vadd.f32 %v4964, %v5268
        %v5270 = vpop.f32.mrb[0].mxu0
        %v5271 = vpop.f32.mrb[0].mxu0
        %v5272 = vadd.f32 %v4967, %v5271
        %v5273 = vpop.f32.mrb[0].mxu0
        %5274 = vmatprep.mubr.bf16.mxu0 0
        %5275 = vmatmul.mubr.bf16.gmra.mrb[0].mxu0 %v5113
        %v5276 = vpop.f32.mrb[0].mxu0
        %v5277 = vadd.f32 %v4972, %v5276
        %v5278 = vpop.f32.mrb[0].mxu0
        %v5279 = vpop.f32.mrb[0].mxu0
        %v5280 = vadd.f32 %v4975, %v5279
        %v5281 = vpop.f32.mrb[0].mxu0
        %5282 = vmatprep.mubr.bf16.mxu0 0
        %5283 = vmatmul.mubr.bf16.gmra.mrb[0].mxu0 %v5114
        %v5284 = vpop.f32.mrb[0].mxu0
        %v5285 = vadd.f32 %v4980, %v5284
        %v5286 = vpop.f32.mrb[0].mxu0
        %v5287 = vpop.f32.mrb[0].mxu0
        %v5288 = vadd.f32 %v4983, %v5287
        %v5289 = vpop.f32.mrb[0].mxu0
        %5290 = vmatprep.mubr.bf16.mxu0 0
        %5291 = vmatmul.mubr.bf16.gmra.mrb[0].mxu0 %v5115
        %v5292 = vpop.f32.mrb[0].mxu0
        %v5293 = vadd.f32 %v4988, %v5292
        %v5294 = vpop.f32.mrb[0].mxu0
        %v5295 = vpop.f32.mrb[0].mxu0
        %v5296 = vadd.f32 %v4991, %v5295
        %v5297 = vpop.f32.mrb[0].mxu0
        %5298 = vmatprep.mubr.bf16.mxu0 0
        %5299 = vmatmul.mubr.bf16.gmra.mrb[0].mxu0 %v5116
        %v5300 = vpop.f32.mrb[0].mxu0
        %v5301 = vadd.f32 %v4996, %v5300
        %v5302 = vpop.f32.mrb[0].mxu0
        %v5303 = vpop.f32.mrb[0].mxu0
        %v5304 = vadd.f32 %v4999, %v5303
        %v5305 = vpop.f32.mrb[0].mxu0
        %5306 = vmatprep.mubr.bf16.mxu0 0
        %5307 = vmatmul.mubr.bf16.gmra.mrb[0].mxu0 %v5117
        %v5308 = vpop.f32.mrb[0].mxu0
        %v5309 = vadd.f32 %v5004, %v5308
        %v5310 = vpop.f32.mrb[0].mxu0
        %v5311 = vpop.f32.mrb[0].mxu0
        %v5312 = vadd.f32 %v5007, %v5311
        %v5313 = vpop.f32.mrb[0].mxu0
        %5314 = vmatprep.mubr.bf16.mxu0 0
        %5315 = vmatmul.mubr.bf16.gmra.mrb[0].mxu0 %v5118
        %v5316 = vpop.f32.mrb[0].mxu0
        %v5317 = vadd.f32 %v5012, %v5316
        %v5318 = vpop.f32.mrb[0].mxu0
        %v5319 = vpop.f32.mrb[0].mxu0
        %v5320 = vadd.f32 %v5015, %v5319
        %v5321 = vpop.f32.mrb[0].mxu0
        %5322 = vmatprep.mubr.bf16.mxu0 0
        %5323 = vmatmul.mubr.bf16.gmra.mrb[0].mxu0 %v5119
        %v5324 = vpop.f32.mrb[0].mxu0
        %v5325 = vadd.f32 %v5020, %v5324
        %v5326 = vpop.f32.mrb[0].mxu0
        %v5327 = vpop.f32.mrb[0].mxu0
        %v5328 = vadd.f32 %v5023, %v5327
        %v5329 = vpop.f32.mrb[0].mxu0
        %5330 = vmatprep.mubr.bf16.mxu0 0
        %5331 = vmatmul.mubr.bf16.gmra.mrb[0].mxu0 %v5120
        %v5332 = vpop.f32.mrb[0].mxu0
        %v5333 = vadd.f32 %v5028, %v5332
        %v5334 = vpop.f32.mrb[0].mxu0
        %v5335 = vpop.f32.mrb[0].mxu0
        %v5336 = vadd.f32 %v5031, %v5335
        %v5337 = vpop.f32.mrb[0].mxu0
        %5338 = vmatprep.mubr.bf16.mxu0 0
        %5339 = vmatmul.mubr.bf16.gmra.mrb[0].mxu0 %v5121
        %v5340 = vpop.f32.mrb[0].mxu0
        %v5341 = vadd.f32 %v5036, %v5340
        %v5342 = vpop.f32.mrb[0].mxu0
        %v5343 = vpop.f32.mrb[0].mxu0
        %v5344 = vadd.f32 %v5039, %v5343
        %v5345 = vpop.f32.mrb[0].mxu0
        %5346 = vdwg.mxu0
        %v5347 = vld [vmem:[%s3752] sm:$0xf]
        %v5348 = vld [vmem:[%s3752 + $0x4] sm:$0xf]
        %v5349 = vld [vmem:[%s3752 + $0x8] sm:$0xf]
        %v5350 = vld [vmem:[%s3752 + $0xc] sm:$0xf]
        %v5351 = vld [vmem:[%s3752 + $0x10] sm:$0xf]
        %v5352 = vld [vmem:[%s3752 + $0x14] sm:$0xf]
        %v5353 = vld [vmem:[%s3752 + $0x18] sm:$0xf]
        %v5354 = vld [vmem:[%s3752 + $0x1c] sm:$0xf]
        %v5355 = vld [vmem:[%s3752 + $0x28] sm:$0xf]
        %v5356 = vld [vmem:[%s3752 + $0x2c] sm:$0xf]
        %v5357 = vld [vmem:[%s3752 + $0x30] sm:$0xf]
        %v5358 = vld [vmem:[%s3752 + $0x34] sm:$0xf]
        %v5359 = vld [vmem:[%s3752 + $0x38] sm:$0xf]
        %v5360 = vld [vmem:[%s3752 + $0x3c] sm:$0xf]
        %v5361 = vld [vmem:[%s3752 + $0x40] sm:$0xf]
        %v5362 = vld [vmem:[%s3752 + $0x44] sm:$0xf]
        %v5363 = vld [vmem:[%s3752 + $0x50] sm:$0xf]
        %v5364 = vld [vmem:[%s3752 + $0x54] sm:$0xf]
        %v5365 = vld [vmem:[%s3752 + $0x58] sm:$0xf]
        %v5366 = vld [vmem:[%s3752 + $0x5c] sm:$0xf]
        %v5367 = vld [vmem:[%s3752 + $0x60] sm:$0xf]
        %v5368 = vld [vmem:[%s3752 + $0x64] sm:$0xf]
        %v5369 = vld [vmem:[%s3752 + $0x68] sm:$0xf]
        %v5370 = vld [vmem:[%s3752 + $0x6c] sm:$0xf]
        %v5371 = vld [vmem:[%s3752 + $0x78] sm:$0xf]
        %v5372 = vld [vmem:[%s3752 + $0x7c] sm:$0xf]
        %v5373 = vld [vmem:[%s3752 + $0x80] sm:$0xf]
        %v5374 = vld [vmem:[%s3752 + $0x84] sm:$0xf]
        %v5375 = vld [vmem:[%s3752 + $0x88] sm:$0xf]
        %v5376 = vld [vmem:[%s3752 + $0x8c] sm:$0xf]
        %v5377 = vld [vmem:[%s3752 + $0x90] sm:$0xf]
        %v5378 = vld [vmem:[%s3752 + $0x94] sm:$0xf]
        %s5379 = scalar_lea.vmem [#allocation17], 128
        %v5380 = vld [vmem:[%s5379] sm:$0xf]
        %v5381 = vld [vmem:[%s5379 + $0x4] sm:$0xf]
        %v5382 = vld [vmem:[%s5379 + $0x8] sm:$0xf]
        %v5383 = vld [vmem:[%s5379 + $0xc] sm:$0xf]
        %v5384 = vld [vmem:[%s5379 + $0x10] sm:$0xf]
        %v5385 = vld [vmem:[%s5379 + $0x14] sm:$0xf]
        %v5386 = vld [vmem:[%s5379 + $0x18] sm:$0xf]
        %v5387 = vld [vmem:[%s5379 + $0x1c] sm:$0xf]
        %v5388 = vld [vmem:[%s5379 + $0x20] sm:$0xf]
        %v5389 = vld [vmem:[%s5379 + $0x24] sm:$0xf]
        %v5390 = vld [vmem:[%s5379 + $0x28] sm:$0xf]
        %v5391 = vld [vmem:[%s5379 + $0x2c] sm:$0xf]
        %v5392 = vld [vmem:[%s5379 + $0x30] sm:$0xf]
        %v5393 = vld [vmem:[%s5379 + $0x34] sm:$0xf]
        %v5394 = vld [vmem:[%s5379 + $0x38] sm:$0xf]
        %v5395 = vld [vmem:[%s5379 + $0x3c] sm:$0xf]
        %v5428 = vunpack.c.l.b16 %v5347
        %v5429 = vunpack.c.l.b16 %v5348
        %v5430 = vunpack.c.l.b16 %v5349
        %v5431 = vunpack.c.l.b16 %v5350
        %v5432 = vunpack.c.l.b16 %v5351
        %v5433 = vunpack.c.l.b16 %v5352
        %v5434 = vunpack.c.l.b16 %v5353
        %v5435 = vunpack.c.l.b16 %v5354
        %v5436 = vunpack.c.l.b16 %v5355
        %v5437 = vunpack.c.l.b16 %v5356
        %v5438 = vunpack.c.l.b16 %v5357
        %v5439 = vunpack.c.l.b16 %v5358
        %v5440 = vunpack.c.l.b16 %v5359
        %v5441 = vunpack.c.l.b16 %v5360
        %v5442 = vunpack.c.l.b16 %v5361
        %v5443 = vunpack.c.l.b16 %v5362
        %v5444 = vunpack.c.l.b16 %v5363
        %v5445 = vunpack.c.l.b16 %v5364
        %v5446 = vunpack.c.l.b16 %v5365
        %v5447 = vunpack.c.l.b16 %v5366
        %v5448 = vunpack.c.l.b16 %v5367
        %v5449 = vunpack.c.l.b16 %v5368
        %v5450 = vunpack.c.l.b16 %v5369
        %v5451 = vunpack.c.l.b16 %v5370
        %v5452 = vunpack.c.l.b16 %v5371
        %v5453 = vunpack.c.l.b16 %v5372
        %v5454 = vunpack.c.l.b16 %v5373
        %v5455 = vunpack.c.l.b16 %v5374
        %v5456 = vunpack.c.l.b16 %v5375
        %v5457 = vunpack.c.l.b16 %v5376
        %v5458 = vunpack.c.l.b16 %v5377
        %v5459 = vunpack.c.l.b16 %v5378
        %v5460 = vpack.c.b16 %v5429, %v5428
        %v5461 = vpack.c.b16 %v5431, %v5430
        %v5462 = vpack.c.b16 %v5433, %v5432
        %v5463 = vpack.c.b16 %v5435, %v5434
        %v5464 = vpack.c.b16 %v5437, %v5436
        %v5465 = vpack.c.b16 %v5439, %v5438
        %v5466 = vpack.c.b16 %v5441, %v5440
        %v5467 = vpack.c.b16 %v5443, %v5442
        %v5468 = vpack.c.b16 %v5445, %v5444
        %v5469 = vpack.c.b16 %v5447, %v5446
        %v5470 = vpack.c.b16 %v5449, %v5448
        %v5471 = vpack.c.b16 %v5451, %v5450
        %v5472 = vpack.c.b16 %v5453, %v5452
        %v5473 = vpack.c.b16 %v5455, %v5454
        %v5474 = vpack.c.b16 %v5457, %v5456
        %v5475 = vpack.c.b16 %v5459, %v5458
        %v5508 = vunpack.c.l.b16 %v5380
        %v5509 = vunpack.c.l.b16 %v5381
        %v5510 = vunpack.c.l.b16 %v5382
        %v5511 = vunpack.c.l.b16 %v5383
        %v5512 = vunpack.c.l.b16 %v5384
        %v5513 = vunpack.c.l.b16 %v5385
        %v5514 = vunpack.c.l.b16 %v5386
        %v5515 = vunpack.c.l.b16 %v5387
        %v5516 = vunpack.c.l.b16 %v5388
        %v5517 = vunpack.c.l.b16 %v5389
        %v5518 = vunpack.c.l.b16 %v5390
        %v5519 = vunpack.c.l.b16 %v5391
        %v5520 = vunpack.c.l.b16 %v5392
        %v5521 = vunpack.c.l.b16 %v5393
        %v5522 = vunpack.c.l.b16 %v5394
        %v5523 = vunpack.c.l.b16 %v5395
        %v5524 = vpack.c.b16 %v5509, %v5508
        %v5525 = vpack.c.b16 %v5511, %v5510
        %v5526 = vpack.c.b16 %v5513, %v5512
        %v5527 = vpack.c.b16 %v5515, %v5514
        %v5528 = vpack.c.b16 %v5517, %v5516
        %v5529 = vpack.c.b16 %v5519, %v5518
        %v5530 = vpack.c.b16 %v5521, %v5520
        %v5531 = vpack.c.b16 %v5523, %v5522
        %5540 = vmatprep.subr.bf16.mxu0 0
        %5541 = vmatpush1.bf16.msra.mxu0 %v5524
        %5542 = vmatprep.subr.bf16.mxu0 0
        %5543 = vmatpush1.bf16.msra.mxu0 %v5525
        %5544 = vmatprep.subr.bf16.mxu0 0
        %5545 = vmatpush1.bf16.msra.mxu0 %v5526
        %5546 = vmatprep.subr.bf16.mxu0 0
        %5547 = vmatpush1.bf16.msra.mxu0 %v5527
        %5548 = vmatprep.subr.bf16.mxu0 0
        %5549 = vmatpush1.bf16.msra.mxu0 %v5528
        %5550 = vmatprep.subr.bf16.mxu0 0
        %5551 = vmatpush1.bf16.msra.mxu0 %v5529
        %5552 = vmatprep.subr.bf16.mxu0 0
        %5553 = vmatpush1.bf16.msra.mxu0 %v5530
        %5554 = vmatprep.subr.bf16.mxu0 0
        %5555 = vmatpush1.bf16.msra.mxu0 %v5531
        %5556 = vmatprep.subr.bf16.mxu0 0
        %5557 = vmatpush1.bf16.msra.mxu0 0
        %5558 = vmatprep.subr.bf16.mxu0 0
        %5559 = vmatpush1.bf16.msra.mxu0 0
        %5560 = vmatprep.subr.bf16.mxu0 0
        %5561 = vmatpush1.bf16.msra.mxu0 0
        %5562 = vmatprep.subr.bf16.mxu0 0
        %5563 = vmatpush1.bf16.msra.mxu0 0
        %5564 = vmatprep.subr.bf16.mxu0 0
        %5565 = vmatpush1.bf16.msra.mxu0 0
        %5566 = vmatprep.subr.bf16.mxu0 0
        %5567 = vmatpush1.bf16.msra.mxu0 0
        %5568 = vmatprep.subr.bf16.mxu0 0
        %5569 = vmatpush1.bf16.msra.mxu0 0
        %5570 = vmatprep.subr.bf16.mxu0 0
        %5571 = vmatpush1.bf16.msra.mxu0 0
        %5572 = vmatprep.mubr.bf16.mxu0 0
        %5573 = vmatmul.mubr.bf16.gmra.mrb[0].mxu0 %v5460
        %v5574 = vpop.f32.mrb[0].mxu0
        %v5575 = vadd.f32 0.0, %v5574
        %v5576 = vpop.f32.mrb[0].mxu0
        %v5577 = vpop.f32.mrb[0].mxu0
        %v5578 = vadd.f32 0.0, %v5577
        %v5579 = vpop.f32.mrb[0].mxu0
        %5580 = vmatprep.mubr.bf16.mxu0 0
        %5581 = vmatmul.mubr.bf16.gmra.mrb[0].mxu0 %v5461
        %v5582 = vpop.f32.mrb[0].mxu0
        %v5583 = vadd.f32 0.0, %v5582
        %v5584 = vpop.f32.mrb[0].mxu0
        %v5585 = vpop.f32.mrb[0].mxu0
        %v5586 = vadd.f32 0.0, %v5585
        %v5587 = vpop.f32.mrb[0].mxu0
        %5588 = vmatprep.mubr.bf16.mxu0 0
        %5589 = vmatmul.mubr.bf16.gmra.mrb[0].mxu0 %v5462
        %v5590 = vpop.f32.mrb[0].mxu0
        %v5591 = vadd.f32 0.0, %v5590
        %v5592 = vpop.f32.mrb[0].mxu0
        %v5593 = vpop.f32.mrb[0].mxu0
        %v5594 = vadd.f32 0.0, %v5593
        %v5595 = vpop.f32.mrb[0].mxu0
        %5596 = vmatprep.mubr.bf16.mxu0 0
        %5597 = vmatmul.mubr.bf16.gmra.mrb[0].mxu0 %v5463
        %v5598 = vpop.f32.mrb[0].mxu0
        %v5599 = vadd.f32 0.0, %v5598
        %v5600 = vpop.f32.mrb[0].mxu0
        %v5601 = vpop.f32.mrb[0].mxu0
        %v5602 = vadd.f32 0.0, %v5601
        %v5603 = vpop.f32.mrb[0].mxu0
        %5604 = vmatprep.mubr.bf16.mxu0 0
        %5605 = vmatmul.mubr.bf16.gmra.mrb[0].mxu0 %v5464
        %v5606 = vpop.f32.mrb[0].mxu0
        %v5607 = vadd.f32 0.0, %v5606
        %v5608 = vpop.f32.mrb[0].mxu0
        %v5609 = vpop.f32.mrb[0].mxu0
        %v5610 = vadd.f32 0.0, %v5609
        %v5611 = vpop.f32.mrb[0].mxu0
        %5612 = vmatprep.mubr.bf16.mxu0 0
        %5613 = vmatmul.mubr.bf16.gmra.mrb[0].mxu0 %v5465
        %v5614 = vpop.f32.mrb[0].mxu0
        %v5615 = vadd.f32 0.0, %v5614
        %v5616 = vpop.f32.mrb[0].mxu0
        %v5617 = vpop.f32.mrb[0].mxu0
        %v5618 = vadd.f32 0.0, %v5617
        %v5619 = vpop.f32.mrb[0].mxu0
        %5620 = vmatprep.mubr.bf16.mxu0 0
        %5621 = vmatmul.mubr.bf16.gmra.mrb[0].mxu0 %v5466
        %v5622 = vpop.f32.mrb[0].mxu0
        %v5623 = vadd.f32 0.0, %v5622
        %v5624 = vpop.f32.mrb[0].mxu0
        %v5625 = vpop.f32.mrb[0].mxu0
        %v5626 = vadd.f32 0.0, %v5625
        %v5627 = vpop.f32.mrb[0].mxu0
        %5628 = vmatprep.mubr.bf16.mxu0 0
        %5629 = vmatmul.mubr.bf16.gmra.mrb[0].mxu0 %v5467
        %v5630 = vpop.f32.mrb[0].mxu0
        %v5631 = vadd.f32 0.0, %v5630
        %v5632 = vpop.f32.mrb[0].mxu0
        %v5633 = vpop.f32.mrb[0].mxu0
        %v5634 = vadd.f32 0.0, %v5633
        %v5635 = vpop.f32.mrb[0].mxu0
        %5636 = vmatprep.mubr.bf16.mxu0 0
        %5637 = vmatmul.mubr.bf16.gmra.mrb[0].mxu0 %v5468
        %v5638 = vpop.f32.mrb[0].mxu0
        %v5639 = vadd.f32 0.0, %v5638
        %v5640 = vpop.f32.mrb[0].mxu0
        %v5641 = vpop.f32.mrb[0].mxu0
        %v5642 = vadd.f32 0.0, %v5641
        %v5643 = vpop.f32.mrb[0].mxu0
        %5644 = vmatprep.mubr.bf16.mxu0 0
        %5645 = vmatmul.mubr.bf16.gmra.mrb[0].mxu0 %v5469
        %v5646 = vpop.f32.mrb[0].mxu0
        %v5647 = vadd.f32 0.0, %v5646
        %v5648 = vpop.f32.mrb[0].mxu0
        %v5649 = vpop.f32.mrb[0].mxu0
        %v5650 = vadd.f32 0.0, %v5649
        %v5651 = vpop.f32.mrb[0].mxu0
        %5652 = vmatprep.mubr.bf16.mxu0 0
        %5653 = vmatmul.mubr.bf16.gmra.mrb[0].mxu0 %v5470
        %v5654 = vpop.f32.mrb[0].mxu0
        %v5655 = vadd.f32 0.0, %v5654
        %v5656 = vpop.f32.mrb[0].mxu0
        %v5657 = vpop.f32.mrb[0].mxu0
        %v5658 = vadd.f32 0.0, %v5657
        %v5659 = vpop.f32.mrb[0].mxu0
        %5660 = vmatprep.mubr.bf16.mxu0 0
        %5661 = vmatmul.mubr.bf16.gmra.mrb[0].mxu0 %v5471
        %v5662 = vpop.f32.mrb[0].mxu0
        %v5663 = vadd.f32 0.0, %v5662
        %v5664 = vpop.f32.mrb[0].mxu0
        %v5665 = vpop.f32.mrb[0].mxu0
        %v5666 = vadd.f32 0.0, %v5665
        %v5667 = vpop.f32.mrb[0].mxu0
        %5668 = vmatprep.mubr.bf16.mxu0 0
        %5669 = vmatmul.mubr.bf16.gmra.mrb[0].mxu0 %v5472
        %v5670 = vpop.f32.mrb[0].mxu0
        %v5671 = vadd.f32 0.0, %v5670
        %v5672 = vpop.f32.mrb[0].mxu0
        %v5673 = vpop.f32.mrb[0].mxu0
        %v5674 = vadd.f32 0.0, %v5673
        %v5675 = vpop.f32.mrb[0].mxu0
        %5676 = vmatprep.mubr.bf16.mxu0 0
        %5677 = vmatmul.mubr.bf16.gmra.mrb[0].mxu0 %v5473
        %v5678 = vpop.f32.mrb[0].mxu0
        %v5679 = vadd.f32 0.0, %v5678
        %v5680 = vpop.f32.mrb[0].mxu0
        %v5681 = vpop.f32.mrb[0].mxu0
        %v5682 = vadd.f32 0.0, %v5681
        %v5683 = vpop.f32.mrb[0].mxu0
        %5684 = vmatprep.mubr.bf16.mxu0 0
        %5685 = vmatmul.mubr.bf16.gmra.mrb[0].mxu0 %v5474
        %v5686 = vpop.f32.mrb[0].mxu0
        %v5687 = vadd.f32 0.0, %v5686
        %v5688 = vpop.f32.mrb[0].mxu0
        %v5689 = vpop.f32.mrb[0].mxu0
        %v5690 = vadd.f32 0.0, %v5689
        %v5691 = vpop.f32.mrb[0].mxu0
        %5692 = vmatprep.mubr.bf16.mxu0 0
        %5693 = vmatmul.mubr.bf16.gmra.mrb[0].mxu0 %v5475
        %v5694 = vpop.f32.mrb[0].mxu0
        %v5695 = vadd.f32 0.0, %v5694
        %v5696 = vpop.f32.mrb[0].mxu0
        %v5697 = vpop.f32.mrb[0].mxu0
        %v5698 = vadd.f32 0.0, %v5697
        %v5699 = vpop.f32.mrb[0].mxu0
        %5700 = vdwg.mxu0
        %v5701 = vadd.f32 %v5221, %v5575
        %v5702 = vadd.f32 %v5224, %v5578
        %v5703 = vadd.f32 %v5229, %v5583
        %v5704 = vadd.f32 %v5232, %v5586
        %v5705 = vadd.f32 %v5237, %v5591
        %v5706 = vadd.f32 %v5240, %v5594
        %v5707 = vadd.f32 %v5245, %v5599
        %v5708 = vadd.f32 %v5248, %v5602
        %v5709 = vadd.f32 %v5253, %v5607
        %v5710 = vadd.f32 %v5256, %v5610
        %v5711 = vadd.f32 %v5261, %v5615
        %v5712 = vadd.f32 %v5264, %v5618
        %v5713 = vadd.f32 %v5269, %v5623
        %v5714 = vadd.f32 %v5272, %v5626
        %v5715 = vadd.f32 %v5277, %v5631
        %v5716 = vadd.f32 %v5280, %v5634
        %v5717 = vadd.f32 %v5285, %v5639
        %v5718 = vadd.f32 %v5288, %v5642
        %v5719 = vadd.f32 %v5293, %v5647
        %v5720 = vadd.f32 %v5296, %v5650
        %v5721 = vadd.f32 %v5301, %v5655
        %v5722 = vadd.f32 %v5304, %v5658
        %v5723 = vadd.f32 %v5309, %v5663
        %v5724 = vadd.f32 %v5312, %v5666
        %v5725 = vadd.f32 %v5317, %v5671
        %v5726 = vadd.f32 %v5320, %v5674
        %v5727 = vadd.f32 %v5325, %v5679
        %v5728 = vadd.f32 %v5328, %v5682
        %v5729 = vadd.f32 %v5333, %v5687
        %v5730 = vadd.f32 %v5336, %v5690
        %v5731 = vadd.f32 %v5341, %v5695
        %v5732 = vadd.f32 %v5344, %v5698
        %v5733 = vld [vmem:[%s16] sm:$0x7]
        %v5734 = vlaneseq
        %v5735 = vshrl.u32 %v5734, 7
        %v5736 = vsub.s32 0, %v5735
        %v5737 = vrot.slane %v5733, %v5736
        %v5738 = vadd.f32 %v5701, %v5737
        %v5739 = vadd.f32 %v5702, %v5737
        %v5740 = vadd.f32 %v5703, %v5737
        %v5741 = vadd.f32 %v5704, %v5737
        %v5742 = vadd.f32 %v5705, %v5737
        %v5743 = vadd.f32 %v5706, %v5737
        %v5744 = vadd.f32 %v5707, %v5737
        %v5745 = vadd.f32 %v5708, %v5737
        %v5746 = vadd.f32 %v5709, %v5737
        %v5747 = vadd.f32 %v5710, %v5737
        %v5748 = vadd.f32 %v5711, %v5737
        %v5749 = vadd.f32 %v5712, %v5737
        %v5750 = vadd.f32 %v5713, %v5737
        %v5751 = vadd.f32 %v5714, %v5737
        %v5752 = vadd.f32 %v5715, %v5737
        %v5753 = vadd.f32 %v5716, %v5737
        %v5754 = vadd.f32 %v5717, %v5737
        %v5755 = vadd.f32 %v5718, %v5737
        %v5756 = vadd.f32 %v5719, %v5737
        %v5757 = vadd.f32 %v5720, %v5737
        %v5758 = vadd.f32 %v5721, %v5737
        %v5759 = vadd.f32 %v5722, %v5737
        %v5760 = vadd.f32 %v5723, %v5737
        %v5761 = vadd.f32 %v5724, %v5737
        %v5762 = vadd.f32 %v5725, %v5737
        %v5763 = vadd.f32 %v5726, %v5737
        %v5764 = vadd.f32 %v5727, %v5737
        %v5765 = vadd.f32 %v5728, %v5737
        %v5766 = vadd.f32 %v5729, %v5737
        %v5767 = vadd.f32 %v5730, %v5737
        %v5768 = vadd.f32 %v5731, %v5737
        %v5769 = vadd.f32 %v5732, %v5737
        %v5770 = vadd.f32 %v5738, %v2547
        %v5771 = vadd.f32 %v5739, %v2550
        %v5772 = vadd.f32 %v5740, %v2555
        %v5773 = vadd.f32 %v5741, %v2558
        %v5774 = vadd.f32 %v5742, %v2563
        %v5775 = vadd.f32 %v5743, %v2566
        %v5776 = vadd.f32 %v5744, %v2571
        %v5777 = vadd.f32 %v5745, %v2574
        %v5778 = vadd.f32 %v5746, %v2579
        %v5779 = vadd.f32 %v5747, %v2582
        %v5780 = vadd.f32 %v5748, %v2587
        %v5781 = vadd.f32 %v5749, %v2590
        %v5782 = vadd.f32 %v5750, %v2595
        %v5783 = vadd.f32 %v5751, %v2598
        %v5784 = vadd.f32 %v5752, %v2603
        %v5785 = vadd.f32 %v5753, %v2606
        %v5786 = vadd.f32 %v5754, %v2611
        %v5787 = vadd.f32 %v5755, %v2614
        %v5788 = vadd.f32 %v5756, %v2619
        %v5789 = vadd.f32 %v5757, %v2622
        %v5790 = vadd.f32 %v5758, %v2627
        %v5791 = vadd.f32 %v5759, %v2630
        %v5792 = vadd.f32 %v5760, %v2635
        %v5793 = vadd.f32 %v5761, %v2638
        %v5794 = vadd.f32 %v5762, %v2643
        %v5795 = vadd.f32 %v5763, %v2646
        %v5796 = vadd.f32 %v5764, %v2651
        %v5797 = vadd.f32 %v5765, %v2654
        %v5798 = vadd.f32 %v5766, %v2659
        %v5799 = vadd.f32 %v5767, %v2662
        %v5800 = vadd.f32 %v5768, %v2667
        %v5801 = vadd.f32 %v5769, %v2670
        %v5802 = vlaneseq
        %v5803 = vshrl.u32 %v5802, 7
        %v5804 = vsub.s32 1, %v5803
        %v5805 = vrot.slane %v5733, %v5804
        %v5806 = vmul.f32 %v5770, %v5805
        %v5807 = vmul.f32 %v5771, %v5805
        %v5808 = vmul.f32 %v5772, %v5805
        %v5809 = vmul.f32 %v5773, %v5805
        %v5810 = vmul.f32 %v5774, %v5805
        %v5811 = vmul.f32 %v5775, %v5805
        %v5812 = vmul.f32 %v5776, %v5805
        %v5813 = vmul.f32 %v5777, %v5805
        %v5814 = vmul.f32 %v5778, %v5805
        %v5815 = vmul.f32 %v5779, %v5805
        %v5816 = vmul.f32 %v5780, %v5805
        %v5817 = vmul.f32 %v5781, %v5805
        %v5818 = vmul.f32 %v5782, %v5805
        %v5819 = vmul.f32 %v5783, %v5805
        %v5820 = vmul.f32 %v5784, %v5805
        %v5821 = vmul.f32 %v5785, %v5805
        %v5822 = vmul.f32 %v5786, %v5805
        %v5823 = vmul.f32 %v5787, %v5805
        %v5824 = vmul.f32 %v5788, %v5805
        %v5825 = vmul.f32 %v5789, %v5805
        %v5826 = vmul.f32 %v5790, %v5805
        %v5827 = vmul.f32 %v5791, %v5805
        %v5828 = vmul.f32 %v5792, %v5805
        %v5829 = vmul.f32 %v5793, %v5805
        %v5830 = vmul.f32 %v5794, %v5805
        %v5831 = vmul.f32 %v5795, %v5805
        %v5832 = vmul.f32 %v5796, %v5805
        %v5833 = vmul.f32 %v5797, %v5805
        %v5834 = vmul.f32 %v5798, %v5805
        %v5835 = vmul.f32 %v5799, %v5805
        %v5836 = vmul.f32 %v5800, %v5805
        %v5837 = vmul.f32 %v5801, %v5805
        %v5838 = vlaneseq
        %v5839 = vshrl.u32 %v5838, 7
        %v5840 = vsub.s32 2, %v5839
        %v5841 = vrot.slane %v5733, %v5840
        %v5842 = vadd.f32 %v5806, %v5841
        %v5843 = vadd.f32 %v5807, %v5841
        %v5844 = vadd.f32 %v5808, %v5841
        %v5845 = vadd.f32 %v5809, %v5841
        %v5846 = vadd.f32 %v5810, %v5841
        %v5847 = vadd.f32 %v5811, %v5841
        %v5848 = vadd.f32 %v5812, %v5841
        %v5849 = vadd.f32 %v5813, %v5841
        %v5850 = vadd.f32 %v5814, %v5841
        %v5851 = vadd.f32 %v5815, %v5841
        %v5852 = vadd.f32 %v5816, %v5841
        %v5853 = vadd.f32 %v5817, %v5841
        %v5854 = vadd.f32 %v5818, %v5841
        %v5855 = vadd.f32 %v5819, %v5841
        %v5856 = vadd.f32 %v5820, %v5841
        %v5857 = vadd.f32 %v5821, %v5841
        %v5858 = vadd.f32 %v5822, %v5841
        %v5859 = vadd.f32 %v5823, %v5841
        %v5860 = vadd.f32 %v5824, %v5841
        %v5861 = vadd.f32 %v5825, %v5841
        %v5862 = vadd.f32 %v5826, %v5841
        %v5863 = vadd.f32 %v5827, %v5841
        %v5864 = vadd.f32 %v5828, %v5841
        %v5865 = vadd.f32 %v5829, %v5841
        %v5866 = vadd.f32 %v5830, %v5841
        %v5867 = vadd.f32 %v5831, %v5841
        %v5868 = vadd.f32 %v5832, %v5841
        %v5869 = vadd.f32 %v5833, %v5841
        %v5870 = vadd.f32 %v5834, %v5841
        %v5871 = vadd.f32 %v5835, %v5841
        %v5872 = vadd.f32 %v5836, %v5841
        %v5873 = vadd.f32 %v5837, %v5841
        %v5874 = vmax.f32 %v5842, 0.0
        %v5875 = vmax.f32 %v5843, 0.0
        %v5876 = vmax.f32 %v5844, 0.0
        %v5877 = vmax.f32 %v5845, 0.0
        %v5878 = vmax.f32 %v5846, 0.0
        %v5879 = vmax.f32 %v5847, 0.0
        %v5880 = vmax.f32 %v5848, 0.0
        %v5881 = vmax.f32 %v5849, 0.0
        %v5882 = vmax.f32 %v5850, 0.0
        %v5883 = vmax.f32 %v5851, 0.0
        %v5884 = vmax.f32 %v5852, 0.0
        %v5885 = vmax.f32 %v5853, 0.0
        %v5886 = vmax.f32 %v5854, 0.0
        %v5887 = vmax.f32 %v5855, 0.0
        %v5888 = vmax.f32 %v5856, 0.0
        %v5889 = vmax.f32 %v5857, 0.0
        %v5890 = vmax.f32 %v5858, 0.0
        %v5891 = vmax.f32 %v5859, 0.0
        %v5892 = vmax.f32 %v5860, 0.0
        %v5893 = vmax.f32 %v5861, 0.0
        %v5894 = vmax.f32 %v5862, 0.0
        %v5895 = vmax.f32 %v5863, 0.0
        %v5896 = vmax.f32 %v5864, 0.0
        %v5897 = vmax.f32 %v5865, 0.0
        %v5898 = vmax.f32 %v5866, 0.0
        %v5899 = vmax.f32 %v5867, 0.0
        %v5900 = vmax.f32 %v5868, 0.0
        %v5901 = vmax.f32 %v5869, 0.0
        %v5902 = vmax.f32 %v5870, 0.0
        %v5903 = vmax.f32 %v5871, 0.0
        %v5904 = vmax.f32 %v5872, 0.0
        %v5905 = vmax.f32 %v5873, 0.0
        %5906 = vmatprep.subr.mxu0 0.0
        %5907 = vmatpush1.msra.mxu0 %v5874
        %5908 = vmatprep.subr.mxu0 0.0
        %5909 = vmatpush1.msra.mxu0 %v5875
        %5910 = vmatprep.subr.mxu0 0.0
        %5911 = vmatpush1.msra.mxu0 %v5876
        %5912 = vmatprep.subr.mxu0 0.0
        %5913 = vmatpush1.msra.mxu0 %v5877
        %5914 = vmatprep.subr.mxu0 0.0
        %5915 = vmatpush1.msra.mxu0 %v5878
        %5916 = vmatprep.subr.mxu0 0.0
        %5917 = vmatpush1.msra.mxu0 %v5879
        %5918 = vmatprep.subr.mxu0 0.0
        %5919 = vmatpush1.msra.mxu0 %v5880
        %5920 = vmatprep.subr.mxu0 0.0
        %5921 = vmatpush1.msra.mxu0 %v5881
        %5922 = vmatprep.subr.mxu0 0.0
        %5923 = vmatpush1.msra.mxu0 %v5882
        %5924 = vmatprep.subr.mxu0 0.0
        %5925 = vmatpush1.msra.mxu0 %v5883
        %5926 = vmatprep.subr.mxu0 0.0
        %5927 = vmatpush1.msra.mxu0 %v5884
        %5928 = vmatprep.subr.mxu0 0.0
        %5929 = vmatpush1.msra.mxu0 %v5885
        %5930 = vmatprep.subr.mxu0 0.0
        %5931 = vmatpush1.msra.mxu0 %v5886
        %5932 = vmatprep.subr.mxu0 0.0
        %5933 = vmatpush1.msra.mxu0 %v5887
        %5934 = vmatprep.subr.mxu0 0.0
        %5935 = vmatpush1.msra.mxu0 %v5888
        %5936 = vmatprep.subr.mxu0 0.0
        %5937 = vmatpush1.msra.mxu0 %v5889
        %5938 = vmatprep.subr.mxu0 0.0
        %5939 = vmatpush1.msra.mxu0 %v5890
        %5940 = vmatprep.subr.mxu0 0.0
        %5941 = vmatpush1.msra.mxu0 %v5891
        %5942 = vmatprep.subr.mxu0 0.0
        %5943 = vmatpush1.msra.mxu0 %v5892
        %5944 = vmatprep.subr.mxu0 0.0
        %5945 = vmatpush1.msra.mxu0 %v5893
        %5946 = vmatprep.subr.mxu0 0.0
        %5947 = vmatpush1.msra.mxu0 %v5894
        %5948 = vmatprep.subr.mxu0 0.0
        %5949 = vmatpush1.msra.mxu0 %v5895
        %5950 = vmatprep.subr.mxu0 0.0
        %5951 = vmatpush1.msra.mxu0 %v5896
        %5952 = vmatprep.subr.mxu0 0.0
        %5953 = vmatpush1.msra.mxu0 %v5897
        %5954 = vmatprep.subr.mxu0 0.0
        %5955 = vmatpush1.msra.mxu0 %v5898
        %5956 = vmatprep.subr.mxu0 0.0
        %5957 = vmatpush1.msra.mxu0 %v5899
        %5958 = vmatprep.subr.mxu0 0.0
        %5959 = vmatpush1.msra.mxu0 %v5900
        %5960 = vmatprep.subr.mxu0 0.0
        %5961 = vmatpush1.msra.mxu0 %v5901
        %5962 = vmatprep.subr.mxu0 0.0
        %5963 = vmatpush1.msra.mxu0 %v5902
        %5964 = vmatprep.subr.mxu0 0.0
        %5965 = vmatpush1.msra.mxu0 %v5903
        %5966 = vmatprep.subr.mxu0 0.0
        %5967 = vmatpush1.msra.mxu0 %v5904
        %5968 = vmatprep.subr.mxu0 0.0
        %5969 = vmatpush1.msra.mxu0 %v5905
        %5970 = vmatprep.mubr.f32.mxu0 %v2352
        %5971 = vmatmul.mubr.f32.gmra.mrb[0].mxu0 %v732
        %v5972 = vpop.f32.mrb[0].mxu0
        %v5973 = vadd.f32 0.0, %v5972
        %v5974 = vpop.f32.mrb[0].mxu0
        %5975 = vdwg.mxu0
        %5976 = vst [vmem:[%s681 + $0x4] sm:$0xf] %v5973
        %s5977 = sand.u32 %s408, 1
        %s5978 = scalar_lea.sflag [#allocation5], %s5977
        %s5979 = sand.u32 %s408, 1
        %s5980 = smul.addr %s5979, 8
        %s5981 = scalar_lea.vmem [#allocation18], %s5980
        // Predicated region
        $region125: #{tpu_custom_call.1} parent=87 // pred_check
          %p5982 = pneg %p418
        $region126: #{tpu_custom_call.1} parent=87 // pred_check_branch
          %5984 = sbr.rel (%p5982) target = $region128
        $region127: #{tpu_custom_call.1} parent=87 // pred_region
          %s5986 = ssub.s32 128, 128
          %5987 = vsyncadd %s5978, %s5986
          %s5988 = smul.addr %s38, 2
          %s5989 = smul.addr %s5988, 64
          %s5990 = scalar_lea.hbm %s17, %s5989
          %s5992 = sshll.u32 %s5981, 4
          %s5993 = int_to_ptr.vmem [resolvable:$true] %s5992
          %5995 = dma.vmem_to_hbm [thread:$0]  %s5993, 128, %s5990, %s5978
        $region128: #{tpu_custom_call.1} parent=87 // pred_fallthru
          _
      $region88: #{tpu_custom_call.1} parent=5 // pred_fallthru
        _
      %p5996 = scmp.le.s32.totalorder 2, %s33
      // Predicated region
      $region129: #{tpu_custom_call.1} parent=5 // pred_check
        %p5997 = pneg %p5996
      $region130: #{tpu_custom_call.1} parent=5 // pred_check_branch
        %5999 = sbr.rel (%p5997) target = $region132
      $region131: #{tpu_custom_call.1} parent=5 // pred_region
        %s6000 = ssub.s32 %s33, 2
        // Predicated region
        $region133: #{tpu_custom_call.1} parent=131 // pred_check
          %p6001 = pneg %p424
        $region134: #{tpu_custom_call.1} parent=131 // pred_check_branch
          %6003 = sbr.rel (%p6001) target = $region136
        $region135: #{tpu_custom_call.1} parent=131 // pred_region
          %s6004 = sand.u32 %s409, 1
          %s6005 = scalar_lea.sflag [#allocation5], %s6004
          %s6006 = sand.u32 %s409, 1
          %s6007 = smul.addr %s6006, 8
          %s6008 = scalar_lea.vmem [#allocation18], %s6007
          %6009 = dma.done %s6005, 128
        $region136: #{tpu_custom_call.1} parent=131 // pred_fallthru
          _
      $region132: #{tpu_custom_call.1} parent=5 // pred_fallthru
        _
    $region6: #{tpu_custom_call.1} parent=1 // loop_footer
      %s37 = sadd.s32 1, %s33
    $region7: #{tpu_custom_call.1} parent=1 // loop_footer_branch
      %32 = sbr.rel target = $region3
    $region8: #{tpu_custom_call.1} parent=1 // loop_exit
      _
    %6010 = vsyncpa [#allocation4], 1
    %s6011 = scalar_lea.sflag [#allocation4], 1
    %6012 = vsyncpa %s6011, 1
    %6013 = vsyncpa [#allocation7], 1
    %6014 = vsyncpa [#allocation10], 1
    %6015 = vsyncpa [#allocation13], 1
    %6016 = vsyncpa [#allocation16], 1
    %6017 = vsyncpa [#allocation5], 1
    %s6018 = scalar_lea.sflag [#allocation5], 1
    %6019 = vsyncpa %s6018, 1

</llo_original>
